<compile_context>
chip_gen: v7x
topology: tpu7x:2x2x1
jax: 0.10.0
libtpu: 0.0.40
codegen_flags: <defaults>
</compile_context>

<pallas_src>
import functools
import math

import jax
import jax.numpy as jnp
from jax.experimental import pallas as pl
from jax.experimental.pallas import tpu as pltpu

BN_EPS = 1e-5
_SQRT1_2 = 1.0 / math.sqrt(2.0)


# ----------------------------- in-kernel helpers -----------------------------

def _gelu_erf(z):
    """Exact (erf-based) GELU; erf via Abramowitz & Stegun 7.1.26 (f32-exact)."""
    a1, a2, a3, a4, a5 = 0.254829592, -0.284496736, 1.421413741, -1.453152027, 1.061405429
    p = 0.3275911
    x = z * _SQRT1_2
    sgn = jnp.where(x >= 0.0, 1.0, -1.0)
    ax = jnp.abs(x)
    d = 1.0 + p * ax
    t = pl.reciprocal(d, approx=True)           # EUP slot
    t = t * (2.0 - d * t)                       # one Newton step -> full f32 accuracy
    poly = t * (a1 + t * (a2 + t * (a3 + t * (a4 + t * a5))))
    erf = sgn * (1.0 - poly * jnp.exp(-ax * ax))
    return 0.5 * z * (1.0 + erf)


# --------------------------------- kernel ------------------------------------

def _bdg_kernel(x_ref,
                w5_ref, b5_ref,
                w01_ref, b01_ref, w02_ref, b02_ref,
                w11_ref, b11_ref, w12_ref, b12_ref,
                wpw_hi_ref, wpw_lo_ref, bpw_ref,
                gamma_ref, beta_ref,
                o_ref,
                *, N, H, W, C, L):
    WC = W * C
    R = N * H

    # Boundary-mask index vectors (computed once, broadcast in the multiplies).
    lane_idx = jax.lax.broadcasted_iota(jnp.int32, (1, WC), 1)   # lane position
    row_idx = jax.lax.broadcasted_iota(jnp.int32, (R, 1), 0)     # slab row
    rowm = row_idx                                               # row within image
    for k in range(1, N):
        rowm = jnp.where(row_idx >= k * H, rowm - H, rowm)

    def hsh(a, wd):
        """out[r, l] = a[r, l + wd*C], zero outside the W extent (lane roll)."""
        d = wd * C
        if d == 0:
            return a
        r = pltpu.roll(a, shift=(-d) % WC, axis=1)               # XLU lane rotate
        m = ((lane_idx < WC - d) if d > 0 else (lane_idx >= -d)).astype(jnp.float32)
        return r * m

    def vsh(a, d):
        """out[r, l] = a[r + d, l], zero outside each image's H rows (sublane roll)."""
        if d == 0:
            return a
        r = pltpu.roll(a, shift=(-d) % R, axis=0)                # XLU sublane rotate
        m = ((rowm < H - d) if d > 0 else (rowm >= -d)).astype(jnp.float32)
        return r * m

    def wrow(ref, idx):
        return ref[idx:idx + 1, :]                               # (1, WC) weight row

    x = x_ref[...]                                               # (R, WC) f32

    # ---- conv0 (5x5 depthwise): 5 lane shifts + 5 sublane shifts (weights are
    # row-independent so they commute with the vertical shift). ----
    xh = {j: hsh(x, j) for j in range(-2, 3)}
    attn = None
    for i in range(5):
        row = None
        for j in range(5):
            t = xh[j - 2] * wrow(w5_ref, i * 5 + j)
            row = t if row is None else row + t
        sh = vsh(row, i - 2)
        attn = sh if attn is None else attn + sh
    attn = attn + b5_ref[...]

    # ---- 7 lane shifts of attn shared by conv0_1 (1x3) and conv1_1 (1x7) ----
    ah = {j: hsh(attn, j) for j in range(-3, 4)}

    a0 = None                                                    # conv0_1 (1x3)
    for j in range(3):
        t = ah[j - 1] * wrow(w01_ref, j)
        a0 = t if a0 is None else a0 + t
    a0 = a0 + b01_ref[...]
    a0v = None                                                   # conv0_2 (3x1)
    for i in range(3):
        t = vsh(a0, i - 1) * wrow(w02_ref, i)
        a0v = t if a0v is None else a0v + t
    a0v = a0v + b02_ref[...]

    a1 = None                                                    # conv1_1 (1x7)
    for j in range(7):
        t = ah[j - 3] * wrow(w11_ref, j)
        a1 = t if a1 is None else a1 + t
    a1 = a1 + b11_ref[...]
    a1v = None                                                   # conv1_2 (7x1)
    for i in range(7):
        t = vsh(a1, i - 3) * wrow(w12_ref, i)
        a1v = t if a1v is None else a1v + t
    a1v = a1v + b12_ref[...]

    flat = attn * (a0v + a1v)                                    # (R, WC)

    # ---- conv3 (1x1 pointwise): per 128-lane group MXU matmul against the
    # reusable (L, L) block-diag kron(eye(L//C), Wp); 3-term bf16 hi/lo split
    # (~1e-5 abs error, MXU-native). 128-lane slices are free vreg-column views.
    f_hi = flat.astype(jnp.bfloat16)
    f_lo = (flat - f_hi.astype(jnp.float32)).astype(jnp.bfloat16)
    w_hi = wpw_hi_ref[...]
    w_lo = wpw_lo_ref[...]
    outs = []
    for g in range(WC // L):
        sl = slice(g * L, (g + 1) * L)
        a_hi = f_hi[:, sl]
        a_lo = f_lo[:, sl]
        og = (jnp.dot(a_hi, w_hi, preferred_element_type=jnp.float32)
              + jnp.dot(a_lo, w_hi, preferred_element_type=jnp.float32)
              + jnp.dot(a_hi, w_lo, preferred_element_type=jnp.float32))
        outs.append(og)
    pw = outs[0] if len(outs) == 1 else jnp.concatenate(outs, axis=1)

    y = pw + bpw_ref[...] + x                                    # + shortcut

    # ---- BatchNorm (train-mode batch stats, per channel) + GELU, fused ----
    inv_cnt = 1.0 / float(N * H * W)
    sum_y = jnp.sum(y, axis=0, keepdims=True)                    # (1, WC)
    sum_y2 = jnp.sum(y * y, axis=0, keepdims=True)               # (1, WC)
    s2 = jnp.concatenate([sum_y, sum_y2], axis=0)                # (2, WC)
    if W & (W - 1) == 0:
        # log2(W)-step wrap-around butterfly: every lane ends up holding the
        # per-channel total (wrap == fold over W groups + implicit re-broadcast).
        step = C
        while step < WC:
            s2 = s2 + pltpu.roll(s2, shift=step, axis=1)
            step *= 2
    else:
        tot = s2[:, 0:C]
        for w in range(1, W):
            tot = tot + s2[:, w * C:(w + 1) * C]
        s2 = jnp.tile(tot, (1, W))
    mu = s2[0:1, :] * inv_cnt
    var = s2[1:2, :] * inv_cnt - mu * mu                         # biased (BN train mode)
    scale = jax.lax.rsqrt(var + BN_EPS) * gamma_ref[...]
    z = (y - mu) * scale + beta_ref[...]
    o_ref[...] = _gelu_erf(z).astype(o_ref.dtype)


# --------------------------------- wrapper -----------------------------------

def pack_params(p, W):
    """One-time packing of module parameters into kernel-friendly layouts."""
    C = p['wpw'].shape[0]
    WC = W * C
    tile = lambda a: jnp.tile(a, (1, W))                         # (K, C) -> (K, W*C)
    # Reusable 128x128 block-diag pointwise weight (falls back to WCxWC if C
    # does not tile 128 lanes cleanly).
    L = 128 if (128 % C == 0 and WC % 128 == 0) else WC
    blk = jnp.kron(jnp.eye(L // C, dtype=jnp.float32), p['wpw'].astype(jnp.float32))
    hi = blk.astype(jnp.bfloat16)
    lo = (blk - hi.astype(jnp.float32)).astype(jnp.bfloat16)
    return dict(
        w5=tile(p['w5']), b5=tile(p['b5']),
        w01=tile(p['w01']), b01=tile(p['b01']),
        w02=tile(p['w02']), b02=tile(p['b02']),
        w11=tile(p['w11']), b11=tile(p['b11']),
        w12=tile(p['w12']), b12=tile(p['b12']),
        wpw_hi=hi, wpw_lo=lo, bpw=tile(p['bpw']),
        gamma=tile(p['gamma']), beta=tile(p['beta']),
    )


def boundary_module_forward(x, q):
    """x: (N, H, W, C) NHWC float32; q: packed params from pack_params()."""
    N, H, W, C = x.shape
    WC = W * C
    R = N * H
    L = q['wpw_hi'].shape[0]

    args = (x.reshape(R, WC),
            q['w5'], q['b5'], q['w01'], q['b01'], q['w02'], q['b02'],
            q['w11'], q['b11'], q['w12'], q['b12'],
            q['wpw_hi'], q['wpw_lo'], q['bpw'], q['gamma'], q['beta'])

    def full(shape):
        return pl.BlockSpec(shape, lambda i, _n=len(shape): (0,) * _n)

    kernel = functools.partial(_bdg_kernel, N=N, H=H, W=W, C=C, L=L)
    # TODO(synk): on v7x (2 TensorCores) or at large N*H*W, split the N*H rows
    # over a "parallel" grid axis with a 3-row halo and a cross-core reduction
    # of the (2, WC) BN statistics; at this test size one fused step is optimal.
    out = pl.pallas_call(
        kernel,
        out_shape=jax.ShapeDtypeStruct((R, WC), jnp.float32),
        grid=(1,),
        in_specs=[full(a.shape) for a in args],
        out_specs=full((R, WC)),
        compiler_params=pltpu.CompilerParams(dimension_semantics=("arbitrary",)),
    )(*args)
    return out.reshape(N, H, W, C)


# ------------------------------ params & reference ---------------------------

def init_params(key, C):
    ks = jax.random.split(key, 14)

    def nrm(k, shape, scale):
        return scale * jax.random.normal(k, shape, dtype=jnp.float32)

    return dict(
        w5=nrm(ks[0], (25, C), 0.15), b5=nrm(ks[1], (1, C), 0.05),
        w01=nrm(ks[2], (3, C), 0.25), b01=nrm(ks[3], (1, C), 0.05),
        w02=nrm(ks[4], (3, C), 0.25), b02=nrm(ks[5], (1, C), 0.05),
        w11=nrm(ks[6], (7, C), 0.20), b11=nrm(ks[7], (1, C), 0.05),
        w12=nrm(ks[8], (7, C), 0.20), b12=nrm(ks[9], (1, C), 0.05),
        wpw=nrm(ks[10], (C, C), 0.15), bpw=nrm(ks[11], (1, C), 0.05),
        gamma=1.0 + nrm(ks[12], (1, C), 0.1), beta=nrm(ks[13], (1, C), 0.05),
    )


def reference_forward(x, p):
    """Pure-JAX reference of the PyTorch forward (NHWC, f32-exact convs)."""
    N, H, W, C = x.shape

    def dw(a, w_flat, b, kh, kw):
        rhs = w_flat.reshape(kh, kw, 1, C)
        out = jax.lax.conv_general_dilated(
            a, rhs, window_strides=(1, 1),
            padding=((kh // 2, kh // 2), (kw // 2, kw // 2)),
            dimension_numbers=('NHWC', 'HWIO', 'NHWC'),
            feature_group_count=C,
            precision=jax.lax.Precision.HIGHEST)
        return out + b.reshape(1, 1, 1, C)

    attn = dw(x, p['w5'], p['b5'], 5, 5)
    a0 = dw(attn, p['w01'], p['b01'], 1, 3)
    a0 = dw(a0, p['w02'], p['b02'], 3, 1)
    a1 = dw(attn, p['w11'], p['b11'], 1, 7)
    a1 = dw(a1, p['w12'], p['b12'], 7, 1)
    attn = attn * (a0 + a1)
    attn = jnp.einsum('nhwc,cd->nhwd', attn, p['wpw'],
                      precision=jax.lax.Precision.HIGHEST) + p['bpw'].reshape(1, 1, 1, C)
    y = attn + x
    mu = jnp.mean(y, axis=(0, 1, 2), keepdims=True)
    var = jnp.mean((y - mu) ** 2, axis=(0, 1, 2), keepdims=True)
    z = (y - mu) * jax.lax.rsqrt(var + BN_EPS) * p['gamma'].reshape(1, 1, 1, C) \
        + p['beta'].reshape(1, 1, 1, C)
    return jax.nn.gelu(z, approximate=False)


# ----------------------------------- main ------------------------------------

if __name__ == "__main__":
    N, H, W, C = 2, 16, 16, 32     # dim = 32
    key = jax.random.PRNGKey(0)
    kx, kp = jax.random.split(key)
    x = jax.random.normal(kx, (N, H, W, C), dtype=jnp.float32)   # NHWC
    params = init_params(kp, C)

    packed = pack_params(params, W)          # one-time packing, outside the jitted forward
    fwd = jax.jit(boundary_module_forward)
    out = jax.block_until_ready(fwd(x, packed))

    ref = jax.block_until_ready(reference_forward(x, params))
    assert out.shape == (N, H, W, C)
    err = float(jnp.max(jnp.abs(out - ref)))
    assert jnp.allclose(out, ref, atol=2e-3, rtol=2e-3), f"max abs diff = {err}"

    print("KERNEL_OK")
</pallas_src>

<mosaic_0001>
module attributes {stable_mosaic.version = 11 : i64} {
  func.func @_bdg_kernel(%arg0: i32, %arg1: memref<32x512xf32, #tpu.memory_space<vmem>>, %arg2: memref<25x512xf32, #tpu.memory_space<vmem>>, %arg3: memref<1x512xf32, #tpu.memory_space<vmem>>, %arg4: memref<3x512xf32, #tpu.memory_space<vmem>>, %arg5: memref<1x512xf32, #tpu.memory_space<vmem>>, %arg6: memref<3x512xf32, #tpu.memory_space<vmem>>, %arg7: memref<1x512xf32, #tpu.memory_space<vmem>>, %arg8: memref<7x512xf32, #tpu.memory_space<vmem>>, %arg9: memref<1x512xf32, #tpu.memory_space<vmem>>, %arg10: memref<7x512xf32, #tpu.memory_space<vmem>>, %arg11: memref<1x512xf32, #tpu.memory_space<vmem>>, %arg12: memref<128x128xbf16, #tpu.memory_space<vmem>>, %arg13: memref<128x128xbf16, #tpu.memory_space<vmem>>, %arg14: memref<1x512xf32, #tpu.memory_space<vmem>>, %arg15: memref<1x512xf32, #tpu.memory_space<vmem>>, %arg16: memref<1x512xf32, #tpu.memory_space<vmem>>, %arg17: memref<32x512xf32, #tpu.memory_space<vmem>>) attributes {dimension_semantics = [#tpu.dimension_semantics<arbitrary>], iteration_bounds = array<i64: 1>, scalar_prefetch = 0 : i64, scratch_operands = 0 : i64, tpu.core_type = #tpu.core_type<tc>, window_params = [{pipeline_mode = #tpu.pipeline_mode<synchronous>, transform_indices = @transform_0, window_bounds = array<i64: 32, 512>}, {pipeline_mode = #tpu.pipeline_mode<synchronous>, transform_indices = @transform_1, window_bounds = array<i64: 25, 512>}, {pipeline_mode = #tpu.pipeline_mode<synchronous>, transform_indices = @transform_2, window_bounds = array<i64: 1, 512>}, {pipeline_mode = #tpu.pipeline_mode<synchronous>, transform_indices = @transform_3, window_bounds = array<i64: 3, 512>}, {pipeline_mode = #tpu.pipeline_mode<synchronous>, transform_indices = @transform_4, window_bounds = array<i64: 1, 512>}, {pipeline_mode = #tpu.pipeline_mode<synchronous>, transform_indices = @transform_5, window_bounds = array<i64: 3, 512>}, {pipeline_mode = #tpu.pipeline_mode<synchronous>, transform_indices = @transform_6, window_bounds = array<i64: 1, 512>}, {pipeline_mode = #tpu.pipeline_mode<synchronous>, transform_indices = @transform_7, window_bounds = array<i64: 7, 512>}, {pipeline_mode = #tpu.pipeline_mode<synchronous>, transform_indices = @transform_8, window_bounds = array<i64: 1, 512>}, {pipeline_mode = #tpu.pipeline_mode<synchronous>, transform_indices = @transform_9, window_bounds = array<i64: 7, 512>}, {pipeline_mode = #tpu.pipeline_mode<synchronous>, transform_indices = @transform_10, window_bounds = array<i64: 1, 512>}, {pipeline_mode = #tpu.pipeline_mode<synchronous>, transform_indices = @transform_11, window_bounds = array<i64: 128, 128>}, {pipeline_mode = #tpu.pipeline_mode<synchronous>, transform_indices = @transform_12, window_bounds = array<i64: 128, 128>}, {pipeline_mode = #tpu.pipeline_mode<synchronous>, transform_indices = @transform_13, window_bounds = array<i64: 1, 512>}, {pipeline_mode = #tpu.pipeline_mode<synchronous>, transform_indices = @transform_14, window_bounds = array<i64: 1, 512>}, {pipeline_mode = #tpu.pipeline_mode<synchronous>, transform_indices = @transform_15, window_bounds = array<i64: 1, 512>}, {pipeline_mode = #tpu.pipeline_mode<synchronous>, transform_indices = @transform_16, window_bounds = array<i64: 32, 512>}]} {
    %0 = tpu.iota {dimensions = array<i32: 1>} : vector<1x512xi32>
    %1 = tpu.iota {dimensions = array<i32: 0>} : vector<32x1xi32>
    %c16_i32 = arith.constant 16 : i32
    %2 = vector.broadcast %c16_i32 : i32 to vector<32x1xi32>
    %3 = arith.cmpi sge, %1, %2 : vector<32x1xi32>
    %c16_i32_0 = arith.constant 16 : i32
    %4 = vector.broadcast %c16_i32_0 : i32 to vector<32x1xi32>
    %5 = arith.subi %1, %4 : vector<32x1xi32>
    %6 = arith.select %3, %5, %1 : vector<32x1xi1>, vector<32x1xi32>
    %c0 = arith.constant 0 : index
    %c0_1 = arith.constant 0 : index
    %7 = vector.load %arg1[%c0, %c0_1] : memref<32x512xf32, #tpu.memory_space<vmem>>, vector<32x512xf32>
    %c64_i32 = arith.constant 64 : i32
    %8 = tpu.dynamic_rotate %7 by %c64_i32 dim 1 : vector<32x512xf32>, i32 -> vector<32x512xf32>
    %c64_i32_2 = arith.constant 64 : i32
    %9 = vector.broadcast %c64_i32_2 : i32 to vector<1x512xi32>
    %10 = arith.cmpi sge, %0, %9 : vector<1x512xi32>
    %11 = arith.extui %10 : vector<1x512xi1> to vector<1x512xi32>
    %12 = arith.sitofp %11 : vector<1x512xi32> to vector<1x512xf32>
    %13 = vector.broadcast %12 : vector<1x512xf32> to vector<32x512xf32>
    %14 = arith.mulf %8, %13 : vector<32x512xf32>
    %c32_i32 = arith.constant 32 : i32
    %15 = tpu.dynamic_rotate %7 by %c32_i32 dim 1 : vector<32x512xf32>, i32 -> vector<32x512xf32>
    %c32_i32_3 = arith.constant 32 : i32
    %16 = vector.broadcast %c32_i32_3 : i32 to vector<1x512xi32>
    %17 = arith.cmpi sge, %0, %16 : vector<1x512xi32>
    %18 = arith.extui %17 : vector<1x512xi1> to vector<1x512xi32>
    %19 = arith.sitofp %18 : vector<1x512xi32> to vector<1x512xf32>
    %20 = vector.broadcast %19 : vector<1x512xf32> to vector<32x512xf32>
    %21 = arith.mulf %15, %20 : vector<32x512xf32>
    %c480_i32 = arith.constant 480 : i32
    %22 = tpu.dynamic_rotate %7 by %c480_i32 dim 1 : vector<32x512xf32>, i32 -> vector<32x512xf32>
    %c480_i32_4 = arith.constant 480 : i32
    %23 = vector.broadcast %c480_i32_4 : i32 to vector<1x512xi32>
    %24 = arith.cmpi slt, %0, %23 : vector<1x512xi32>
    %25 = arith.extui %24 : vector<1x512xi1> to vector<1x512xi32>
    %26 = arith.sitofp %25 : vector<1x512xi32> to vector<1x512xf32>
    %27 = vector.broadcast %26 : vector<1x512xf32> to vector<32x512xf32>
    %28 = arith.mulf %22, %27 : vector<32x512xf32>
    %c448_i32 = arith.constant 448 : i32
    %29 = tpu.dynamic_rotate %7 by %c448_i32 dim 1 : vector<32x512xf32>, i32 -> vector<32x512xf32>
    %c448_i32_5 = arith.constant 448 : i32
    %30 = vector.broadcast %c448_i32_5 : i32 to vector<1x512xi32>
    %31 = arith.cmpi slt, %0, %30 : vector<1x512xi32>
    %32 = arith.extui %31 : vector<1x512xi1> to vector<1x512xi32>
    %33 = arith.sitofp %32 : vector<1x512xi32> to vector<1x512xf32>
    %34 = vector.broadcast %33 : vector<1x512xf32> to vector<32x512xf32>
    %35 = arith.mulf %29, %34 : vector<32x512xf32>
    %c0_6 = arith.constant 0 : index
    %c0_7 = arith.constant 0 : index
    %36 = vector.load %arg2[%c0_6, %c0_7] : memref<25x512xf32, #tpu.memory_space<vmem>>, vector<1x512xf32>
    %37 = vector.broadcast %36 : vector<1x512xf32> to vector<32x512xf32>
    %38 = arith.mulf %14, %37 : vector<32x512xf32>
    %c1 = arith.constant 1 : index
    %c0_8 = arith.constant 0 : index
    %39 = vector.load %arg2[%c1, %c0_8] : memref<25x512xf32, #tpu.memory_space<vmem>>, vector<1x512xf32>
    %40 = vector.broadcast %39 : vector<1x512xf32> to vector<32x512xf32>
    %41 = arith.mulf %21, %40 : vector<32x512xf32>
    %42 = arith.addf %38, %41 : vector<32x512xf32>
    %c2 = arith.constant 2 : index
    %c0_9 = arith.constant 0 : index
    %43 = vector.load %arg2[%c2, %c0_9] : memref<25x512xf32, #tpu.memory_space<vmem>>, vector<1x512xf32>
    %44 = vector.broadcast %43 : vector<1x512xf32> to vector<32x512xf32>
    %45 = arith.mulf %7, %44 : vector<32x512xf32>
    %46 = arith.addf %42, %45 : vector<32x512xf32>
    %c3 = arith.constant 3 : index
    %c0_10 = arith.constant 0 : index
    %47 = vector.load %arg2[%c3, %c0_10] : memref<25x512xf32, #tpu.memory_space<vmem>>, vector<1x512xf32>
    %48 = vector.broadcast %47 : vector<1x512xf32> to vector<32x512xf32>
    %49 = arith.mulf %28, %48 : vector<32x512xf32>
    %50 = arith.addf %46, %49 : vector<32x512xf32>
    %c4 = arith.constant 4 : index
    %c0_11 = arith.constant 0 : index
    %51 = vector.load %arg2[%c4, %c0_11] : memref<25x512xf32, #tpu.memory_space<vmem>>, vector<1x512xf32>
    %52 = vector.broadcast %51 : vector<1x512xf32> to vector<32x512xf32>
    %53 = arith.mulf %35, %52 : vector<32x512xf32>
    %54 = arith.addf %50, %53 : vector<32x512xf32>
    %c2_i32 = arith.constant 2 : i32
    %55 = tpu.dynamic_rotate %54 by %c2_i32 dim 0 : vector<32x512xf32>, i32 -> vector<32x512xf32>
    %c2_i32_12 = arith.constant 2 : i32
    %56 = vector.broadcast %c2_i32_12 : i32 to vector<32x1xi32>
    %57 = arith.cmpi sge, %6, %56 : vector<32x1xi32>
    %58 = arith.extui %57 : vector<32x1xi1> to vector<32x1xi32>
    %59 = arith.sitofp %58 : vector<32x1xi32> to vector<32x1xf32>
    %60 = vector.broadcast %59 : vector<32x1xf32> to vector<32x512xf32>
    %61 = arith.mulf %55, %60 : vector<32x512xf32>
    %c5 = arith.constant 5 : index
    %c0_13 = arith.constant 0 : index
    %62 = vector.load %arg2[%c5, %c0_13] : memref<25x512xf32, #tpu.memory_space<vmem>>, vector<1x512xf32>
    %63 = vector.broadcast %62 : vector<1x512xf32> to vector<32x512xf32>
    %64 = arith.mulf %14, %63 : vector<32x512xf32>
    %c6 = arith.constant 6 : index
    %c0_14 = arith.constant 0 : index
    %65 = vector.load %arg2[%c6, %c0_14] : memref<25x512xf32, #tpu.memory_space<vmem>>, vector<1x512xf32>
    %66 = vector.broadcast %65 : vector<1x512xf32> to vector<32x512xf32>
    %67 = arith.mulf %21, %66 : vector<32x512xf32>
    %68 = arith.addf %64, %67 : vector<32x512xf32>
    %c7 = arith.constant 7 : index
    %c0_15 = arith.constant 0 : index
    %69 = vector.load %arg2[%c7, %c0_15] : memref<25x512xf32, #tpu.memory_space<vmem>>, vector<1x512xf32>
    %70 = vector.broadcast %69 : vector<1x512xf32> to vector<32x512xf32>
    %71 = arith.mulf %7, %70 : vector<32x512xf32>
    %72 = arith.addf %68, %71 : vector<32x512xf32>
    %c8 = arith.constant 8 : index
    %c0_16 = arith.constant 0 : index
    %73 = vector.load %arg2[%c8, %c0_16] : memref<25x512xf32, #tpu.memory_space<vmem>>, vector<1x512xf32>
    %74 = vector.broadcast %73 : vector<1x512xf32> to vector<32x512xf32>
    %75 = arith.mulf %28, %74 : vector<32x512xf32>
    %76 = arith.addf %72, %75 : vector<32x512xf32>
    %c9 = arith.constant 9 : index
    %c0_17 = arith.constant 0 : index
    %77 = vector.load %arg2[%c9, %c0_17] : memref<25x512xf32, #tpu.memory_space<vmem>>, vector<1x512xf32>
    %78 = vector.broadcast %77 : vector<1x512xf32> to vector<32x512xf32>
    %79 = arith.mulf %35, %78 : vector<32x512xf32>
    %80 = arith.addf %76, %79 : vector<32x512xf32>
    %c1_i32 = arith.constant 1 : i32
    %81 = tpu.dynamic_rotate %80 by %c1_i32 dim 0 : vector<32x512xf32>, i32 -> vector<32x512xf32>
    %c1_i32_18 = arith.constant 1 : i32
    %82 = vector.broadcast %c1_i32_18 : i32 to vector<32x1xi32>
    %83 = arith.cmpi sge, %6, %82 : vector<32x1xi32>
    %84 = arith.extui %83 : vector<32x1xi1> to vector<32x1xi32>
    %85 = arith.sitofp %84 : vector<32x1xi32> to vector<32x1xf32>
    %86 = vector.broadcast %85 : vector<32x1xf32> to vector<32x512xf32>
    %87 = arith.mulf %81, %86 : vector<32x512xf32>
    %88 = arith.addf %61, %87 : vector<32x512xf32>
    %c10 = arith.constant 10 : index
    %c0_19 = arith.constant 0 : index
    %89 = vector.load %arg2[%c10, %c0_19] : memref<25x512xf32, #tpu.memory_space<vmem>>, vector<1x512xf32>
    %90 = vector.broadcast %89 : vector<1x512xf32> to vector<32x512xf32>
    %91 = arith.mulf %14, %90 : vector<32x512xf32>
    %c11 = arith.constant 11 : index
    %c0_20 = arith.constant 0 : index
    %92 = vector.load %arg2[%c11, %c0_20] : memref<25x512xf32, #tpu.memory_space<vmem>>, vector<1x512xf32>
    %93 = vector.broadcast %92 : vector<1x512xf32> to vector<32x512xf32>
    %94 = arith.mulf %21, %93 : vector<32x512xf32>
    %95 = arith.addf %91, %94 : vector<32x512xf32>
    %c12 = arith.constant 12 : index
    %c0_21 = arith.constant 0 : index
    %96 = vector.load %arg2[%c12, %c0_21] : memref<25x512xf32, #tpu.memory_space<vmem>>, vector<1x512xf32>
    %97 = vector.broadcast %96 : vector<1x512xf32> to vector<32x512xf32>
    %98 = arith.mulf %7, %97 : vector<32x512xf32>
    %99 = arith.addf %95, %98 : vector<32x512xf32>
    %c13 = arith.constant 13 : index
    %c0_22 = arith.constant 0 : index
    %100 = vector.load %arg2[%c13, %c0_22] : memref<25x512xf32, #tpu.memory_space<vmem>>, vector<1x512xf32>
    %101 = vector.broadcast %100 : vector<1x512xf32> to vector<32x512xf32>
    %102 = arith.mulf %28, %101 : vector<32x512xf32>
    %103 = arith.addf %99, %102 : vector<32x512xf32>
    %c14 = arith.constant 14 : index
    %c0_23 = arith.constant 0 : index
    %104 = vector.load %arg2[%c14, %c0_23] : memref<25x512xf32, #tpu.memory_space<vmem>>, vector<1x512xf32>
    %105 = vector.broadcast %104 : vector<1x512xf32> to vector<32x512xf32>
    %106 = arith.mulf %35, %105 : vector<32x512xf32>
    %107 = arith.addf %103, %106 : vector<32x512xf32>
    %108 = arith.addf %88, %107 : vector<32x512xf32>
    %c15 = arith.constant 15 : index
    %c0_24 = arith.constant 0 : index
    %109 = vector.load %arg2[%c15, %c0_24] : memref<25x512xf32, #tpu.memory_space<vmem>>, vector<1x512xf32>
    %110 = vector.broadcast %109 : vector<1x512xf32> to vector<32x512xf32>
    %111 = arith.mulf %14, %110 : vector<32x512xf32>
    %c16 = arith.constant 16 : index
    %c0_25 = arith.constant 0 : index
    %112 = vector.load %arg2[%c16, %c0_25] : memref<25x512xf32, #tpu.memory_space<vmem>>, vector<1x512xf32>
    %113 = vector.broadcast %112 : vector<1x512xf32> to vector<32x512xf32>
    %114 = arith.mulf %21, %113 : vector<32x512xf32>
    %115 = arith.addf %111, %114 : vector<32x512xf32>
    %c17 = arith.constant 17 : index
    %c0_26 = arith.constant 0 : index
    %116 = vector.load %arg2[%c17, %c0_26] : memref<25x512xf32, #tpu.memory_space<vmem>>, vector<1x512xf32>
    %117 = vector.broadcast %116 : vector<1x512xf32> to vector<32x512xf32>
    %118 = arith.mulf %7, %117 : vector<32x512xf32>
    %119 = arith.addf %115, %118 : vector<32x512xf32>
    %c18 = arith.constant 18 : index
    %c0_27 = arith.constant 0 : index
    %120 = vector.load %arg2[%c18, %c0_27] : memref<25x512xf32, #tpu.memory_space<vmem>>, vector<1x512xf32>
    %121 = vector.broadcast %120 : vector<1x512xf32> to vector<32x512xf32>
    %122 = arith.mulf %28, %121 : vector<32x512xf32>
    %123 = arith.addf %119, %122 : vector<32x512xf32>
    %c19 = arith.constant 19 : index
    %c0_28 = arith.constant 0 : index
    %124 = vector.load %arg2[%c19, %c0_28] : memref<25x512xf32, #tpu.memory_space<vmem>>, vector<1x512xf32>
    %125 = vector.broadcast %124 : vector<1x512xf32> to vector<32x512xf32>
    %126 = arith.mulf %35, %125 : vector<32x512xf32>
    %127 = arith.addf %123, %126 : vector<32x512xf32>
    %c31_i32 = arith.constant 31 : i32
    %128 = tpu.dynamic_rotate %127 by %c31_i32 dim 0 : vector<32x512xf32>, i32 -> vector<32x512xf32>
    %c15_i32 = arith.constant 15 : i32
    %129 = vector.broadcast %c15_i32 : i32 to vector<32x1xi32>
    %130 = arith.cmpi slt, %6, %129 : vector<32x1xi32>
    %131 = arith.extui %130 : vector<32x1xi1> to vector<32x1xi32>
    %132 = arith.sitofp %131 : vector<32x1xi32> to vector<32x1xf32>
    %133 = vector.broadcast %132 : vector<32x1xf32> to vector<32x512xf32>
    %134 = arith.mulf %128, %133 : vector<32x512xf32>
    %135 = arith.addf %108, %134 : vector<32x512xf32>
    %c20 = arith.constant 20 : index
    %c0_29 = arith.constant 0 : index
    %136 = vector.load %arg2[%c20, %c0_29] : memref<25x512xf32, #tpu.memory_space<vmem>>, vector<1x512xf32>
    %137 = vector.broadcast %136 : vector<1x512xf32> to vector<32x512xf32>
    %138 = arith.mulf %14, %137 : vector<32x512xf32>
    %c21 = arith.constant 21 : index
    %c0_30 = arith.constant 0 : index
    %139 = vector.load %arg2[%c21, %c0_30] : memref<25x512xf32, #tpu.memory_space<vmem>>, vector<1x512xf32>
    %140 = vector.broadcast %139 : vector<1x512xf32> to vector<32x512xf32>
    %141 = arith.mulf %21, %140 : vector<32x512xf32>
    %142 = arith.addf %138, %141 : vector<32x512xf32>
    %c22 = arith.constant 22 : index
    %c0_31 = arith.constant 0 : index
    %143 = vector.load %arg2[%c22, %c0_31] : memref<25x512xf32, #tpu.memory_space<vmem>>, vector<1x512xf32>
    %144 = vector.broadcast %143 : vector<1x512xf32> to vector<32x512xf32>
    %145 = arith.mulf %7, %144 : vector<32x512xf32>
    %146 = arith.addf %142, %145 : vector<32x512xf32>
    %c23 = arith.constant 23 : index
    %c0_32 = arith.constant 0 : index
    %147 = vector.load %arg2[%c23, %c0_32] : memref<25x512xf32, #tpu.memory_space<vmem>>, vector<1x512xf32>
    %148 = vector.broadcast %147 : vector<1x512xf32> to vector<32x512xf32>
    %149 = arith.mulf %28, %148 : vector<32x512xf32>
    %150 = arith.addf %146, %149 : vector<32x512xf32>
    %c24 = arith.constant 24 : index
    %c0_33 = arith.constant 0 : index
    %151 = vector.load %arg2[%c24, %c0_33] : memref<25x512xf32, #tpu.memory_space<vmem>>, vector<1x512xf32>
    %152 = vector.broadcast %151 : vector<1x512xf32> to vector<32x512xf32>
    %153 = arith.mulf %35, %152 : vector<32x512xf32>
    %154 = arith.addf %150, %153 : vector<32x512xf32>
    %c30_i32 = arith.constant 30 : i32
    %155 = tpu.dynamic_rotate %154 by %c30_i32 dim 0 : vector<32x512xf32>, i32 -> vector<32x512xf32>
    %c14_i32 = arith.constant 14 : i32
    %156 = vector.broadcast %c14_i32 : i32 to vector<32x1xi32>
    %157 = arith.cmpi slt, %6, %156 : vector<32x1xi32>
    %158 = arith.extui %157 : vector<32x1xi1> to vector<32x1xi32>
    %159 = arith.sitofp %158 : vector<32x1xi32> to vector<32x1xf32>
    %160 = vector.broadcast %159 : vector<32x1xf32> to vector<32x512xf32>
    %161 = arith.mulf %155, %160 : vector<32x512xf32>
    %162 = arith.addf %135, %161 : vector<32x512xf32>
    %c0_34 = arith.constant 0 : index
    %c0_35 = arith.constant 0 : index
    %163 = vector.load %arg3[%c0_34, %c0_35] : memref<1x512xf32, #tpu.memory_space<vmem>>, vector<1x512xf32>
    %164 = vector.broadcast %163 : vector<1x512xf32> to vector<32x512xf32>
    %165 = arith.addf %162, %164 : vector<32x512xf32>
    %c96_i32 = arith.constant 96 : i32
    %166 = tpu.dynamic_rotate %165 by %c96_i32 dim 1 : vector<32x512xf32>, i32 -> vector<32x512xf32>
    %c96_i32_36 = arith.constant 96 : i32
    %167 = vector.broadcast %c96_i32_36 : i32 to vector<1x512xi32>
    %168 = arith.cmpi sge, %0, %167 : vector<1x512xi32>
    %169 = arith.extui %168 : vector<1x512xi1> to vector<1x512xi32>
    %170 = arith.sitofp %169 : vector<1x512xi32> to vector<1x512xf32>
    %171 = vector.broadcast %170 : vector<1x512xf32> to vector<32x512xf32>
    %172 = arith.mulf %166, %171 : vector<32x512xf32>
    %c64_i32_37 = arith.constant 64 : i32
    %173 = tpu.dynamic_rotate %165 by %c64_i32_37 dim 1 : vector<32x512xf32>, i32 -> vector<32x512xf32>
    %c64_i32_38 = arith.constant 64 : i32
    %174 = vector.broadcast %c64_i32_38 : i32 to vector<1x512xi32>
    %175 = arith.cmpi sge, %0, %174 : vector<1x512xi32>
    %176 = arith.extui %175 : vector<1x512xi1> to vector<1x512xi32>
    %177 = arith.sitofp %176 : vector<1x512xi32> to vector<1x512xf32>
    %178 = vector.broadcast %177 : vector<1x512xf32> to vector<32x512xf32>
    %179 = arith.mulf %173, %178 : vector<32x512xf32>
    %c32_i32_39 = arith.constant 32 : i32
    %180 = tpu.dynamic_rotate %165 by %c32_i32_39 dim 1 : vector<32x512xf32>, i32 -> vector<32x512xf32>
    %c32_i32_40 = arith.constant 32 : i32
    %181 = vector.broadcast %c32_i32_40 : i32 to vector<1x512xi32>
    %182 = arith.cmpi sge, %0, %181 : vector<1x512xi32>
    %183 = arith.extui %182 : vector<1x512xi1> to vector<1x512xi32>
    %184 = arith.sitofp %183 : vector<1x512xi32> to vector<1x512xf32>
    %185 = vector.broadcast %184 : vector<1x512xf32> to vector<32x512xf32>
    %186 = arith.mulf %180, %185 : vector<32x512xf32>
    %c480_i32_41 = arith.constant 480 : i32
    %187 = tpu.dynamic_rotate %165 by %c480_i32_41 dim 1 : vector<32x512xf32>, i32 -> vector<32x512xf32>
    %c480_i32_42 = arith.constant 480 : i32
    %188 = vector.broadcast %c480_i32_42 : i32 to vector<1x512xi32>
    %189 = arith.cmpi slt, %0, %188 : vector<1x512xi32>
    %190 = arith.extui %189 : vector<1x512xi1> to vector<1x512xi32>
    %191 = arith.sitofp %190 : vector<1x512xi32> to vector<1x512xf32>
    %192 = vector.broadcast %191 : vector<1x512xf32> to vector<32x512xf32>
    %193 = arith.mulf %187, %192 : vector<32x512xf32>
    %c448_i32_43 = arith.constant 448 : i32
    %194 = tpu.dynamic_rotate %165 by %c448_i32_43 dim 1 : vector<32x512xf32>, i32 -> vector<32x512xf32>
    %c448_i32_44 = arith.constant 448 : i32
    %195 = vector.broadcast %c448_i32_44 : i32 to vector<1x512xi32>
    %196 = arith.cmpi slt, %0, %195 : vector<1x512xi32>
    %197 = arith.extui %196 : vector<1x512xi1> to vector<1x512xi32>
    %198 = arith.sitofp %197 : vector<1x512xi32> to vector<1x512xf32>
    %199 = vector.broadcast %198 : vector<1x512xf32> to vector<32x512xf32>
    %200 = arith.mulf %194, %199 : vector<32x512xf32>
    %c416_i32 = arith.constant 416 : i32
    %201 = tpu.dynamic_rotate %165 by %c416_i32 dim 1 : vector<32x512xf32>, i32 -> vector<32x512xf32>
    %c416_i32_45 = arith.constant 416 : i32
    %202 = vector.broadcast %c416_i32_45 : i32 to vector<1x512xi32>
    %203 = arith.cmpi slt, %0, %202 : vector<1x512xi32>
    %204 = arith.extui %203 : vector<1x512xi1> to vector<1x512xi32>
    %205 = arith.sitofp %204 : vector<1x512xi32> to vector<1x512xf32>
    %206 = vector.broadcast %205 : vector<1x512xf32> to vector<32x512xf32>
    %207 = arith.mulf %201, %206 : vector<32x512xf32>
    %c0_46 = arith.constant 0 : index
    %c0_47 = arith.constant 0 : index
    %208 = vector.load %arg4[%c0_46, %c0_47] : memref<3x512xf32, #tpu.memory_space<vmem>>, vector<1x512xf32>
    %209 = vector.broadcast %208 : vector<1x512xf32> to vector<32x512xf32>
    %210 = arith.mulf %186, %209 : vector<32x512xf32>
    %c1_48 = arith.constant 1 : index
    %c0_49 = arith.constant 0 : index
    %211 = vector.load %arg4[%c1_48, %c0_49] : memref<3x512xf32, #tpu.memory_space<vmem>>, vector<1x512xf32>
    %212 = vector.broadcast %211 : vector<1x512xf32> to vector<32x512xf32>
    %213 = arith.mulf %165, %212 : vector<32x512xf32>
    %214 = arith.addf %210, %213 : vector<32x512xf32>
    %c2_50 = arith.constant 2 : index
    %c0_51 = arith.constant 0 : index
    %215 = vector.load %arg4[%c2_50, %c0_51] : memref<3x512xf32, #tpu.memory_space<vmem>>, vector<1x512xf32>
    %216 = vector.broadcast %215 : vector<1x512xf32> to vector<32x512xf32>
    %217 = arith.mulf %193, %216 : vector<32x512xf32>
    %218 = arith.addf %214, %217 : vector<32x512xf32>
    %c0_52 = arith.constant 0 : index
    %c0_53 = arith.constant 0 : index
    %219 = vector.load %arg5[%c0_52, %c0_53] : memref<1x512xf32, #tpu.memory_space<vmem>>, vector<1x512xf32>
    %220 = vector.broadcast %219 : vector<1x512xf32> to vector<32x512xf32>
    %221 = arith.addf %218, %220 : vector<32x512xf32>
    %c1_i32_54 = arith.constant 1 : i32
    %222 = tpu.dynamic_rotate %221 by %c1_i32_54 dim 0 : vector<32x512xf32>, i32 -> vector<32x512xf32>
    %c1_i32_55 = arith.constant 1 : i32
    %223 = vector.broadcast %c1_i32_55 : i32 to vector<32x1xi32>
    %224 = arith.cmpi sge, %6, %223 : vector<32x1xi32>
    %225 = arith.extui %224 : vector<32x1xi1> to vector<32x1xi32>
    %226 = arith.sitofp %225 : vector<32x1xi32> to vector<32x1xf32>
    %227 = vector.broadcast %226 : vector<32x1xf32> to vector<32x512xf32>
    %228 = arith.mulf %222, %227 : vector<32x512xf32>
    %c0_56 = arith.constant 0 : index
    %c0_57 = arith.constant 0 : index
    %229 = vector.load %arg6[%c0_56, %c0_57] : memref<3x512xf32, #tpu.memory_space<vmem>>, vector<1x512xf32>
    %230 = vector.broadcast %229 : vector<1x512xf32> to vector<32x512xf32>
    %231 = arith.mulf %228, %230 : vector<32x512xf32>
    %c1_58 = arith.constant 1 : index
    %c0_59 = arith.constant 0 : index
    %232 = vector.load %arg6[%c1_58, %c0_59] : memref<3x512xf32, #tpu.memory_space<vmem>>, vector<1x512xf32>
    %233 = vector.broadcast %232 : vector<1x512xf32> to vector<32x512xf32>
    %234 = arith.mulf %221, %233 : vector<32x512xf32>
    %235 = arith.addf %231, %234 : vector<32x512xf32>
    %c31_i32_60 = arith.constant 31 : i32
    %236 = tpu.dynamic_rotate %221 by %c31_i32_60 dim 0 : vector<32x512xf32>, i32 -> vector<32x512xf32>
    %c15_i32_61 = arith.constant 15 : i32
    %237 = vector.broadcast %c15_i32_61 : i32 to vector<32x1xi32>
    %238 = arith.cmpi slt, %6, %237 : vector<32x1xi32>
    %239 = arith.extui %238 : vector<32x1xi1> to vector<32x1xi32>
    %240 = arith.sitofp %239 : vector<32x1xi32> to vector<32x1xf32>
    %241 = vector.broadcast %240 : vector<32x1xf32> to vector<32x512xf32>
    %242 = arith.mulf %236, %241 : vector<32x512xf32>
    %c2_62 = arith.constant 2 : index
    %c0_63 = arith.constant 0 : index
    %243 = vector.load %arg6[%c2_62, %c0_63] : memref<3x512xf32, #tpu.memory_space<vmem>>, vector<1x512xf32>
    %244 = vector.broadcast %243 : vector<1x512xf32> to vector<32x512xf32>
    %245 = arith.mulf %242, %244 : vector<32x512xf32>
    %246 = arith.addf %235, %245 : vector<32x512xf32>
    %c0_64 = arith.constant 0 : index
    %c0_65 = arith.constant 0 : index
    %247 = vector.load %arg7[%c0_64, %c0_65] : memref<1x512xf32, #tpu.memory_space<vmem>>, vector<1x512xf32>
    %248 = vector.broadcast %247 : vector<1x512xf32> to vector<32x512xf32>
    %249 = arith.addf %246, %248 : vector<32x512xf32>
    %c0_66 = arith.constant 0 : index
    %c0_67 = arith.constant 0 : index
    %250 = vector.load %arg8[%c0_66, %c0_67] : memref<7x512xf32, #tpu.memory_space<vmem>>, vector<1x512xf32>
    %251 = vector.broadcast %250 : vector<1x512xf32> to vector<32x512xf32>
    %252 = arith.mulf %172, %251 : vector<32x512xf32>
    %c1_68 = arith.constant 1 : index
    %c0_69 = arith.constant 0 : index
    %253 = vector.load %arg8[%c1_68, %c0_69] : memref<7x512xf32, #tpu.memory_space<vmem>>, vector<1x512xf32>
    %254 = vector.broadcast %253 : vector<1x512xf32> to vector<32x512xf32>
    %255 = arith.mulf %179, %254 : vector<32x512xf32>
    %256 = arith.addf %252, %255 : vector<32x512xf32>
    %c2_70 = arith.constant 2 : index
    %c0_71 = arith.constant 0 : index
    %257 = vector.load %arg8[%c2_70, %c0_71] : memref<7x512xf32, #tpu.memory_space<vmem>>, vector<1x512xf32>
    %258 = vector.broadcast %257 : vector<1x512xf32> to vector<32x512xf32>
    %259 = arith.mulf %186, %258 : vector<32x512xf32>
    %260 = arith.addf %256, %259 : vector<32x512xf32>
    %c3_72 = arith.constant 3 : index
    %c0_73 = arith.constant 0 : index
    %261 = vector.load %arg8[%c3_72, %c0_73] : memref<7x512xf32, #tpu.memory_space<vmem>>, vector<1x512xf32>
    %262 = vector.broadcast %261 : vector<1x512xf32> to vector<32x512xf32>
    %263 = arith.mulf %165, %262 : vector<32x512xf32>
    %264 = arith.addf %260, %263 : vector<32x512xf32>
    %c4_74 = arith.constant 4 : index
    %c0_75 = arith.constant 0 : index
    %265 = vector.load %arg8[%c4_74, %c0_75] : memref<7x512xf32, #tpu.memory_space<vmem>>, vector<1x512xf32>
    %266 = vector.broadcast %265 : vector<1x512xf32> to vector<32x512xf32>
    %267 = arith.mulf %193, %266 : vector<32x512xf32>
    %268 = arith.addf %264, %267 : vector<32x512xf32>
    %c5_76 = arith.constant 5 : index
    %c0_77 = arith.constant 0 : index
    %269 = vector.load %arg8[%c5_76, %c0_77] : memref<7x512xf32, #tpu.memory_space<vmem>>, vector<1x512xf32>
    %270 = vector.broadcast %269 : vector<1x512xf32> to vector<32x512xf32>
    %271 = arith.mulf %200, %270 : vector<32x512xf32>
    %272 = arith.addf %268, %271 : vector<32x512xf32>
    %c6_78 = arith.constant 6 : index
    %c0_79 = arith.constant 0 : index
    %273 = vector.load %arg8[%c6_78, %c0_79] : memref<7x512xf32, #tpu.memory_space<vmem>>, vector<1x512xf32>
    %274 = vector.broadcast %273 : vector<1x512xf32> to vector<32x512xf32>
    %275 = arith.mulf %207, %274 : vector<32x512xf32>
    %276 = arith.addf %272, %275 : vector<32x512xf32>
    %c0_80 = arith.constant 0 : index
    %c0_81 = arith.constant 0 : index
    %277 = vector.load %arg9[%c0_80, %c0_81] : memref<1x512xf32, #tpu.memory_space<vmem>>, vector<1x512xf32>
    %278 = vector.broadcast %277 : vector<1x512xf32> to vector<32x512xf32>
    %279 = arith.addf %276, %278 : vector<32x512xf32>
    %c3_i32 = arith.constant 3 : i32
    %280 = tpu.dynamic_rotate %279 by %c3_i32 dim 0 : vector<32x512xf32>, i32 -> vector<32x512xf32>
    %c3_i32_82 = arith.constant 3 : i32
    %281 = vector.broadcast %c3_i32_82 : i32 to vector<32x1xi32>
    %282 = arith.cmpi sge, %6, %281 : vector<32x1xi32>
    %283 = arith.extui %282 : vector<32x1xi1> to vector<32x1xi32>
    %284 = arith.sitofp %283 : vector<32x1xi32> to vector<32x1xf32>
    %285 = vector.broadcast %284 : vector<32x1xf32> to vector<32x512xf32>
    %286 = arith.mulf %280, %285 : vector<32x512xf32>
    %c0_83 = arith.constant 0 : index
    %c0_84 = arith.constant 0 : index
    %287 = vector.load %arg10[%c0_83, %c0_84] : memref<7x512xf32, #tpu.memory_space<vmem>>, vector<1x512xf32>
    %288 = vector.broadcast %287 : vector<1x512xf32> to vector<32x512xf32>
    %289 = arith.mulf %286, %288 : vector<32x512xf32>
    %c2_i32_85 = arith.constant 2 : i32
    %290 = tpu.dynamic_rotate %279 by %c2_i32_85 dim 0 : vector<32x512xf32>, i32 -> vector<32x512xf32>
    %c2_i32_86 = arith.constant 2 : i32
    %291 = vector.broadcast %c2_i32_86 : i32 to vector<32x1xi32>
    %292 = arith.cmpi sge, %6, %291 : vector<32x1xi32>
    %293 = arith.extui %292 : vector<32x1xi1> to vector<32x1xi32>
    %294 = arith.sitofp %293 : vector<32x1xi32> to vector<32x1xf32>
    %295 = vector.broadcast %294 : vector<32x1xf32> to vector<32x512xf32>
    %296 = arith.mulf %290, %295 : vector<32x512xf32>
    %c1_87 = arith.constant 1 : index
    %c0_88 = arith.constant 0 : index
    %297 = vector.load %arg10[%c1_87, %c0_88] : memref<7x512xf32, #tpu.memory_space<vmem>>, vector<1x512xf32>
    %298 = vector.broadcast %297 : vector<1x512xf32> to vector<32x512xf32>
    %299 = arith.mulf %296, %298 : vector<32x512xf32>
    %300 = arith.addf %289, %299 : vector<32x512xf32>
    %c1_i32_89 = arith.constant 1 : i32
    %301 = tpu.dynamic_rotate %279 by %c1_i32_89 dim 0 : vector<32x512xf32>, i32 -> vector<32x512xf32>
    %c1_i32_90 = arith.constant 1 : i32
    %302 = vector.broadcast %c1_i32_90 : i32 to vector<32x1xi32>
    %303 = arith.cmpi sge, %6, %302 : vector<32x1xi32>
    %304 = arith.extui %303 : vector<32x1xi1> to vector<32x1xi32>
    %305 = arith.sitofp %304 : vector<32x1xi32> to vector<32x1xf32>
    %306 = vector.broadcast %305 : vector<32x1xf32> to vector<32x512xf32>
    %307 = arith.mulf %301, %306 : vector<32x512xf32>
    %c2_91 = arith.constant 2 : index
    %c0_92 = arith.constant 0 : index
    %308 = vector.load %arg10[%c2_91, %c0_92] : memref<7x512xf32, #tpu.memory_space<vmem>>, vector<1x512xf32>
    %309 = vector.broadcast %308 : vector<1x512xf32> to vector<32x512xf32>
    %310 = arith.mulf %307, %309 : vector<32x512xf32>
    %311 = arith.addf %300, %310 : vector<32x512xf32>
    %c3_93 = arith.constant 3 : index
    %c0_94 = arith.constant 0 : index
    %312 = vector.load %arg10[%c3_93, %c0_94] : memref<7x512xf32, #tpu.memory_space<vmem>>, vector<1x512xf32>
    %313 = vector.broadcast %312 : vector<1x512xf32> to vector<32x512xf32>
    %314 = arith.mulf %279, %313 : vector<32x512xf32>
    %315 = arith.addf %311, %314 : vector<32x512xf32>
    %c31_i32_95 = arith.constant 31 : i32
    %316 = tpu.dynamic_rotate %279 by %c31_i32_95 dim 0 : vector<32x512xf32>, i32 -> vector<32x512xf32>
    %c15_i32_96 = arith.constant 15 : i32
    %317 = vector.broadcast %c15_i32_96 : i32 to vector<32x1xi32>
    %318 = arith.cmpi slt, %6, %317 : vector<32x1xi32>
    %319 = arith.extui %318 : vector<32x1xi1> to vector<32x1xi32>
    %320 = arith.sitofp %319 : vector<32x1xi32> to vector<32x1xf32>
    %321 = vector.broadcast %320 : vector<32x1xf32> to vector<32x512xf32>
    %322 = arith.mulf %316, %321 : vector<32x512xf32>
    %c4_97 = arith.constant 4 : index
    %c0_98 = arith.constant 0 : index
    %323 = vector.load %arg10[%c4_97, %c0_98] : memref<7x512xf32, #tpu.memory_space<vmem>>, vector<1x512xf32>
    %324 = vector.broadcast %323 : vector<1x512xf32> to vector<32x512xf32>
    %325 = arith.mulf %322, %324 : vector<32x512xf32>
    %326 = arith.addf %315, %325 : vector<32x512xf32>
    %c30_i32_99 = arith.constant 30 : i32
    %327 = tpu.dynamic_rotate %279 by %c30_i32_99 dim 0 : vector<32x512xf32>, i32 -> vector<32x512xf32>
    %c14_i32_100 = arith.constant 14 : i32
    %328 = vector.broadcast %c14_i32_100 : i32 to vector<32x1xi32>
    %329 = arith.cmpi slt, %6, %328 : vector<32x1xi32>
    %330 = arith.extui %329 : vector<32x1xi1> to vector<32x1xi32>
    %331 = arith.sitofp %330 : vector<32x1xi32> to vector<32x1xf32>
    %332 = vector.broadcast %331 : vector<32x1xf32> to vector<32x512xf32>
    %333 = arith.mulf %327, %332 : vector<32x512xf32>
    %c5_101 = arith.constant 5 : index
    %c0_102 = arith.constant 0 : index
    %334 = vector.load %arg10[%c5_101, %c0_102] : memref<7x512xf32, #tpu.memory_space<vmem>>, vector<1x512xf32>
    %335 = vector.broadcast %334 : vector<1x512xf32> to vector<32x512xf32>
    %336 = arith.mulf %333, %335 : vector<32x512xf32>
    %337 = arith.addf %326, %336 : vector<32x512xf32>
    %c29_i32 = arith.constant 29 : i32
    %338 = tpu.dynamic_rotate %279 by %c29_i32 dim 0 : vector<32x512xf32>, i32 -> vector<32x512xf32>
    %c13_i32 = arith.constant 13 : i32
    %339 = vector.broadcast %c13_i32 : i32 to vector<32x1xi32>
    %340 = arith.cmpi slt, %6, %339 : vector<32x1xi32>
    %341 = arith.extui %340 : vector<32x1xi1> to vector<32x1xi32>
    %342 = arith.sitofp %341 : vector<32x1xi32> to vector<32x1xf32>
    %343 = vector.broadcast %342 : vector<32x1xf32> to vector<32x512xf32>
    %344 = arith.mulf %338, %343 : vector<32x512xf32>
    %c6_103 = arith.constant 6 : index
    %c0_104 = arith.constant 0 : index
    %345 = vector.load %arg10[%c6_103, %c0_104] : memref<7x512xf32, #tpu.memory_space<vmem>>, vector<1x512xf32>
    %346 = vector.broadcast %345 : vector<1x512xf32> to vector<32x512xf32>
    %347 = arith.mulf %344, %346 : vector<32x512xf32>
    %348 = arith.addf %337, %347 : vector<32x512xf32>
    %c0_105 = arith.constant 0 : index
    %c0_106 = arith.constant 0 : index
    %349 = vector.load %arg11[%c0_105, %c0_106] : memref<1x512xf32, #tpu.memory_space<vmem>>, vector<1x512xf32>
    %350 = vector.broadcast %349 : vector<1x512xf32> to vector<32x512xf32>
    %351 = arith.addf %348, %350 : vector<32x512xf32>
    %352 = arith.addf %249, %351 : vector<32x512xf32>
    %353 = arith.mulf %165, %352 : vector<32x512xf32>
    %354 = arith.truncf %353 : vector<32x512xf32> to vector<32x512xbf16>
    %355 = arith.extf %354 : vector<32x512xbf16> to vector<32x512xf32>
    %356 = arith.subf %353, %355 : vector<32x512xf32>
    %357 = arith.truncf %356 : vector<32x512xf32> to vector<32x512xbf16>
    %c0_107 = arith.constant 0 : index
    %c0_108 = arith.constant 0 : index
    %358 = vector.load %arg12[%c0_107, %c0_108] : memref<128x128xbf16, #tpu.memory_space<vmem>>, vector<128x128xbf16>
    %c0_109 = arith.constant 0 : index
    %c0_110 = arith.constant 0 : index
    %359 = vector.load %arg13[%c0_109, %c0_110] : memref<128x128xbf16, #tpu.memory_space<vmem>>, vector<128x128xbf16>
    %360 = vector.extract_strided_slice %354 {offsets = [0, 0], sizes = [32, 128], strides = [1, 1]} : vector<32x512xbf16> to vector<32x128xbf16>
    %361 = vector.extract_strided_slice %357 {offsets = [0, 0], sizes = [32, 128], strides = [1, 1]} : vector<32x512xbf16> to vector<32x128xbf16>
    %cst = arith.constant dense<0.000000e+00> : vector<32x128xf32>
    %362 = tpu.matmul %360, %358, %cst {dimension_numbers = #tpu.dot_dimension_numbers<[1], [0], [0], [1], [0, 0, 1, 1], [], []>} : vector<32x128xbf16>, vector<128x128xbf16>, vector<32x128xf32> -> vector<32x128xf32>
    %cst_111 = arith.constant dense<0.000000e+00> : vector<32x128xf32>
    %363 = tpu.matmul %361, %358, %cst_111 {dimension_numbers = #tpu.dot_dimension_numbers<[1], [0], [0], [1], [0, 0, 1, 1], [], []>} : vector<32x128xbf16>, vector<128x128xbf16>, vector<32x128xf32> -> vector<32x128xf32>
    %364 = arith.addf %362, %363 : vector<32x128xf32>
    %cst_112 = arith.constant dense<0.000000e+00> : vector<32x128xf32>
    %365 = tpu.matmul %360, %359, %cst_112 {dimension_numbers = #tpu.dot_dimension_numbers<[1], [0], [0], [1], [0, 0, 1, 1], [], []>} : vector<32x128xbf16>, vector<128x128xbf16>, vector<32x128xf32> -> vector<32x128xf32>
    %366 = arith.addf %364, %365 : vector<32x128xf32>
    %367 = vector.extract_strided_slice %354 {offsets = [0, 128], sizes = [32, 128], strides = [1, 1]} : vector<32x512xbf16> to vector<32x128xbf16>
    %368 = vector.extract_strided_slice %357 {offsets = [0, 128], sizes = [32, 128], strides = [1, 1]} : vector<32x512xbf16> to vector<32x128xbf16>
    %cst_113 = arith.constant dense<0.000000e+00> : vector<32x128xf32>
    %369 = tpu.matmul %367, %358, %cst_113 {dimension_numbers = #tpu.dot_dimension_numbers<[1], [0], [0], [1], [0, 0, 1, 1], [], []>} : vector<32x128xbf16>, vector<128x128xbf16>, vector<32x128xf32> -> vector<32x128xf32>
    %cst_114 = arith.constant dense<0.000000e+00> : vector<32x128xf32>
    %370 = tpu.matmul %368, %358, %cst_114 {dimension_numbers = #tpu.dot_dimension_numbers<[1], [0], [0], [1], [0, 0, 1, 1], [], []>} : vector<32x128xbf16>, vector<128x128xbf16>, vector<32x128xf32> -> vector<32x128xf32>
    %371 = arith.addf %369, %370 : vector<32x128xf32>
    %cst_115 = arith.constant dense<0.000000e+00> : vector<32x128xf32>
    %372 = tpu.matmul %367, %359, %cst_115 {dimension_numbers = #tpu.dot_dimension_numbers<[1], [0], [0], [1], [0, 0, 1, 1], [], []>} : vector<32x128xbf16>, vector<128x128xbf16>, vector<32x128xf32> -> vector<32x128xf32>
    %373 = arith.addf %371, %372 : vector<32x128xf32>
    %374 = vector.extract_strided_slice %354 {offsets = [0, 256], sizes = [32, 128], strides = [1, 1]} : vector<32x512xbf16> to vector<32x128xbf16>
    %375 = vector.extract_strided_slice %357 {offsets = [0, 256], sizes = [32, 128], strides = [1, 1]} : vector<32x512xbf16> to vector<32x128xbf16>
    %cst_116 = arith.constant dense<0.000000e+00> : vector<32x128xf32>
    %376 = tpu.matmul %374, %358, %cst_116 {dimension_numbers = #tpu.dot_dimension_numbers<[1], [0], [0], [1], [0, 0, 1, 1], [], []>} : vector<32x128xbf16>, vector<128x128xbf16>, vector<32x128xf32> -> vector<32x128xf32>
    %cst_117 = arith.constant dense<0.000000e+00> : vector<32x128xf32>
    %377 = tpu.matmul %375, %358, %cst_117 {dimension_numbers = #tpu.dot_dimension_numbers<[1], [0], [0], [1], [0, 0, 1, 1], [], []>} : vector<32x128xbf16>, vector<128x128xbf16>, vector<32x128xf32> -> vector<32x128xf32>
    %378 = arith.addf %376, %377 : vector<32x128xf32>
    %cst_118 = arith.constant dense<0.000000e+00> : vector<32x128xf32>
    %379 = tpu.matmul %374, %359, %cst_118 {dimension_numbers = #tpu.dot_dimension_numbers<[1], [0], [0], [1], [0, 0, 1, 1], [], []>} : vector<32x128xbf16>, vector<128x128xbf16>, vector<32x128xf32> -> vector<32x128xf32>
    %380 = arith.addf %378, %379 : vector<32x128xf32>
    %381 = vector.extract_strided_slice %354 {offsets = [0, 384], sizes = [32, 128], strides = [1, 1]} : vector<32x512xbf16> to vector<32x128xbf16>
    %382 = vector.extract_strided_slice %357 {offsets = [0, 384], sizes = [32, 128], strides = [1, 1]} : vector<32x512xbf16> to vector<32x128xbf16>
    %cst_119 = arith.constant dense<0.000000e+00> : vector<32x128xf32>
    %383 = tpu.matmul %381, %358, %cst_119 {dimension_numbers = #tpu.dot_dimension_numbers<[1], [0], [0], [1], [0, 0, 1, 1], [], []>} : vector<32x128xbf16>, vector<128x128xbf16>, vector<32x128xf32> -> vector<32x128xf32>
    %cst_120 = arith.constant dense<0.000000e+00> : vector<32x128xf32>
    %384 = tpu.matmul %382, %358, %cst_120 {dimension_numbers = #tpu.dot_dimension_numbers<[1], [0], [0], [1], [0, 0, 1, 1], [], []>} : vector<32x128xbf16>, vector<128x128xbf16>, vector<32x128xf32> -> vector<32x128xf32>
    %385 = arith.addf %383, %384 : vector<32x128xf32>
    %cst_121 = arith.constant dense<0.000000e+00> : vector<32x128xf32>
    %386 = tpu.matmul %381, %359, %cst_121 {dimension_numbers = #tpu.dot_dimension_numbers<[1], [0], [0], [1], [0, 0, 1, 1], [], []>} : vector<32x128xbf16>, vector<128x128xbf16>, vector<32x128xf32> -> vector<32x128xf32>
    %387 = arith.addf %385, %386 : vector<32x128xf32>
    %388 = tpu.concatenate %366, %373, %380, %387 in 1 : vector<32x128xf32>, vector<32x128xf32>, vector<32x128xf32>, vector<32x128xf32> -> vector<32x512xf32>
    %c0_122 = arith.constant 0 : index
    %c0_123 = arith.constant 0 : index
    %389 = vector.load %arg14[%c0_122, %c0_123] : memref<1x512xf32, #tpu.memory_space<vmem>>, vector<1x512xf32>
    %390 = vector.broadcast %389 : vector<1x512xf32> to vector<32x512xf32>
    %391 = arith.addf %388, %390 : vector<32x512xf32>
    %392 = arith.addf %391, %7 : vector<32x512xf32>
    %cst_124 = arith.constant dense<0.000000e+00> : vector<512xf32>
    %393 = vector.multi_reduction <add>, %392, %cst_124 [0] : vector<32x512xf32> to vector<512xf32>
    %394 = vector.shape_cast %393 : vector<512xf32> to vector<1x512xf32>
    %395 = arith.mulf %392, %392 : vector<32x512xf32>
    %cst_125 = arith.constant dense<0.000000e+00> : vector<512xf32>
    %396 = vector.multi_reduction <add>, %395, %cst_125 [0] : vector<32x512xf32> to vector<512xf32>
    %397 = vector.shape_cast %396 : vector<512xf32> to vector<1x512xf32>
    %398 = tpu.concatenate %394, %397 in 0 : vector<1x512xf32>, vector<1x512xf32> -> vector<2x512xf32>
    %c32_i32_126 = arith.constant 32 : i32
    %399 = tpu.dynamic_rotate %398 by %c32_i32_126 dim 1 : vector<2x512xf32>, i32 -> vector<2x512xf32>
    %400 = arith.addf %398, %399 : vector<2x512xf32>
    %c64_i32_127 = arith.constant 64 : i32
    %401 = tpu.dynamic_rotate %400 by %c64_i32_127 dim 1 : vector<2x512xf32>, i32 -> vector<2x512xf32>
    %402 = arith.addf %400, %401 : vector<2x512xf32>
    %c128_i32 = arith.constant 128 : i32
    %403 = tpu.dynamic_rotate %402 by %c128_i32 dim 1 : vector<2x512xf32>, i32 -> vector<2x512xf32>
    %404 = arith.addf %402, %403 : vector<2x512xf32>
    %c256_i32 = arith.constant 256 : i32
    %405 = tpu.dynamic_rotate %404 by %c256_i32 dim 1 : vector<2x512xf32>, i32 -> vector<2x512xf32>
    %406 = arith.addf %404, %405 : vector<2x512xf32>
    %407 = vector.extract_strided_slice %406 {offsets = [0, 0], sizes = [1, 512], strides = [1, 1]} : vector<2x512xf32> to vector<1x512xf32>
    %cst_128 = arith.constant 0.001953125 : f32
    %408 = vector.broadcast %cst_128 : f32 to vector<1x512xf32>
    %409 = arith.mulf %407, %408 : vector<1x512xf32>
    %410 = vector.extract_strided_slice %406 {offsets = [1, 0], sizes = [1, 512], strides = [1, 1]} : vector<2x512xf32> to vector<1x512xf32>
    %cst_129 = arith.constant 0.001953125 : f32
    %411 = vector.broadcast %cst_129 : f32 to vector<1x512xf32>
    %412 = arith.mulf %410, %411 : vector<1x512xf32>
    %413 = arith.mulf %409, %409 : vector<1x512xf32>
    %414 = arith.subf %412, %413 : vector<1x512xf32>
    %cst_130 = arith.constant 9.99999974E-6 : f32
    %415 = vector.broadcast %cst_130 : f32 to vector<1x512xf32>
    %416 = arith.addf %414, %415 : vector<1x512xf32>
    %417 = math.rsqrt %416 : vector<1x512xf32>
    %c0_131 = arith.constant 0 : index
    %c0_132 = arith.constant 0 : index
    %418 = vector.load %arg15[%c0_131, %c0_132] : memref<1x512xf32, #tpu.memory_space<vmem>>, vector<1x512xf32>
    %419 = arith.mulf %417, %418 : vector<1x512xf32>
    %420 = vector.broadcast %409 : vector<1x512xf32> to vector<32x512xf32>
    %421 = arith.subf %392, %420 : vector<32x512xf32>
    %422 = vector.broadcast %419 : vector<1x512xf32> to vector<32x512xf32>
    %423 = arith.mulf %421, %422 : vector<32x512xf32>
    %c0_133 = arith.constant 0 : index
    %c0_134 = arith.constant 0 : index
    %424 = vector.load %arg16[%c0_133, %c0_134] : memref<1x512xf32, #tpu.memory_space<vmem>>, vector<1x512xf32>
    %425 = vector.broadcast %424 : vector<1x512xf32> to vector<32x512xf32>
    %426 = arith.addf %423, %425 : vector<32x512xf32>
    %cst_135 = arith.constant 0.707106769 : f32
    %427 = vector.broadcast %cst_135 : f32 to vector<32x512xf32>
    %428 = arith.mulf %426, %427 : vector<32x512xf32>
    %cst_136 = arith.constant 0.000000e+00 : f32
    %429 = vector.broadcast %cst_136 : f32 to vector<32x512xf32>
    %430 = arith.cmpf oge, %428, %429 : vector<32x512xf32>
    %cst_137 = arith.constant 1.000000e+00 : f32
    %cst_138 = arith.constant -1.000000e+00 : f32
    %431 = vector.broadcast %cst_137 : f32 to vector<32x512xf32>
    %432 = vector.broadcast %cst_138 : f32 to vector<32x512xf32>
    %433 = arith.select %430, %431, %432 : vector<32x512xi1>, vector<32x512xf32>
    %434 = math.absf %428 : vector<32x512xf32>
    %cst_139 = arith.constant 0.327591091 : f32
    %435 = vector.broadcast %cst_139 : f32 to vector<32x512xf32>
    %436 = arith.mulf %435, %434 : vector<32x512xf32>
    %cst_140 = arith.constant 1.000000e+00 : f32
    %437 = vector.broadcast %cst_140 : f32 to vector<32x512xf32>
    %438 = arith.addf %437, %436 : vector<32x512xf32>
    %439 = tpu.reciprocal %438 {approx = true} : vector<32x512xf32> -> vector<32x512xf32>
    %440 = arith.mulf %438, %439 : vector<32x512xf32>
    %cst_141 = arith.constant 2.000000e+00 : f32
    %441 = vector.broadcast %cst_141 : f32 to vector<32x512xf32>
    %442 = arith.subf %441, %440 : vector<32x512xf32>
    %443 = arith.mulf %439, %442 : vector<32x512xf32>
    %cst_142 = arith.constant 1.06140542 : f32
    %444 = vector.broadcast %cst_142 : f32 to vector<32x512xf32>
    %445 = arith.mulf %443, %444 : vector<32x512xf32>
    %cst_143 = arith.constant -1.45315206 : f32
    %446 = vector.broadcast %cst_143 : f32 to vector<32x512xf32>
    %447 = arith.addf %446, %445 : vector<32x512xf32>
    %448 = arith.mulf %443, %447 : vector<32x512xf32>
    %cst_144 = arith.constant 1.42141378 : f32
    %449 = vector.broadcast %cst_144 : f32 to vector<32x512xf32>
    %450 = arith.addf %449, %448 : vector<32x512xf32>
    %451 = arith.mulf %443, %450 : vector<32x512xf32>
    %cst_145 = arith.constant -0.284496725 : f32
    %452 = vector.broadcast %cst_145 : f32 to vector<32x512xf32>
    %453 = arith.addf %452, %451 : vector<32x512xf32>
    %454 = arith.mulf %443, %453 : vector<32x512xf32>
    %cst_146 = arith.constant 0.254829586 : f32
    %455 = vector.broadcast %cst_146 : f32 to vector<32x512xf32>
    %456 = arith.addf %455, %454 : vector<32x512xf32>
    %457 = arith.mulf %443, %456 : vector<32x512xf32>
    %cst_147 = arith.constant 0.000000e+00 : f32
    %458 = vector.broadcast %cst_147 : f32 to vector<32x512xf32>
    %459 = arith.subf %458, %434 : vector<32x512xf32>
    %460 = arith.mulf %459, %434 : vector<32x512xf32>
    %461 = math.exp %460 : vector<32x512xf32>
    %462 = arith.mulf %457, %461 : vector<32x512xf32>
    %cst_148 = arith.constant 1.000000e+00 : f32
    %463 = vector.broadcast %cst_148 : f32 to vector<32x512xf32>
    %464 = arith.subf %463, %462 : vector<32x512xf32>
    %465 = arith.mulf %433, %464 : vector<32x512xf32>
    %cst_149 = arith.constant 5.000000e-01 : f32
    %466 = vector.broadcast %cst_149 : f32 to vector<32x512xf32>
    %467 = arith.mulf %466, %426 : vector<32x512xf32>
    %cst_150 = arith.constant 1.000000e+00 : f32
    %468 = vector.broadcast %cst_150 : f32 to vector<32x512xf32>
    %469 = arith.addf %468, %465 : vector<32x512xf32>
    %470 = arith.mulf %467, %469 : vector<32x512xf32>
    %c0_151 = arith.constant 0 : index
    %c0_152 = arith.constant 0 : index
    %471 = vector.load %arg17[%c0_151, %c0_152] : memref<32x512xf32, #tpu.memory_space<vmem>>, vector<32x512xf32>
    tpu.vector_store %arg17[%c0_151, %c0_152], %470 {strides = array<i32>} : memref<32x512xf32, #tpu.memory_space<vmem>>, vector<32x512xf32>,
    return
  }
  func.func @transform_0(%arg0: i32) -> (i32, i32) {
    %c0_i32 = arith.constant 0 : i32
    %c0_i32_0 = arith.constant 0 : i32
    %c0_i32_1 = arith.constant 0 : i32
    return %c0_i32, %c0_i32_0 : i32, i32
  }
  func.func @transform_1(%arg0: i32) -> (i32, i32) {
    %c0_i32 = arith.constant 0 : i32
    %c0_i32_0 = arith.constant 0 : i32
    %c0_i32_1 = arith.constant 0 : i32
    return %c0_i32, %c0_i32_0 : i32, i32
  }
  func.func @transform_2(%arg0: i32) -> (i32, i32) {
    %c0_i32 = arith.constant 0 : i32
    %c0_i32_0 = arith.constant 0 : i32
    %c0_i32_1 = arith.constant 0 : i32
    return %c0_i32, %c0_i32_0 : i32, i32
  }
  func.func @transform_3(%arg0: i32) -> (i32, i32) {
    %c0_i32 = arith.constant 0 : i32
    %c0_i32_0 = arith.constant 0 : i32
    %c0_i32_1 = arith.constant 0 : i32
    return %c0_i32, %c0_i32_0 : i32, i32
  }
  func.func @transform_4(%arg0: i32) -> (i32, i32) {
    %c0_i32 = arith.constant 0 : i32
    %c0_i32_0 = arith.constant 0 : i32
    %c0_i32_1 = arith.constant 0 : i32
    return %c0_i32, %c0_i32_0 : i32, i32
  }
  func.func @transform_5(%arg0: i32) -> (i32, i32) {
    %c0_i32 = arith.constant 0 : i32
    %c0_i32_0 = arith.constant 0 : i32
    %c0_i32_1 = arith.constant 0 : i32
    return %c0_i32, %c0_i32_0 : i32, i32
  }
  func.func @transform_6(%arg0: i32) -> (i32, i32) {
    %c0_i32 = arith.constant 0 : i32
    %c0_i32_0 = arith.constant 0 : i32
    %c0_i32_1 = arith.constant 0 : i32
    return %c0_i32, %c0_i32_0 : i32, i32
  }
  func.func @transform_7(%arg0: i32) -> (i32, i32) {
    %c0_i32 = arith.constant 0 : i32
    %c0_i32_0 = arith.constant 0 : i32
    %c0_i32_1 = arith.constant 0 : i32
    return %c0_i32, %c0_i32_0 : i32, i32
  }
  func.func @transform_8(%arg0: i32) -> (i32, i32) {
    %c0_i32 = arith.constant 0 : i32
    %c0_i32_0 = arith.constant 0 : i32
    %c0_i32_1 = arith.constant 0 : i32
    return %c0_i32, %c0_i32_0 : i32, i32
  }
  func.func @transform_9(%arg0: i32) -> (i32, i32) {
    %c0_i32 = arith.constant 0 : i32
    %c0_i32_0 = arith.constant 0 : i32
    %c0_i32_1 = arith.constant 0 : i32
    return %c0_i32, %c0_i32_0 : i32, i32
  }
  func.func @transform_10(%arg0: i32) -> (i32, i32) {
    %c0_i32 = arith.constant 0 : i32
    %c0_i32_0 = arith.constant 0 : i32
    %c0_i32_1 = arith.constant 0 : i32
    return %c0_i32, %c0_i32_0 : i32, i32
  }
  func.func @transform_11(%arg0: i32) -> (i32, i32) {
    %c0_i32 = arith.constant 0 : i32
    %c0_i32_0 = arith.constant 0 : i32
    %c0_i32_1 = arith.constant 0 : i32
    return %c0_i32, %c0_i32_0 : i32, i32
  }
  func.func @transform_12(%arg0: i32) -> (i32, i32) {
    %c0_i32 = arith.constant 0 : i32
    %c0_i32_0 = arith.constant 0 : i32
    %c0_i32_1 = arith.constant 0 : i32
    return %c0_i32, %c0_i32_0 : i32, i32
  }
  func.func @transform_13(%arg0: i32) -> (i32, i32) {
    %c0_i32 = arith.constant 0 : i32
    %c0_i32_0 = arith.constant 0 : i32
    %c0_i32_1 = arith.constant 0 : i32
    return %c0_i32, %c0_i32_0 : i32, i32
  }
  func.func @transform_14(%arg0: i32) -> (i32, i32) {
    %c0_i32 = arith.constant 0 : i32
    %c0_i32_0 = arith.constant 0 : i32
    %c0_i32_1 = arith.constant 0 : i32
    return %c0_i32, %c0_i32_0 : i32, i32
  }
  func.func @transform_15(%arg0: i32) -> (i32, i32) {
    %c0_i32 = arith.constant 0 : i32
    %c0_i32_0 = arith.constant 0 : i32
    %c0_i32_1 = arith.constant 0 : i32
    return %c0_i32, %c0_i32_0 : i32, i32
  }
  func.func @transform_16(%arg0: i32) -> (i32, i32) {
    %c0_i32 = arith.constant 0 : i32
    %c0_i32_0 = arith.constant 0 : i32
    %c0_i32_1 = arith.constant 0 : i32
    return %c0_i32, %c0_i32_0 : i32, i32
  }
}

</mosaic_0001>

<llo_original>
// kernel: boundary_module_forward.1
$region0: #{boundary_module_forward.1}
  #allocation0 [shape = 'u32[]', space=smem, size = 0x4, offset = 0x4, fixed_abs, tag = 'smem constant byte address 0x4 - core index']
  #allocation1 [shape = 'u32[144,128]{1,0:T(1,128)}', space=vmem, size = 0x12000, scoped, tag = 'internal scratch']
  %s0 = inlined_call_operand.vmem [shape: f32[32,512], index: 0, kind: input, shape index: {}]
  %s1 = inlined_call_operand.vmem [shape: f32[25,512], index: 1, kind: input, shape index: {}]
  %s2 = inlined_call_operand.vmem [shape: f32[1,512], index: 2, kind: input, shape index: {}]
  %s3 = inlined_call_operand.vmem [shape: f32[3,512], index: 3, kind: input, shape index: {}]
  %s4 = inlined_call_operand.vmem [shape: f32[1,512], index: 4, kind: input, shape index: {}]
  %s5 = inlined_call_operand.vmem [shape: f32[3,512], index: 5, kind: input, shape index: {}]
  %s6 = inlined_call_operand.vmem [shape: f32[1,512], index: 6, kind: input, shape index: {}]
  %s7 = inlined_call_operand.vmem [shape: f32[7,512], index: 7, kind: input, shape index: {}]
  %s8 = inlined_call_operand.vmem [shape: f32[1,512], index: 8, kind: input, shape index: {}]
  %s9 = inlined_call_operand.vmem [shape: f32[7,512], index: 9, kind: input, shape index: {}]
  %s10 = inlined_call_operand.vmem [shape: f32[1,512], index: 10, kind: input, shape index: {}]
  %s11 = inlined_call_operand.vmem [shape: bf16[128,128], index: 11, kind: input, shape index: {}]
  %s12 = inlined_call_operand.vmem [shape: bf16[128,128], index: 12, kind: input, shape index: {}]
  %s13 = inlined_call_operand.vmem [shape: f32[1,512], index: 13, kind: input, shape index: {}]
  %s14 = inlined_call_operand.vmem [shape: f32[1,512], index: 14, kind: input, shape index: {}]
  %s15 = inlined_call_operand.vmem [shape: f32[1,512], index: 15, kind: input, shape index: {}]
  %s16 = inlined_call_operand.vmem [shape: f32[32,512], index: 16, kind: output, shape index: {}]
  %s17 = sld [smem:[#allocation0]]
  $region74: #{boundary_module_forward.1} parent=0
    _
  %s19 = ssub.s32 1, %s17
  %s20 = scalar_select 0, %s19, %s17
  // Predicated region
  $region2: #{boundary_module_forward.1} parent=0 // pred_check
    _
  $region3: #{boundary_module_forward.1} parent=0 // pred_check_branch
    %22 = sbr.rel (0) target = $region5
  $region4: #{boundary_module_forward.1} parent=0 // pred_region
    _
  $region5: #{boundary_module_forward.1} parent=0 // pred_fallthru
    _
  // Predicated region
  $region6: #{boundary_module_forward.1} parent=0 // pred_check
    _
  $region7: #{boundary_module_forward.1} parent=0 // pred_check_branch
    %24 = sbr.rel (0) target = $region9
  $region8: #{boundary_module_forward.1} parent=0 // pred_region
    _
  $region9: #{boundary_module_forward.1} parent=0 // pred_fallthru
    _
  // Predicated region
  $region10: #{boundary_module_forward.1} parent=0 // pred_check
    _
  $region11: #{boundary_module_forward.1} parent=0 // pred_check_branch
    %26 = sbr.rel (0) target = $region13
  $region12: #{boundary_module_forward.1} parent=0 // pred_region
    _
  $region13: #{boundary_module_forward.1} parent=0 // pred_fallthru
    _
  // Predicated region
  $region14: #{boundary_module_forward.1} parent=0 // pred_check
    _
  $region15: #{boundary_module_forward.1} parent=0 // pred_check_branch
    %28 = sbr.rel (0) target = $region17
  $region16: #{boundary_module_forward.1} parent=0 // pred_region
    _
  $region17: #{boundary_module_forward.1} parent=0 // pred_fallthru
    _
  // Predicated region
  $region18: #{boundary_module_forward.1} parent=0 // pred_check
    _
  $region19: #{boundary_module_forward.1} parent=0 // pred_check_branch
    %30 = sbr.rel (0) target = $region21
  $region20: #{boundary_module_forward.1} parent=0 // pred_region
    _
  $region21: #{boundary_module_forward.1} parent=0 // pred_fallthru
    _
  // Predicated region
  $region22: #{boundary_module_forward.1} parent=0 // pred_check
    _
  $region23: #{boundary_module_forward.1} parent=0 // pred_check_branch
    %32 = sbr.rel (0) target = $region25
  $region24: #{boundary_module_forward.1} parent=0 // pred_region
    _
  $region25: #{boundary_module_forward.1} parent=0 // pred_fallthru
    _
  // Predicated region
  $region26: #{boundary_module_forward.1} parent=0 // pred_check
    _
  $region27: #{boundary_module_forward.1} parent=0 // pred_check_branch
    %34 = sbr.rel (0) target = $region29
  $region28: #{boundary_module_forward.1} parent=0 // pred_region
    _
  $region29: #{boundary_module_forward.1} parent=0 // pred_fallthru
    _
  // Predicated region
  $region30: #{boundary_module_forward.1} parent=0 // pred_check
    _
  $region31: #{boundary_module_forward.1} parent=0 // pred_check_branch
    %36 = sbr.rel (0) target = $region33
  $region32: #{boundary_module_forward.1} parent=0 // pred_region
    _
  $region33: #{boundary_module_forward.1} parent=0 // pred_fallthru
    _
  // Predicated region
  $region34: #{boundary_module_forward.1} parent=0 // pred_check
    _
  $region35: #{boundary_module_forward.1} parent=0 // pred_check_branch
    %38 = sbr.rel (0) target = $region37
  $region36: #{boundary_module_forward.1} parent=0 // pred_region
    _
  $region37: #{boundary_module_forward.1} parent=0 // pred_fallthru
    _
  // Predicated region
  $region38: #{boundary_module_forward.1} parent=0 // pred_check
    _
  $region39: #{boundary_module_forward.1} parent=0 // pred_check_branch
    %40 = sbr.rel (0) target = $region41
  $region40: #{boundary_module_forward.1} parent=0 // pred_region
    _
  $region41: #{boundary_module_forward.1} parent=0 // pred_fallthru
    _
  // Predicated region
  $region42: #{boundary_module_forward.1} parent=0 // pred_check
    _
  $region43: #{boundary_module_forward.1} parent=0 // pred_check_branch
    %42 = sbr.rel (0) target = $region45
  $region44: #{boundary_module_forward.1} parent=0 // pred_region
    _
  $region45: #{boundary_module_forward.1} parent=0 // pred_fallthru
    _
  // Predicated region
  $region46: #{boundary_module_forward.1} parent=0 // pred_check
    _
  $region47: #{boundary_module_forward.1} parent=0 // pred_check_branch
    %44 = sbr.rel (0) target = $region49
  $region48: #{boundary_module_forward.1} parent=0 // pred_region
    _
  $region49: #{boundary_module_forward.1} parent=0 // pred_fallthru
    _
  // Predicated region
  $region50: #{boundary_module_forward.1} parent=0 // pred_check
    _
  $region51: #{boundary_module_forward.1} parent=0 // pred_check_branch
    %46 = sbr.rel (0) target = $region53
  $region52: #{boundary_module_forward.1} parent=0 // pred_region
    _
  $region53: #{boundary_module_forward.1} parent=0 // pred_fallthru
    _
  // Predicated region
  $region54: #{boundary_module_forward.1} parent=0 // pred_check
    _
  $region55: #{boundary_module_forward.1} parent=0 // pred_check_branch
    %48 = sbr.rel (0) target = $region57
  $region56: #{boundary_module_forward.1} parent=0 // pred_region
    _
  $region57: #{boundary_module_forward.1} parent=0 // pred_fallthru
    _
  // Predicated region
  $region58: #{boundary_module_forward.1} parent=0 // pred_check
    _
  $region59: #{boundary_module_forward.1} parent=0 // pred_check_branch
    %50 = sbr.rel (0) target = $region61
  $region60: #{boundary_module_forward.1} parent=0 // pred_region
    _
  $region61: #{boundary_module_forward.1} parent=0 // pred_fallthru
    _
  // Predicated region
  $region62: #{boundary_module_forward.1} parent=0 // pred_check
    _
  $region63: #{boundary_module_forward.1} parent=0 // pred_check_branch
    %52 = sbr.rel (0) target = $region65
  $region64: #{boundary_module_forward.1} parent=0 // pred_region
    _
  $region65: #{boundary_module_forward.1} parent=0 // pred_fallthru
    _
  %v54 = vlaneseq
  %v55 = vand.u32 %v54, 127
  %v56 = vadd.s32 %v55, 128
  %v57 = vadd.s32 %v55, 256
  %v58 = vadd.s32 %v55, 384
  %v59 = vlaneseq
  %v60 = vshrl.u32 %v59, 7
  %v61 = vadd.s32 %v60, 8
  %v62 = vadd.s32 %v60, 16
  %v63 = vadd.s32 %v60, 24
  %vm64 = vcmp.ge.s32.totalorder %v60, 16
  %vm65 = vcmp.ge.s32.totalorder %v61, 16
  %vm66 = vcmp.ge.s32.totalorder %v62, 16
  %vm67 = vcmp.ge.s32.totalorder %v63, 16
  %v68 = vsub.s32 %v60, 16
  %v69 = vsub.s32 %v61, 16
  %v70 = vsub.s32 %v63, 16
  %v71 = vsel %vm64, %v68, %v60
  %v72 = vsel %vm65, %v69, %v61
  %v73 = vsel %vm66, %v60, %v62
  %v74 = vsel %vm67, %v70, %v63
  %v75 = vld [vmem:[%s0] sm:$0xff]
  %v76 = vld [vmem:[%s0 + $0x8] sm:$0xff]
  %v77 = vld [vmem:[%s0 + $0x10] sm:$0xff]
  %v78 = vld [vmem:[%s0 + $0x18] sm:$0xff]
  %v79 = vld [vmem:[%s0 + $0x20] sm:$0xff]
  %v80 = vld [vmem:[%s0 + $0x28] sm:$0xff]
  %v81 = vld [vmem:[%s0 + $0x30] sm:$0xff]
  %v82 = vld [vmem:[%s0 + $0x38] sm:$0xff]
  %v83 = vld [vmem:[%s0 + $0x40] sm:$0xff]
  %v84 = vld [vmem:[%s0 + $0x48] sm:$0xff]
  %v85 = vld [vmem:[%s0 + $0x50] sm:$0xff]
  %v86 = vld [vmem:[%s0 + $0x58] sm:$0xff]
  %v87 = vld [vmem:[%s0 + $0x60] sm:$0xff]
  %v88 = vld [vmem:[%s0 + $0x68] sm:$0xff]
  %v89 = vld [vmem:[%s0 + $0x70] sm:$0xff]
  %v90 = vld [vmem:[%s0 + $0x78] sm:$0xff]
  %91 = vrot.lane.b32.xlu0 %v75, 64
  %v92 = vpop.permute.xlu0 %91
  %93 = vrot.lane.b32.xlu0 %v79, 64
  %v94 = vpop.permute.xlu0 %93
  %95 = vrot.lane.b32.xlu0 %v83, 64
  %v96 = vpop.permute.xlu0 %95
  %97 = vrot.lane.b32.xlu0 %v87, 64
  %v98 = vpop.permute.xlu0 %97
  %99 = vrot.lane.b32.xlu0 %v76, 64
  %v100 = vpop.permute.xlu0 %99
  %101 = vrot.lane.b32.xlu0 %v80, 64
  %v102 = vpop.permute.xlu0 %101
  %103 = vrot.lane.b32.xlu0 %v84, 64
  %v104 = vpop.permute.xlu0 %103
  %105 = vrot.lane.b32.xlu0 %v88, 64
  %v106 = vpop.permute.xlu0 %105
  %107 = vrot.lane.b32.xlu0 %v77, 64
  %v108 = vpop.permute.xlu0 %107
  %109 = vrot.lane.b32.xlu0 %v81, 64
  %v110 = vpop.permute.xlu0 %109
  %111 = vrot.lane.b32.xlu0 %v85, 64
  %v112 = vpop.permute.xlu0 %111
  %113 = vrot.lane.b32.xlu0 %v89, 64
  %v114 = vpop.permute.xlu0 %113
  %115 = vrot.lane.b32.xlu0 %v78, 64
  %v116 = vpop.permute.xlu0 %115
  %117 = vrot.lane.b32.xlu0 %v82, 64
  %v118 = vpop.permute.xlu0 %117
  %119 = vrot.lane.b32.xlu0 %v86, 64
  %v120 = vpop.permute.xlu0 %119
  %121 = vrot.lane.b32.xlu0 %v90, 64
  %v122 = vpop.permute.xlu0 %121
  %vm123 = vcmp.lt.s32.totalorder %v55, 64
  %v124 = vsel %vm123, %v108, %v116
  %v125 = vsel %vm123, %v110, %v118
  %v126 = vsel %vm123, %v112, %v120
  %v127 = vsel %vm123, %v114, %v122
  %v128 = vsel %vm123, %v100, %v108
  %v129 = vsel %vm123, %v102, %v110
  %v130 = vsel %vm123, %v104, %v112
  %v131 = vsel %vm123, %v106, %v114
  %v132 = vsel %vm123, %v92, %v100
  %v133 = vsel %vm123, %v94, %v102
  %v134 = vsel %vm123, %v96, %v104
  %v135 = vsel %vm123, %v98, %v106
  %v136 = vsel %vm123, %v116, %v92
  %v137 = vsel %vm123, %v118, %v94
  %v138 = vsel %vm123, %v120, %v96
  %v139 = vsel %vm123, %v122, %v98
  %vm140 = vcmp.ge.s32.totalorder %v55, 64
  %vm141 = vcmp.ge.s32.totalorder %v56, 64
  %vm142 = vcmp.ge.s32.totalorder %v57, 64
  %vm143 = vcmp.ge.s32.totalorder %v58, 64
  %v144 = vsel %vm140, 1, 0
  %v145 = vsel %vm141, 1, 0
  %v146 = vsel %vm142, 1, 0
  %v147 = vsel %vm143, 1, 0
  %v148 = vcvt.s32.f32 %v144
  %v149 = vcvt.s32.f32 %v145
  %v150 = vcvt.s32.f32 %v146
  %v151 = vcvt.s32.f32 %v147
  %v152 = vmul.f32 %v136, %v148
  %v153 = vmul.f32 %v132, %v149
  %v154 = vmul.f32 %v128, %v150
  %v155 = vmul.f32 %v124, %v151
  %v156 = vmul.f32 %v137, %v148
  %v157 = vmul.f32 %v133, %v149
  %v158 = vmul.f32 %v129, %v150
  %v159 = vmul.f32 %v125, %v151
  %v160 = vmul.f32 %v138, %v148
  %v161 = vmul.f32 %v134, %v149
  %v162 = vmul.f32 %v130, %v150
  %v163 = vmul.f32 %v126, %v151
  %v164 = vmul.f32 %v139, %v148
  %v165 = vmul.f32 %v135, %v149
  %v166 = vmul.f32 %v131, %v150
  %v167 = vmul.f32 %v127, %v151
  %168 = vrot.lane.b32.xlu0 %v75, 32
  %v169 = vpop.permute.xlu0 %168
  %170 = vrot.lane.b32.xlu0 %v79, 32
  %v171 = vpop.permute.xlu0 %170
  %172 = vrot.lane.b32.xlu0 %v83, 32
  %v173 = vpop.permute.xlu0 %172
  %174 = vrot.lane.b32.xlu0 %v87, 32
  %v175 = vpop.permute.xlu0 %174
  %176 = vrot.lane.b32.xlu0 %v76, 32
  %v177 = vpop.permute.xlu0 %176
  %178 = vrot.lane.b32.xlu0 %v80, 32
  %v179 = vpop.permute.xlu0 %178
  %180 = vrot.lane.b32.xlu0 %v84, 32
  %v181 = vpop.permute.xlu0 %180
  %182 = vrot.lane.b32.xlu0 %v88, 32
  %v183 = vpop.permute.xlu0 %182
  %184 = vrot.lane.b32.xlu0 %v77, 32
  %v185 = vpop.permute.xlu0 %184
  %186 = vrot.lane.b32.xlu0 %v81, 32
  %v187 = vpop.permute.xlu0 %186
  %188 = vrot.lane.b32.xlu0 %v85, 32
  %v189 = vpop.permute.xlu0 %188
  %190 = vrot.lane.b32.xlu0 %v89, 32
  %v191 = vpop.permute.xlu0 %190
  %192 = vrot.lane.b32.xlu0 %v78, 32
  %v193 = vpop.permute.xlu0 %192
  %194 = vrot.lane.b32.xlu0 %v82, 32
  %v195 = vpop.permute.xlu0 %194
  %196 = vrot.lane.b32.xlu0 %v86, 32
  %v197 = vpop.permute.xlu0 %196
  %198 = vrot.lane.b32.xlu0 %v90, 32
  %v199 = vpop.permute.xlu0 %198
  %vm200 = vcmp.lt.s32.totalorder %v55, 32
  %v201 = vsel %vm200, %v185, %v193
  %v202 = vsel %vm200, %v187, %v195
  %v203 = vsel %vm200, %v189, %v197
  %v204 = vsel %vm200, %v191, %v199
  %v205 = vsel %vm200, %v177, %v185
  %v206 = vsel %vm200, %v179, %v187
  %v207 = vsel %vm200, %v181, %v189
  %v208 = vsel %vm200, %v183, %v191
  %v209 = vsel %vm200, %v169, %v177
  %v210 = vsel %vm200, %v171, %v179
  %v211 = vsel %vm200, %v173, %v181
  %v212 = vsel %vm200, %v175, %v183
  %v213 = vsel %vm200, %v193, %v169
  %v214 = vsel %vm200, %v195, %v171
  %v215 = vsel %vm200, %v197, %v173
  %v216 = vsel %vm200, %v199, %v175
  %vm217 = vcmp.ge.s32.totalorder %v55, 32
  %vm218 = vcmp.ge.s32.totalorder %v56, 32
  %vm219 = vcmp.ge.s32.totalorder %v57, 32
  %vm220 = vcmp.ge.s32.totalorder %v58, 32
  %v221 = vsel %vm217, 1, 0
  %v222 = vsel %vm218, 1, 0
  %v223 = vsel %vm219, 1, 0
  %v224 = vsel %vm220, 1, 0
  %v225 = vcvt.s32.f32 %v221
  %v226 = vcvt.s32.f32 %v222
  %v227 = vcvt.s32.f32 %v223
  %v228 = vcvt.s32.f32 %v224
  %v229 = vmul.f32 %v213, %v225
  %v230 = vmul.f32 %v209, %v226
  %v231 = vmul.f32 %v205, %v227
  %v232 = vmul.f32 %v201, %v228
  %v233 = vmul.f32 %v214, %v225
  %v234 = vmul.f32 %v210, %v226
  %v235 = vmul.f32 %v206, %v227
  %v236 = vmul.f32 %v202, %v228
  %v237 = vmul.f32 %v215, %v225
  %v238 = vmul.f32 %v211, %v226
  %v239 = vmul.f32 %v207, %v227
  %v240 = vmul.f32 %v203, %v228
  %v241 = vmul.f32 %v216, %v225
  %v242 = vmul.f32 %v212, %v226
  %v243 = vmul.f32 %v208, %v227
  %v244 = vmul.f32 %v204, %v228
  %245 = vrot.lane.b32.xlu0 %v75, 96
  %v246 = vpop.permute.xlu0 %245
  %247 = vrot.lane.b32.xlu0 %v79, 96
  %v248 = vpop.permute.xlu0 %247
  %249 = vrot.lane.b32.xlu0 %v83, 96
  %v250 = vpop.permute.xlu0 %249
  %251 = vrot.lane.b32.xlu0 %v87, 96
  %v252 = vpop.permute.xlu0 %251
  %253 = vrot.lane.b32.xlu0 %v76, 96
  %v254 = vpop.permute.xlu0 %253
  %255 = vrot.lane.b32.xlu0 %v80, 96
  %v256 = vpop.permute.xlu0 %255
  %257 = vrot.lane.b32.xlu0 %v84, 96
  %v258 = vpop.permute.xlu0 %257
  %259 = vrot.lane.b32.xlu0 %v88, 96
  %v260 = vpop.permute.xlu0 %259
  %261 = vrot.lane.b32.xlu0 %v77, 96
  %v262 = vpop.permute.xlu0 %261
  %263 = vrot.lane.b32.xlu0 %v81, 96
  %v264 = vpop.permute.xlu0 %263
  %265 = vrot.lane.b32.xlu0 %v85, 96
  %v266 = vpop.permute.xlu0 %265
  %267 = vrot.lane.b32.xlu0 %v89, 96
  %v268 = vpop.permute.xlu0 %267
  %269 = vrot.lane.b32.xlu0 %v78, 96
  %v270 = vpop.permute.xlu0 %269
  %271 = vrot.lane.b32.xlu0 %v82, 96
  %v272 = vpop.permute.xlu0 %271
  %273 = vrot.lane.b32.xlu0 %v86, 96
  %v274 = vpop.permute.xlu0 %273
  %275 = vrot.lane.b32.xlu0 %v90, 96
  %v276 = vpop.permute.xlu0 %275
  %vm277 = vcmp.lt.s32.totalorder %v55, 96
  %v278 = vsel %vm277, %v262, %v270
  %v279 = vsel %vm277, %v264, %v272
  %v280 = vsel %vm277, %v266, %v274
  %v281 = vsel %vm277, %v268, %v276
  %v282 = vsel %vm277, %v254, %v262
  %v283 = vsel %vm277, %v256, %v264
  %v284 = vsel %vm277, %v258, %v266
  %v285 = vsel %vm277, %v260, %v268
  %v286 = vsel %vm277, %v246, %v254
  %v287 = vsel %vm277, %v248, %v256
  %v288 = vsel %vm277, %v250, %v258
  %v289 = vsel %vm277, %v252, %v260
  %v290 = vsel %vm277, %v270, %v246
  %v291 = vsel %vm277, %v272, %v248
  %v292 = vsel %vm277, %v274, %v250
  %v293 = vsel %vm277, %v276, %v252
  %vm294 = vcmp.lt.s32.totalorder %v55, 480
  %vm295 = vcmp.lt.s32.totalorder %v56, 480
  %vm296 = vcmp.lt.s32.totalorder %v57, 480
  %vm297 = vcmp.lt.s32.totalorder %v58, 480
  %v298 = vsel %vm294, 1, 0
  %v299 = vsel %vm295, 1, 0
  %v300 = vsel %vm296, 1, 0
  %v301 = vsel %vm297, 1, 0
  %v302 = vcvt.s32.f32 %v298
  %v303 = vcvt.s32.f32 %v299
  %v304 = vcvt.s32.f32 %v300
  %v305 = vcvt.s32.f32 %v301
  %v306 = vmul.f32 %v286, %v302
  %v307 = vmul.f32 %v282, %v303
  %v308 = vmul.f32 %v278, %v304
  %v309 = vmul.f32 %v290, %v305
  %v310 = vmul.f32 %v287, %v302
  %v311 = vmul.f32 %v283, %v303
  %v312 = vmul.f32 %v279, %v304
  %v313 = vmul.f32 %v291, %v305
  %v314 = vmul.f32 %v288, %v302
  %v315 = vmul.f32 %v284, %v303
  %v316 = vmul.f32 %v280, %v304
  %v317 = vmul.f32 %v292, %v305
  %v318 = vmul.f32 %v289, %v302
  %v319 = vmul.f32 %v285, %v303
  %v320 = vmul.f32 %v281, %v304
  %v321 = vmul.f32 %v293, %v305
  %vm322 = vcmp.lt.s32.totalorder %v55, 448
  %vm323 = vcmp.lt.s32.totalorder %v56, 448
  %vm324 = vcmp.lt.s32.totalorder %v57, 448
  %vm325 = vcmp.lt.s32.totalorder %v58, 448
  %v326 = vsel %vm322, 1, 0
  %v327 = vsel %vm323, 1, 0
  %v328 = vsel %vm324, 1, 0
  %v329 = vsel %vm325, 1, 0
  %v330 = vcvt.s32.f32 %v326
  %v331 = vcvt.s32.f32 %v327
  %v332 = vcvt.s32.f32 %v328
  %v333 = vcvt.s32.f32 %v329
  %v334 = vmul.f32 %v132, %v330
  %v335 = vmul.f32 %v128, %v331
  %v336 = vmul.f32 %v124, %v332
  %v337 = vmul.f32 %v136, %v333
  %v338 = vmul.f32 %v133, %v330
  %v339 = vmul.f32 %v129, %v331
  %v340 = vmul.f32 %v125, %v332
  %v341 = vmul.f32 %v137, %v333
  %v342 = vmul.f32 %v134, %v330
  %v343 = vmul.f32 %v130, %v331
  %v344 = vmul.f32 %v126, %v332
  %v345 = vmul.f32 %v138, %v333
  %v346 = vmul.f32 %v135, %v330
  %v347 = vmul.f32 %v131, %v331
  %v348 = vmul.f32 %v127, %v332
  %v349 = vmul.f32 %v139, %v333
  %v350 = vld [vmem:[%s1] ss:$8 sm:$0xf]
  %v352 = vlaneseq
  %v353 = vshrl.u32 %v352, 7
  %v354 = vsub.s32 0, %v353
  %v355 = vrot.slane %v350, %v354
  %v356 = vlaneseq
  %v357 = vshrl.u32 %v356, 7
  %v358 = vsub.s32 1, %v357
  %v359 = vrot.slane %v350, %v358
  %v360 = vlaneseq
  %v361 = vshrl.u32 %v360, 7
  %v362 = vsub.s32 2, %v361
  %v363 = vrot.slane %v350, %v362
  %v364 = vlaneseq
  %v365 = vshrl.u32 %v364, 7
  %v366 = vsub.s32 3, %v365
  %v367 = vrot.slane %v350, %v366
  %v372 = vmul.f32 %v152, %v355
  %v373 = vmul.f32 %v153, %v359
  %v374 = vmul.f32 %v154, %v363
  %v375 = vmul.f32 %v155, %v367
  %v376 = vmul.f32 %v156, %v355
  %v377 = vmul.f32 %v157, %v359
  %v378 = vmul.f32 %v158, %v363
  %v379 = vmul.f32 %v159, %v367
  %v380 = vmul.f32 %v160, %v355
  %v381 = vmul.f32 %v161, %v359
  %v382 = vmul.f32 %v162, %v363
  %v383 = vmul.f32 %v163, %v367
  %v384 = vmul.f32 %v164, %v355
  %v385 = vmul.f32 %v165, %v359
  %v386 = vmul.f32 %v166, %v363
  %v387 = vmul.f32 %v167, %v367
  %s388 = scalar_lea.vmem %s1, 1
  %v389 = vld [vmem:[%s388] ss:$8 sm:$0xf]
  %v391 = vlaneseq
  %v392 = vshrl.u32 %v391, 7
  %v393 = vsub.s32 0, %v392
  %v394 = vrot.slane %v389, %v393
  %v395 = vlaneseq
  %v396 = vshrl.u32 %v395, 7
  %v397 = vsub.s32 1, %v396
  %v398 = vrot.slane %v389, %v397
  %v399 = vlaneseq
  %v400 = vshrl.u32 %v399, 7
  %v401 = vsub.s32 2, %v400
  %v402 = vrot.slane %v389, %v401
  %v403 = vlaneseq
  %v404 = vshrl.u32 %v403, 7
  %v405 = vsub.s32 3, %v404
  %v406 = vrot.slane %v389, %v405
  %v411 = vmul.f32 %v229, %v394
  %v412 = vmul.f32 %v230, %v398
  %v413 = vmul.f32 %v231, %v402
  %v414 = vmul.f32 %v232, %v406
  %v415 = vmul.f32 %v233, %v394
  %v416 = vmul.f32 %v234, %v398
  %v417 = vmul.f32 %v235, %v402
  %v418 = vmul.f32 %v236, %v406
  %v419 = vmul.f32 %v237, %v394
  %v420 = vmul.f32 %v238, %v398
  %v421 = vmul.f32 %v239, %v402
  %v422 = vmul.f32 %v240, %v406
  %v423 = vmul.f32 %v241, %v394
  %v424 = vmul.f32 %v242, %v398
  %v425 = vmul.f32 %v243, %v402
  %v426 = vmul.f32 %v244, %v406
  %v427 = vadd.f32 %v372, %v411
  %v428 = vadd.f32 %v373, %v412
  %v429 = vadd.f32 %v374, %v413
  %v430 = vadd.f32 %v375, %v414
  %v431 = vadd.f32 %v376, %v415
  %v432 = vadd.f32 %v377, %v416
  %v433 = vadd.f32 %v378, %v417
  %v434 = vadd.f32 %v379, %v418
  %v435 = vadd.f32 %v380, %v419
  %v436 = vadd.f32 %v381, %v420
  %v437 = vadd.f32 %v382, %v421
  %v438 = vadd.f32 %v383, %v422
  %v439 = vadd.f32 %v384, %v423
  %v440 = vadd.f32 %v385, %v424
  %v441 = vadd.f32 %v386, %v425
  %v442 = vadd.f32 %v387, %v426
  %s443 = scalar_lea.vmem %s1, 2
  %v444 = vld [vmem:[%s443] ss:$8 sm:$0xf]
  %v446 = vlaneseq
  %v447 = vshrl.u32 %v446, 7
  %v448 = vsub.s32 0, %v447
  %v449 = vrot.slane %v444, %v448
  %v450 = vlaneseq
  %v451 = vshrl.u32 %v450, 7
  %v452 = vsub.s32 1, %v451
  %v453 = vrot.slane %v444, %v452
  %v454 = vlaneseq
  %v455 = vshrl.u32 %v454, 7
  %v456 = vsub.s32 2, %v455
  %v457 = vrot.slane %v444, %v456
  %v458 = vlaneseq
  %v459 = vshrl.u32 %v458, 7
  %v460 = vsub.s32 3, %v459
  %v461 = vrot.slane %v444, %v460
  %v466 = vmul.f32 %v75, %v449
  %v467 = vmul.f32 %v76, %v453
  %v468 = vmul.f32 %v77, %v457
  %v469 = vmul.f32 %v78, %v461
  %v470 = vmul.f32 %v79, %v449
  %v471 = vmul.f32 %v80, %v453
  %v472 = vmul.f32 %v81, %v457
  %v473 = vmul.f32 %v82, %v461
  %v474 = vmul.f32 %v83, %v449
  %v475 = vmul.f32 %v84, %v453
  %v476 = vmul.f32 %v85, %v457
  %v477 = vmul.f32 %v86, %v461
  %v478 = vmul.f32 %v87, %v449
  %v479 = vmul.f32 %v88, %v453
  %v480 = vmul.f32 %v89, %v457
  %v481 = vmul.f32 %v90, %v461
  %v482 = vadd.f32 %v427, %v466
  %v483 = vadd.f32 %v428, %v467
  %v484 = vadd.f32 %v429, %v468
  %v485 = vadd.f32 %v430, %v469
  %v486 = vadd.f32 %v431, %v470
  %v487 = vadd.f32 %v432, %v471
  %v488 = vadd.f32 %v433, %v472
  %v489 = vadd.f32 %v434, %v473
  %v490 = vadd.f32 %v435, %v474
  %v491 = vadd.f32 %v436, %v475
  %v492 = vadd.f32 %v437, %v476
  %v493 = vadd.f32 %v438, %v477
  %v494 = vadd.f32 %v439, %v478
  %v495 = vadd.f32 %v440, %v479
  %v496 = vadd.f32 %v441, %v480
  %v497 = vadd.f32 %v442, %v481
  %s498 = scalar_lea.vmem %s1, 3
  %v499 = vld [vmem:[%s498] ss:$8 sm:$0xf]
  %v501 = vlaneseq
  %v502 = vshrl.u32 %v501, 7
  %v503 = vsub.s32 0, %v502
  %v504 = vrot.slane %v499, %v503
  %v505 = vlaneseq
  %v506 = vshrl.u32 %v505, 7
  %v507 = vsub.s32 1, %v506
  %v508 = vrot.slane %v499, %v507
  %v509 = vlaneseq
  %v510 = vshrl.u32 %v509, 7
  %v511 = vsub.s32 2, %v510
  %v512 = vrot.slane %v499, %v511
  %v513 = vlaneseq
  %v514 = vshrl.u32 %v513, 7
  %v515 = vsub.s32 3, %v514
  %v516 = vrot.slane %v499, %v515
  %v521 = vmul.f32 %v306, %v504
  %v522 = vmul.f32 %v307, %v508
  %v523 = vmul.f32 %v308, %v512
  %v524 = vmul.f32 %v309, %v516
  %v525 = vmul.f32 %v310, %v504
  %v526 = vmul.f32 %v311, %v508
  %v527 = vmul.f32 %v312, %v512
  %v528 = vmul.f32 %v313, %v516
  %v529 = vmul.f32 %v314, %v504
  %v530 = vmul.f32 %v315, %v508
  %v531 = vmul.f32 %v316, %v512
  %v532 = vmul.f32 %v317, %v516
  %v533 = vmul.f32 %v318, %v504
  %v534 = vmul.f32 %v319, %v508
  %v535 = vmul.f32 %v320, %v512
  %v536 = vmul.f32 %v321, %v516
  %v537 = vadd.f32 %v482, %v521
  %v538 = vadd.f32 %v483, %v522
  %v539 = vadd.f32 %v484, %v523
  %v540 = vadd.f32 %v485, %v524
  %v541 = vadd.f32 %v486, %v525
  %v542 = vadd.f32 %v487, %v526
  %v543 = vadd.f32 %v488, %v527
  %v544 = vadd.f32 %v489, %v528
  %v545 = vadd.f32 %v490, %v529
  %v546 = vadd.f32 %v491, %v530
  %v547 = vadd.f32 %v492, %v531
  %v548 = vadd.f32 %v493, %v532
  %v549 = vadd.f32 %v494, %v533
  %v550 = vadd.f32 %v495, %v534
  %v551 = vadd.f32 %v496, %v535
  %v552 = vadd.f32 %v497, %v536
  %s553 = scalar_lea.vmem %s1, 4
  %v554 = vld [vmem:[%s553] ss:$8 sm:$0xf]
  %v556 = vlaneseq
  %v557 = vshrl.u32 %v556, 7
  %v558 = vsub.s32 0, %v557
  %v559 = vrot.slane %v554, %v558
  %v560 = vlaneseq
  %v561 = vshrl.u32 %v560, 7
  %v562 = vsub.s32 1, %v561
  %v563 = vrot.slane %v554, %v562
  %v564 = vlaneseq
  %v565 = vshrl.u32 %v564, 7
  %v566 = vsub.s32 2, %v565
  %v567 = vrot.slane %v554, %v566
  %v568 = vlaneseq
  %v569 = vshrl.u32 %v568, 7
  %v570 = vsub.s32 3, %v569
  %v571 = vrot.slane %v554, %v570
  %v576 = vmul.f32 %v334, %v559
  %v577 = vmul.f32 %v335, %v563
  %v578 = vmul.f32 %v336, %v567
  %v579 = vmul.f32 %v337, %v571
  %v580 = vmul.f32 %v338, %v559
  %v581 = vmul.f32 %v339, %v563
  %v582 = vmul.f32 %v340, %v567
  %v583 = vmul.f32 %v341, %v571
  %v584 = vmul.f32 %v342, %v559
  %v585 = vmul.f32 %v343, %v563
  %v586 = vmul.f32 %v344, %v567
  %v587 = vmul.f32 %v345, %v571
  %v588 = vmul.f32 %v346, %v559
  %v589 = vmul.f32 %v347, %v563
  %v590 = vmul.f32 %v348, %v567
  %v591 = vmul.f32 %v349, %v571
  %v592 = vadd.f32 %v537, %v576
  %v593 = vadd.f32 %v538, %v577
  %v594 = vadd.f32 %v539, %v578
  %v595 = vadd.f32 %v540, %v579
  %v596 = vadd.f32 %v541, %v580
  %v597 = vadd.f32 %v542, %v581
  %v598 = vadd.f32 %v543, %v582
  %v599 = vadd.f32 %v544, %v583
  %v600 = vadd.f32 %v545, %v584
  %v601 = vadd.f32 %v546, %v585
  %v602 = vadd.f32 %v547, %v586
  %v603 = vadd.f32 %v548, %v587
  %v604 = vadd.f32 %v549, %v588
  %v605 = vadd.f32 %v550, %v589
  %v606 = vadd.f32 %v551, %v590
  %v607 = vadd.f32 %v552, %v591
  %v608 = vrot.slane %v592, 6
  %v609 = vrot.slane %v593, 6
  %v610 = vrot.slane %v594, 6
  %v611 = vrot.slane %v595, 6
  %v612 = vrot.slane %v596, 6
  %v613 = vrot.slane %v597, 6
  %v614 = vrot.slane %v598, 6
  %v615 = vrot.slane %v599, 6
  %v616 = vrot.slane %v600, 6
  %v617 = vrot.slane %v601, 6
  %v618 = vrot.slane %v602, 6
  %v619 = vrot.slane %v603, 6
  %v620 = vrot.slane %v604, 6
  %v621 = vrot.slane %v605, 6
  %v622 = vrot.slane %v606, 6
  %v623 = vrot.slane %v607, 6
  %vm624 = vcmp.lt.s32.totalorder %v60, 2
  %v625 = vsel %vm624, %v616, %v620
  %v626 = vsel %vm624, %v617, %v621
  %v627 = vsel %vm624, %v618, %v622
  %v628 = vsel %vm624, %v619, %v623
  %v629 = vsel %vm624, %v612, %v616
  %v630 = vsel %vm624, %v613, %v617
  %v631 = vsel %vm624, %v614, %v618
  %v632 = vsel %vm624, %v615, %v619
  %v633 = vsel %vm624, %v608, %v612
  %v634 = vsel %vm624, %v609, %v613
  %v635 = vsel %vm624, %v610, %v614
  %v636 = vsel %vm624, %v611, %v615
  %v637 = vsel %vm624, %v620, %v608
  %v638 = vsel %vm624, %v621, %v609
  %v639 = vsel %vm624, %v622, %v610
  %v640 = vsel %vm624, %v623, %v611
  %vm641 = vcmp.ge.s32.totalorder %v71, 2
  %vm642 = vcmp.ge.s32.totalorder %v72, 2
  %vm643 = vcmp.ge.s32.totalorder %v73, 2
  %vm644 = vcmp.ge.s32.totalorder %v74, 2
  %v645 = vsel %vm641, 1, 0
  %v646 = vsel %vm642, 1, 0
  %v647 = vsel %vm643, 1, 0
  %v648 = vsel %vm644, 1, 0
  %v649 = vcvt.s32.f32 %v645
  %v650 = vcvt.s32.f32 %v646
  %v651 = vcvt.s32.f32 %v647
  %v652 = vcvt.s32.f32 %v648
  %v653 = vmul.f32 %v637, %v649
  %v654 = vmul.f32 %v638, %v649
  %v655 = vmul.f32 %v639, %v649
  %v656 = vmul.f32 %v640, %v649
  %v657 = vmul.f32 %v633, %v650
  %v658 = vmul.f32 %v634, %v650
  %v659 = vmul.f32 %v635, %v650
  %v660 = vmul.f32 %v636, %v650
  %v661 = vmul.f32 %v629, %v651
  %v662 = vmul.f32 %v630, %v651
  %v663 = vmul.f32 %v631, %v651
  %v664 = vmul.f32 %v632, %v651
  %v665 = vmul.f32 %v625, %v652
  %v666 = vmul.f32 %v626, %v652
  %v667 = vmul.f32 %v627, %v652
  %v668 = vmul.f32 %v628, %v652
  %s669 = scalar_lea.vmem %s1, 5
  %v670 = vld [vmem:[%s669] ss:$8 sm:$0xf]
  %v672 = vlaneseq
  %v673 = vshrl.u32 %v672, 7
  %v674 = vsub.s32 0, %v673
  %v675 = vrot.slane %v670, %v674
  %v676 = vlaneseq
  %v677 = vshrl.u32 %v676, 7
  %v678 = vsub.s32 1, %v677
  %v679 = vrot.slane %v670, %v678
  %v680 = vlaneseq
  %v681 = vshrl.u32 %v680, 7
  %v682 = vsub.s32 2, %v681
  %v683 = vrot.slane %v670, %v682
  %v684 = vlaneseq
  %v685 = vshrl.u32 %v684, 7
  %v686 = vsub.s32 3, %v685
  %v687 = vrot.slane %v670, %v686
  %v692 = vmul.f32 %v152, %v675
  %v693 = vmul.f32 %v153, %v679
  %v694 = vmul.f32 %v154, %v683
  %v695 = vmul.f32 %v155, %v687
  %v696 = vmul.f32 %v156, %v675
  %v697 = vmul.f32 %v157, %v679
  %v698 = vmul.f32 %v158, %v683
  %v699 = vmul.f32 %v159, %v687
  %v700 = vmul.f32 %v160, %v675
  %v701 = vmul.f32 %v161, %v679
  %v702 = vmul.f32 %v162, %v683
  %v703 = vmul.f32 %v163, %v687
  %v704 = vmul.f32 %v164, %v675
  %v705 = vmul.f32 %v165, %v679
  %v706 = vmul.f32 %v166, %v683
  %v707 = vmul.f32 %v167, %v687
  %s708 = scalar_lea.vmem %s1, 6
  %v709 = vld [vmem:[%s708] ss:$8 sm:$0xf]
  %v711 = vlaneseq
  %v712 = vshrl.u32 %v711, 7
  %v713 = vsub.s32 0, %v712
  %v714 = vrot.slane %v709, %v713
  %v715 = vlaneseq
  %v716 = vshrl.u32 %v715, 7
  %v717 = vsub.s32 1, %v716
  %v718 = vrot.slane %v709, %v717
  %v719 = vlaneseq
  %v720 = vshrl.u32 %v719, 7
  %v721 = vsub.s32 2, %v720
  %v722 = vrot.slane %v709, %v721
  %v723 = vlaneseq
  %v724 = vshrl.u32 %v723, 7
  %v725 = vsub.s32 3, %v724
  %v726 = vrot.slane %v709, %v725
  %v731 = vmul.f32 %v229, %v714
  %v732 = vmul.f32 %v230, %v718
  %v733 = vmul.f32 %v231, %v722
  %v734 = vmul.f32 %v232, %v726
  %v735 = vmul.f32 %v233, %v714
  %v736 = vmul.f32 %v234, %v718
  %v737 = vmul.f32 %v235, %v722
  %v738 = vmul.f32 %v236, %v726
  %v739 = vmul.f32 %v237, %v714
  %v740 = vmul.f32 %v238, %v718
  %v741 = vmul.f32 %v239, %v722
  %v742 = vmul.f32 %v240, %v726
  %v743 = vmul.f32 %v241, %v714
  %v744 = vmul.f32 %v242, %v718
  %v745 = vmul.f32 %v243, %v722
  %v746 = vmul.f32 %v244, %v726
  %v747 = vadd.f32 %v692, %v731
  %v748 = vadd.f32 %v693, %v732
  %v749 = vadd.f32 %v694, %v733
  %v750 = vadd.f32 %v695, %v734
  %v751 = vadd.f32 %v696, %v735
  %v752 = vadd.f32 %v697, %v736
  %v753 = vadd.f32 %v698, %v737
  %v754 = vadd.f32 %v699, %v738
  %v755 = vadd.f32 %v700, %v739
  %v756 = vadd.f32 %v701, %v740
  %v757 = vadd.f32 %v702, %v741
  %v758 = vadd.f32 %v703, %v742
  %v759 = vadd.f32 %v704, %v743
  %v760 = vadd.f32 %v705, %v744
  %v761 = vadd.f32 %v706, %v745
  %v762 = vadd.f32 %v707, %v746
  %s763 = scalar_lea.vmem %s1, 7
  %v764 = vld [vmem:[%s763] ss:$8 sm:$0xf]
  %v766 = vlaneseq
  %v767 = vshrl.u32 %v766, 7
  %v768 = vsub.s32 0, %v767
  %v769 = vrot.slane %v764, %v768
  %v770 = vlaneseq
  %v771 = vshrl.u32 %v770, 7
  %v772 = vsub.s32 1, %v771
  %v773 = vrot.slane %v764, %v772
  %v774 = vlaneseq
  %v775 = vshrl.u32 %v774, 7
  %v776 = vsub.s32 2, %v775
  %v777 = vrot.slane %v764, %v776
  %v778 = vlaneseq
  %v779 = vshrl.u32 %v778, 7
  %v780 = vsub.s32 3, %v779
  %v781 = vrot.slane %v764, %v780
  %v786 = vmul.f32 %v75, %v769
  %v787 = vmul.f32 %v76, %v773
  %v788 = vmul.f32 %v77, %v777
  %v789 = vmul.f32 %v78, %v781
  %v790 = vmul.f32 %v79, %v769
  %v791 = vmul.f32 %v80, %v773
  %v792 = vmul.f32 %v81, %v777
  %v793 = vmul.f32 %v82, %v781
  %v794 = vmul.f32 %v83, %v769
  %v795 = vmul.f32 %v84, %v773
  %v796 = vmul.f32 %v85, %v777
  %v797 = vmul.f32 %v86, %v781
  %v798 = vmul.f32 %v87, %v769
  %v799 = vmul.f32 %v88, %v773
  %v800 = vmul.f32 %v89, %v777
  %v801 = vmul.f32 %v90, %v781
  %v802 = vadd.f32 %v747, %v786
  %v803 = vadd.f32 %v748, %v787
  %v804 = vadd.f32 %v749, %v788
  %v805 = vadd.f32 %v750, %v789
  %v806 = vadd.f32 %v751, %v790
  %v807 = vadd.f32 %v752, %v791
  %v808 = vadd.f32 %v753, %v792
  %v809 = vadd.f32 %v754, %v793
  %v810 = vadd.f32 %v755, %v794
  %v811 = vadd.f32 %v756, %v795
  %v812 = vadd.f32 %v757, %v796
  %v813 = vadd.f32 %v758, %v797
  %v814 = vadd.f32 %v759, %v798
  %v815 = vadd.f32 %v760, %v799
  %v816 = vadd.f32 %v761, %v800
  %v817 = vadd.f32 %v762, %v801
  %s818 = scalar_lea.vmem %s1, 32
  %v819 = vld [vmem:[%s818] ss:$8 sm:$0xf]
  %v821 = vlaneseq
  %v822 = vshrl.u32 %v821, 7
  %v823 = vsub.s32 0, %v822
  %v824 = vrot.slane %v819, %v823
  %v825 = vlaneseq
  %v826 = vshrl.u32 %v825, 7
  %v827 = vsub.s32 1, %v826
  %v828 = vrot.slane %v819, %v827
  %v829 = vlaneseq
  %v830 = vshrl.u32 %v829, 7
  %v831 = vsub.s32 2, %v830
  %v832 = vrot.slane %v819, %v831
  %v833 = vlaneseq
  %v834 = vshrl.u32 %v833, 7
  %v835 = vsub.s32 3, %v834
  %v836 = vrot.slane %v819, %v835
  %v841 = vmul.f32 %v306, %v824
  %v842 = vmul.f32 %v307, %v828
  %v843 = vmul.f32 %v308, %v832
  %v844 = vmul.f32 %v309, %v836
  %v845 = vmul.f32 %v310, %v824
  %v846 = vmul.f32 %v311, %v828
  %v847 = vmul.f32 %v312, %v832
  %v848 = vmul.f32 %v313, %v836
  %v849 = vmul.f32 %v314, %v824
  %v850 = vmul.f32 %v315, %v828
  %v851 = vmul.f32 %v316, %v832
  %v852 = vmul.f32 %v317, %v836
  %v853 = vmul.f32 %v318, %v824
  %v854 = vmul.f32 %v319, %v828
  %v855 = vmul.f32 %v320, %v832
  %v856 = vmul.f32 %v321, %v836
  %v857 = vadd.f32 %v802, %v841
  %v858 = vadd.f32 %v803, %v842
  %v859 = vadd.f32 %v804, %v843
  %v860 = vadd.f32 %v805, %v844
  %v861 = vadd.f32 %v806, %v845
  %v862 = vadd.f32 %v807, %v846
  %v863 = vadd.f32 %v808, %v847
  %v864 = vadd.f32 %v809, %v848
  %v865 = vadd.f32 %v810, %v849
  %v866 = vadd.f32 %v811, %v850
  %v867 = vadd.f32 %v812, %v851
  %v868 = vadd.f32 %v813, %v852
  %v869 = vadd.f32 %v814, %v853
  %v870 = vadd.f32 %v815, %v854
  %v871 = vadd.f32 %v816, %v855
  %v872 = vadd.f32 %v817, %v856
  %s873 = scalar_lea.vmem %s1, 33
  %v874 = vld [vmem:[%s873] ss:$8 sm:$0xf]
  %v876 = vlaneseq
  %v877 = vshrl.u32 %v876, 7
  %v878 = vsub.s32 0, %v877
  %v879 = vrot.slane %v874, %v878
  %v880 = vlaneseq
  %v881 = vshrl.u32 %v880, 7
  %v882 = vsub.s32 1, %v881
  %v883 = vrot.slane %v874, %v882
  %v884 = vlaneseq
  %v885 = vshrl.u32 %v884, 7
  %v886 = vsub.s32 2, %v885
  %v887 = vrot.slane %v874, %v886
  %v888 = vlaneseq
  %v889 = vshrl.u32 %v888, 7
  %v890 = vsub.s32 3, %v889
  %v891 = vrot.slane %v874, %v890
  %v896 = vmul.f32 %v334, %v879
  %v897 = vmul.f32 %v335, %v883
  %v898 = vmul.f32 %v336, %v887
  %v899 = vmul.f32 %v337, %v891
  %v900 = vmul.f32 %v338, %v879
  %v901 = vmul.f32 %v339, %v883
  %v902 = vmul.f32 %v340, %v887
  %v903 = vmul.f32 %v341, %v891
  %v904 = vmul.f32 %v342, %v879
  %v905 = vmul.f32 %v343, %v883
  %v906 = vmul.f32 %v344, %v887
  %v907 = vmul.f32 %v345, %v891
  %v908 = vmul.f32 %v346, %v879
  %v909 = vmul.f32 %v347, %v883
  %v910 = vmul.f32 %v348, %v887
  %v911 = vmul.f32 %v349, %v891
  %v912 = vadd.f32 %v857, %v896
  %v913 = vadd.f32 %v858, %v897
  %v914 = vadd.f32 %v859, %v898
  %v915 = vadd.f32 %v860, %v899
  %v916 = vadd.f32 %v861, %v900
  %v917 = vadd.f32 %v862, %v901
  %v918 = vadd.f32 %v863, %v902
  %v919 = vadd.f32 %v864, %v903
  %v920 = vadd.f32 %v865, %v904
  %v921 = vadd.f32 %v866, %v905
  %v922 = vadd.f32 %v867, %v906
  %v923 = vadd.f32 %v868, %v907
  %v924 = vadd.f32 %v869, %v908
  %v925 = vadd.f32 %v870, %v909
  %v926 = vadd.f32 %v871, %v910
  %v927 = vadd.f32 %v872, %v911
  %v928 = vrot.slane %v912, 7
  %v929 = vrot.slane %v913, 7
  %v930 = vrot.slane %v914, 7
  %v931 = vrot.slane %v915, 7
  %v932 = vrot.slane %v916, 7
  %v933 = vrot.slane %v917, 7
  %v934 = vrot.slane %v918, 7
  %v935 = vrot.slane %v919, 7
  %v936 = vrot.slane %v920, 7
  %v937 = vrot.slane %v921, 7
  %v938 = vrot.slane %v922, 7
  %v939 = vrot.slane %v923, 7
  %v940 = vrot.slane %v924, 7
  %v941 = vrot.slane %v925, 7
  %v942 = vrot.slane %v926, 7
  %v943 = vrot.slane %v927, 7
  %vm944 = vcmp.lt.s32.totalorder %v60, 1
  %v945 = vsel %vm944, %v936, %v940
  %v946 = vsel %vm944, %v937, %v941
  %v947 = vsel %vm944, %v938, %v942
  %v948 = vsel %vm944, %v939, %v943
  %v949 = vsel %vm944, %v932, %v936
  %v950 = vsel %vm944, %v933, %v937
  %v951 = vsel %vm944, %v934, %v938
  %v952 = vsel %vm944, %v935, %v939
  %v953 = vsel %vm944, %v928, %v932
  %v954 = vsel %vm944, %v929, %v933
  %v955 = vsel %vm944, %v930, %v934
  %v956 = vsel %vm944, %v931, %v935
  %v957 = vsel %vm944, %v940, %v928
  %v958 = vsel %vm944, %v941, %v929
  %v959 = vsel %vm944, %v942, %v930
  %v960 = vsel %vm944, %v943, %v931
  %vm961 = vcmp.ge.s32.totalorder %v71, 1
  %vm962 = vcmp.ge.s32.totalorder %v72, 1
  %vm963 = vcmp.ge.s32.totalorder %v73, 1
  %vm964 = vcmp.ge.s32.totalorder %v74, 1
  %v965 = vsel %vm961, 1, 0
  %v966 = vsel %vm962, 1, 0
  %v967 = vsel %vm963, 1, 0
  %v968 = vsel %vm964, 1, 0
  %v969 = vcvt.s32.f32 %v965
  %v970 = vcvt.s32.f32 %v966
  %v971 = vcvt.s32.f32 %v967
  %v972 = vcvt.s32.f32 %v968
  %v973 = vmul.f32 %v957, %v969
  %v974 = vmul.f32 %v958, %v969
  %v975 = vmul.f32 %v959, %v969
  %v976 = vmul.f32 %v960, %v969
  %v977 = vmul.f32 %v953, %v970
  %v978 = vmul.f32 %v954, %v970
  %v979 = vmul.f32 %v955, %v970
  %v980 = vmul.f32 %v956, %v970
  %v981 = vmul.f32 %v949, %v971
  %v982 = vmul.f32 %v950, %v971
  %v983 = vmul.f32 %v951, %v971
  %v984 = vmul.f32 %v952, %v971
  %v985 = vmul.f32 %v945, %v972
  %v986 = vmul.f32 %v946, %v972
  %v987 = vmul.f32 %v947, %v972
  %v988 = vmul.f32 %v948, %v972
  %v989 = vadd.f32 %v653, %v973
  %v990 = vadd.f32 %v654, %v974
  %v991 = vadd.f32 %v655, %v975
  %v992 = vadd.f32 %v656, %v976
  %v993 = vadd.f32 %v657, %v977
  %v994 = vadd.f32 %v658, %v978
  %v995 = vadd.f32 %v659, %v979
  %v996 = vadd.f32 %v660, %v980
  %v997 = vadd.f32 %v661, %v981
  %v998 = vadd.f32 %v662, %v982
  %v999 = vadd.f32 %v663, %v983
  %v1000 = vadd.f32 %v664, %v984
  %v1001 = vadd.f32 %v665, %v985
  %v1002 = vadd.f32 %v666, %v986
  %v1003 = vadd.f32 %v667, %v987
  %v1004 = vadd.f32 %v668, %v988
  %s1005 = scalar_lea.vmem %s1, 34
  %v1006 = vld [vmem:[%s1005] ss:$8 sm:$0xf]
  %v1008 = vlaneseq
  %v1009 = vshrl.u32 %v1008, 7
  %v1010 = vsub.s32 0, %v1009
  %v1011 = vrot.slane %v1006, %v1010
  %v1012 = vlaneseq
  %v1013 = vshrl.u32 %v1012, 7
  %v1014 = vsub.s32 1, %v1013
  %v1015 = vrot.slane %v1006, %v1014
  %v1016 = vlaneseq
  %v1017 = vshrl.u32 %v1016, 7
  %v1018 = vsub.s32 2, %v1017
  %v1019 = vrot.slane %v1006, %v1018
  %v1020 = vlaneseq
  %v1021 = vshrl.u32 %v1020, 7
  %v1022 = vsub.s32 3, %v1021
  %v1023 = vrot.slane %v1006, %v1022
  %v1028 = vmul.f32 %v152, %v1011
  %v1029 = vmul.f32 %v153, %v1015
  %v1030 = vmul.f32 %v154, %v1019
  %v1031 = vmul.f32 %v155, %v1023
  %v1032 = vmul.f32 %v156, %v1011
  %v1033 = vmul.f32 %v157, %v1015
  %v1034 = vmul.f32 %v158, %v1019
  %v1035 = vmul.f32 %v159, %v1023
  %v1036 = vmul.f32 %v160, %v1011
  %v1037 = vmul.f32 %v161, %v1015
  %v1038 = vmul.f32 %v162, %v1019
  %v1039 = vmul.f32 %v163, %v1023
  %v1040 = vmul.f32 %v164, %v1011
  %v1041 = vmul.f32 %v165, %v1015
  %v1042 = vmul.f32 %v166, %v1019
  %v1043 = vmul.f32 %v167, %v1023
  %s1044 = scalar_lea.vmem %s1, 35
  %v1045 = vld [vmem:[%s1044] ss:$8 sm:$0xf]
  %v1047 = vlaneseq
  %v1048 = vshrl.u32 %v1047, 7
  %v1049 = vsub.s32 0, %v1048
  %v1050 = vrot.slane %v1045, %v1049
  %v1051 = vlaneseq
  %v1052 = vshrl.u32 %v1051, 7
  %v1053 = vsub.s32 1, %v1052
  %v1054 = vrot.slane %v1045, %v1053
  %v1055 = vlaneseq
  %v1056 = vshrl.u32 %v1055, 7
  %v1057 = vsub.s32 2, %v1056
  %v1058 = vrot.slane %v1045, %v1057
  %v1059 = vlaneseq
  %v1060 = vshrl.u32 %v1059, 7
  %v1061 = vsub.s32 3, %v1060
  %v1062 = vrot.slane %v1045, %v1061
  %v1067 = vmul.f32 %v229, %v1050
  %v1068 = vmul.f32 %v230, %v1054
  %v1069 = vmul.f32 %v231, %v1058
  %v1070 = vmul.f32 %v232, %v1062
  %v1071 = vmul.f32 %v233, %v1050
  %v1072 = vmul.f32 %v234, %v1054
  %v1073 = vmul.f32 %v235, %v1058
  %v1074 = vmul.f32 %v236, %v1062
  %v1075 = vmul.f32 %v237, %v1050
  %v1076 = vmul.f32 %v238, %v1054
  %v1077 = vmul.f32 %v239, %v1058
  %v1078 = vmul.f32 %v240, %v1062
  %v1079 = vmul.f32 %v241, %v1050
  %v1080 = vmul.f32 %v242, %v1054
  %v1081 = vmul.f32 %v243, %v1058
  %v1082 = vmul.f32 %v244, %v1062
  %v1083 = vadd.f32 %v1028, %v1067
  %v1084 = vadd.f32 %v1029, %v1068
  %v1085 = vadd.f32 %v1030, %v1069
  %v1086 = vadd.f32 %v1031, %v1070
  %v1087 = vadd.f32 %v1032, %v1071
  %v1088 = vadd.f32 %v1033, %v1072
  %v1089 = vadd.f32 %v1034, %v1073
  %v1090 = vadd.f32 %v1035, %v1074
  %v1091 = vadd.f32 %v1036, %v1075
  %v1092 = vadd.f32 %v1037, %v1076
  %v1093 = vadd.f32 %v1038, %v1077
  %v1094 = vadd.f32 %v1039, %v1078
  %v1095 = vadd.f32 %v1040, %v1079
  %v1096 = vadd.f32 %v1041, %v1080
  %v1097 = vadd.f32 %v1042, %v1081
  %v1098 = vadd.f32 %v1043, %v1082
  %s1099 = scalar_lea.vmem %s1, 36
  %v1100 = vld [vmem:[%s1099] ss:$8 sm:$0xf]
  %v1102 = vlaneseq
  %v1103 = vshrl.u32 %v1102, 7
  %v1104 = vsub.s32 0, %v1103
  %v1105 = vrot.slane %v1100, %v1104
  %v1106 = vlaneseq
  %v1107 = vshrl.u32 %v1106, 7
  %v1108 = vsub.s32 1, %v1107
  %v1109 = vrot.slane %v1100, %v1108
  %v1110 = vlaneseq
  %v1111 = vshrl.u32 %v1110, 7
  %v1112 = vsub.s32 2, %v1111
  %v1113 = vrot.slane %v1100, %v1112
  %v1114 = vlaneseq
  %v1115 = vshrl.u32 %v1114, 7
  %v1116 = vsub.s32 3, %v1115
  %v1117 = vrot.slane %v1100, %v1116
  %v1122 = vmul.f32 %v75, %v1105
  %v1123 = vmul.f32 %v76, %v1109
  %v1124 = vmul.f32 %v77, %v1113
  %v1125 = vmul.f32 %v78, %v1117
  %v1126 = vmul.f32 %v79, %v1105
  %v1127 = vmul.f32 %v80, %v1109
  %v1128 = vmul.f32 %v81, %v1113
  %v1129 = vmul.f32 %v82, %v1117
  %v1130 = vmul.f32 %v83, %v1105
  %v1131 = vmul.f32 %v84, %v1109
  %v1132 = vmul.f32 %v85, %v1113
  %v1133 = vmul.f32 %v86, %v1117
  %v1134 = vmul.f32 %v87, %v1105
  %v1135 = vmul.f32 %v88, %v1109
  %v1136 = vmul.f32 %v89, %v1113
  %v1137 = vmul.f32 %v90, %v1117
  %v1138 = vadd.f32 %v1083, %v1122
  %v1139 = vadd.f32 %v1084, %v1123
  %v1140 = vadd.f32 %v1085, %v1124
  %v1141 = vadd.f32 %v1086, %v1125
  %v1142 = vadd.f32 %v1087, %v1126
  %v1143 = vadd.f32 %v1088, %v1127
  %v1144 = vadd.f32 %v1089, %v1128
  %v1145 = vadd.f32 %v1090, %v1129
  %v1146 = vadd.f32 %v1091, %v1130
  %v1147 = vadd.f32 %v1092, %v1131
  %v1148 = vadd.f32 %v1093, %v1132
  %v1149 = vadd.f32 %v1094, %v1133
  %v1150 = vadd.f32 %v1095, %v1134
  %v1151 = vadd.f32 %v1096, %v1135
  %v1152 = vadd.f32 %v1097, %v1136
  %v1153 = vadd.f32 %v1098, %v1137
  %s1154 = scalar_lea.vmem %s1, 37
  %v1155 = vld [vmem:[%s1154] ss:$8 sm:$0xf]
  %v1157 = vlaneseq
  %v1158 = vshrl.u32 %v1157, 7
  %v1159 = vsub.s32 0, %v1158
  %v1160 = vrot.slane %v1155, %v1159
  %v1161 = vlaneseq
  %v1162 = vshrl.u32 %v1161, 7
  %v1163 = vsub.s32 1, %v1162
  %v1164 = vrot.slane %v1155, %v1163
  %v1165 = vlaneseq
  %v1166 = vshrl.u32 %v1165, 7
  %v1167 = vsub.s32 2, %v1166
  %v1168 = vrot.slane %v1155, %v1167
  %v1169 = vlaneseq
  %v1170 = vshrl.u32 %v1169, 7
  %v1171 = vsub.s32 3, %v1170
  %v1172 = vrot.slane %v1155, %v1171
  %v1177 = vmul.f32 %v306, %v1160
  %v1178 = vmul.f32 %v307, %v1164
  %v1179 = vmul.f32 %v308, %v1168
  %v1180 = vmul.f32 %v309, %v1172
  %v1181 = vmul.f32 %v310, %v1160
  %v1182 = vmul.f32 %v311, %v1164
  %v1183 = vmul.f32 %v312, %v1168
  %v1184 = vmul.f32 %v313, %v1172
  %v1185 = vmul.f32 %v314, %v1160
  %v1186 = vmul.f32 %v315, %v1164
  %v1187 = vmul.f32 %v316, %v1168
  %v1188 = vmul.f32 %v317, %v1172
  %v1189 = vmul.f32 %v318, %v1160
  %v1190 = vmul.f32 %v319, %v1164
  %v1191 = vmul.f32 %v320, %v1168
  %v1192 = vmul.f32 %v321, %v1172
  %v1193 = vadd.f32 %v1138, %v1177
  %v1194 = vadd.f32 %v1139, %v1178
  %v1195 = vadd.f32 %v1140, %v1179
  %v1196 = vadd.f32 %v1141, %v1180
  %v1197 = vadd.f32 %v1142, %v1181
  %v1198 = vadd.f32 %v1143, %v1182
  %v1199 = vadd.f32 %v1144, %v1183
  %v1200 = vadd.f32 %v1145, %v1184
  %v1201 = vadd.f32 %v1146, %v1185
  %v1202 = vadd.f32 %v1147, %v1186
  %v1203 = vadd.f32 %v1148, %v1187
  %v1204 = vadd.f32 %v1149, %v1188
  %v1205 = vadd.f32 %v1150, %v1189
  %v1206 = vadd.f32 %v1151, %v1190
  %v1207 = vadd.f32 %v1152, %v1191
  %v1208 = vadd.f32 %v1153, %v1192
  %s1209 = scalar_lea.vmem %s1, 38
  %v1210 = vld [vmem:[%s1209] ss:$8 sm:$0xf]
  %v1212 = vlaneseq
  %v1213 = vshrl.u32 %v1212, 7
  %v1214 = vsub.s32 0, %v1213
  %v1215 = vrot.slane %v1210, %v1214
  %v1216 = vlaneseq
  %v1217 = vshrl.u32 %v1216, 7
  %v1218 = vsub.s32 1, %v1217
  %v1219 = vrot.slane %v1210, %v1218
  %v1220 = vlaneseq
  %v1221 = vshrl.u32 %v1220, 7
  %v1222 = vsub.s32 2, %v1221
  %v1223 = vrot.slane %v1210, %v1222
  %v1224 = vlaneseq
  %v1225 = vshrl.u32 %v1224, 7
  %v1226 = vsub.s32 3, %v1225
  %v1227 = vrot.slane %v1210, %v1226
  %v1232 = vmul.f32 %v334, %v1215
  %v1233 = vmul.f32 %v335, %v1219
  %v1234 = vmul.f32 %v336, %v1223
  %v1235 = vmul.f32 %v337, %v1227
  %v1236 = vmul.f32 %v338, %v1215
  %v1237 = vmul.f32 %v339, %v1219
  %v1238 = vmul.f32 %v340, %v1223
  %v1239 = vmul.f32 %v341, %v1227
  %v1240 = vmul.f32 %v342, %v1215
  %v1241 = vmul.f32 %v343, %v1219
  %v1242 = vmul.f32 %v344, %v1223
  %v1243 = vmul.f32 %v345, %v1227
  %v1244 = vmul.f32 %v346, %v1215
  %v1245 = vmul.f32 %v347, %v1219
  %v1246 = vmul.f32 %v348, %v1223
  %v1247 = vmul.f32 %v349, %v1227
  %v1248 = vadd.f32 %v1193, %v1232
  %v1249 = vadd.f32 %v1194, %v1233
  %v1250 = vadd.f32 %v1195, %v1234
  %v1251 = vadd.f32 %v1196, %v1235
  %v1252 = vadd.f32 %v1197, %v1236
  %v1253 = vadd.f32 %v1198, %v1237
  %v1254 = vadd.f32 %v1199, %v1238
  %v1255 = vadd.f32 %v1200, %v1239
  %v1256 = vadd.f32 %v1201, %v1240
  %v1257 = vadd.f32 %v1202, %v1241
  %v1258 = vadd.f32 %v1203, %v1242
  %v1259 = vadd.f32 %v1204, %v1243
  %v1260 = vadd.f32 %v1205, %v1244
  %v1261 = vadd.f32 %v1206, %v1245
  %v1262 = vadd.f32 %v1207, %v1246
  %v1263 = vadd.f32 %v1208, %v1247
  %v1264 = vadd.f32 %v989, %v1248
  %v1265 = vadd.f32 %v990, %v1249
  %v1266 = vadd.f32 %v991, %v1250
  %v1267 = vadd.f32 %v992, %v1251
  %v1268 = vadd.f32 %v993, %v1252
  %v1269 = vadd.f32 %v994, %v1253
  %v1270 = vadd.f32 %v995, %v1254
  %v1271 = vadd.f32 %v996, %v1255
  %v1272 = vadd.f32 %v997, %v1256
  %v1273 = vadd.f32 %v998, %v1257
  %v1274 = vadd.f32 %v999, %v1258
  %v1275 = vadd.f32 %v1000, %v1259
  %v1276 = vadd.f32 %v1001, %v1260
  %v1277 = vadd.f32 %v1002, %v1261
  %v1278 = vadd.f32 %v1003, %v1262
  %v1279 = vadd.f32 %v1004, %v1263
  %s1280 = scalar_lea.vmem %s1, 39
  %v1281 = vld [vmem:[%s1280] ss:$8 sm:$0xf]
  %v1283 = vlaneseq
  %v1284 = vshrl.u32 %v1283, 7
  %v1285 = vsub.s32 0, %v1284
  %v1286 = vrot.slane %v1281, %v1285
  %v1287 = vlaneseq
  %v1288 = vshrl.u32 %v1287, 7
  %v1289 = vsub.s32 1, %v1288
  %v1290 = vrot.slane %v1281, %v1289
  %v1291 = vlaneseq
  %v1292 = vshrl.u32 %v1291, 7
  %v1293 = vsub.s32 2, %v1292
  %v1294 = vrot.slane %v1281, %v1293
  %v1295 = vlaneseq
  %v1296 = vshrl.u32 %v1295, 7
  %v1297 = vsub.s32 3, %v1296
  %v1298 = vrot.slane %v1281, %v1297
  %v1303 = vmul.f32 %v152, %v1286
  %v1304 = vmul.f32 %v153, %v1290
  %v1305 = vmul.f32 %v154, %v1294
  %v1306 = vmul.f32 %v155, %v1298
  %v1307 = vmul.f32 %v156, %v1286
  %v1308 = vmul.f32 %v157, %v1290
  %v1309 = vmul.f32 %v158, %v1294
  %v1310 = vmul.f32 %v159, %v1298
  %v1311 = vmul.f32 %v160, %v1286
  %v1312 = vmul.f32 %v161, %v1290
  %v1313 = vmul.f32 %v162, %v1294
  %v1314 = vmul.f32 %v163, %v1298
  %v1315 = vmul.f32 %v164, %v1286
  %v1316 = vmul.f32 %v165, %v1290
  %v1317 = vmul.f32 %v166, %v1294
  %v1318 = vmul.f32 %v167, %v1298
  %s1319 = scalar_lea.vmem %s1, 64
  %v1320 = vld [vmem:[%s1319] ss:$8 sm:$0xf]
  %v1322 = vlaneseq
  %v1323 = vshrl.u32 %v1322, 7
  %v1324 = vsub.s32 0, %v1323
  %v1325 = vrot.slane %v1320, %v1324
  %v1326 = vlaneseq
  %v1327 = vshrl.u32 %v1326, 7
  %v1328 = vsub.s32 1, %v1327
  %v1329 = vrot.slane %v1320, %v1328
  %v1330 = vlaneseq
  %v1331 = vshrl.u32 %v1330, 7
  %v1332 = vsub.s32 2, %v1331
  %v1333 = vrot.slane %v1320, %v1332
  %v1334 = vlaneseq
  %v1335 = vshrl.u32 %v1334, 7
  %v1336 = vsub.s32 3, %v1335
  %v1337 = vrot.slane %v1320, %v1336
  %v1342 = vmul.f32 %v229, %v1325
  %v1343 = vmul.f32 %v230, %v1329
  %v1344 = vmul.f32 %v231, %v1333
  %v1345 = vmul.f32 %v232, %v1337
  %v1346 = vmul.f32 %v233, %v1325
  %v1347 = vmul.f32 %v234, %v1329
  %v1348 = vmul.f32 %v235, %v1333
  %v1349 = vmul.f32 %v236, %v1337
  %v1350 = vmul.f32 %v237, %v1325
  %v1351 = vmul.f32 %v238, %v1329
  %v1352 = vmul.f32 %v239, %v1333
  %v1353 = vmul.f32 %v240, %v1337
  %v1354 = vmul.f32 %v241, %v1325
  %v1355 = vmul.f32 %v242, %v1329
  %v1356 = vmul.f32 %v243, %v1333
  %v1357 = vmul.f32 %v244, %v1337
  %v1358 = vadd.f32 %v1303, %v1342
  %v1359 = vadd.f32 %v1304, %v1343
  %v1360 = vadd.f32 %v1305, %v1344
  %v1361 = vadd.f32 %v1306, %v1345
  %v1362 = vadd.f32 %v1307, %v1346
  %v1363 = vadd.f32 %v1308, %v1347
  %v1364 = vadd.f32 %v1309, %v1348
  %v1365 = vadd.f32 %v1310, %v1349
  %v1366 = vadd.f32 %v1311, %v1350
  %v1367 = vadd.f32 %v1312, %v1351
  %v1368 = vadd.f32 %v1313, %v1352
  %v1369 = vadd.f32 %v1314, %v1353
  %v1370 = vadd.f32 %v1315, %v1354
  %v1371 = vadd.f32 %v1316, %v1355
  %v1372 = vadd.f32 %v1317, %v1356
  %v1373 = vadd.f32 %v1318, %v1357
  %s1374 = scalar_lea.vmem %s1, 65
  %v1375 = vld [vmem:[%s1374] ss:$8 sm:$0xf]
  %v1377 = vlaneseq
  %v1378 = vshrl.u32 %v1377, 7
  %v1379 = vsub.s32 0, %v1378
  %v1380 = vrot.slane %v1375, %v1379
  %v1381 = vlaneseq
  %v1382 = vshrl.u32 %v1381, 7
  %v1383 = vsub.s32 1, %v1382
  %v1384 = vrot.slane %v1375, %v1383
  %v1385 = vlaneseq
  %v1386 = vshrl.u32 %v1385, 7
  %v1387 = vsub.s32 2, %v1386
  %v1388 = vrot.slane %v1375, %v1387
  %v1389 = vlaneseq
  %v1390 = vshrl.u32 %v1389, 7
  %v1391 = vsub.s32 3, %v1390
  %v1392 = vrot.slane %v1375, %v1391
  %v1397 = vmul.f32 %v75, %v1380
  %v1398 = vmul.f32 %v76, %v1384
  %v1399 = vmul.f32 %v77, %v1388
  %v1400 = vmul.f32 %v78, %v1392
  %v1401 = vmul.f32 %v79, %v1380
  %v1402 = vmul.f32 %v80, %v1384
  %v1403 = vmul.f32 %v81, %v1388
  %v1404 = vmul.f32 %v82, %v1392
  %v1405 = vmul.f32 %v83, %v1380
  %v1406 = vmul.f32 %v84, %v1384
  %v1407 = vmul.f32 %v85, %v1388
  %v1408 = vmul.f32 %v86, %v1392
  %v1409 = vmul.f32 %v87, %v1380
  %v1410 = vmul.f32 %v88, %v1384
  %v1411 = vmul.f32 %v89, %v1388
  %v1412 = vmul.f32 %v90, %v1392
  %v1413 = vadd.f32 %v1358, %v1397
  %v1414 = vadd.f32 %v1359, %v1398
  %v1415 = vadd.f32 %v1360, %v1399
  %v1416 = vadd.f32 %v1361, %v1400
  %v1417 = vadd.f32 %v1362, %v1401
  %v1418 = vadd.f32 %v1363, %v1402
  %v1419 = vadd.f32 %v1364, %v1403
  %v1420 = vadd.f32 %v1365, %v1404
  %v1421 = vadd.f32 %v1366, %v1405
  %v1422 = vadd.f32 %v1367, %v1406
  %v1423 = vadd.f32 %v1368, %v1407
  %v1424 = vadd.f32 %v1369, %v1408
  %v1425 = vadd.f32 %v1370, %v1409
  %v1426 = vadd.f32 %v1371, %v1410
  %v1427 = vadd.f32 %v1372, %v1411
  %v1428 = vadd.f32 %v1373, %v1412
  %s1429 = scalar_lea.vmem %s1, 66
  %v1430 = vld [vmem:[%s1429] ss:$8 sm:$0xf]
  %v1432 = vlaneseq
  %v1433 = vshrl.u32 %v1432, 7
  %v1434 = vsub.s32 0, %v1433
  %v1435 = vrot.slane %v1430, %v1434
  %v1436 = vlaneseq
  %v1437 = vshrl.u32 %v1436, 7
  %v1438 = vsub.s32 1, %v1437
  %v1439 = vrot.slane %v1430, %v1438
  %v1440 = vlaneseq
  %v1441 = vshrl.u32 %v1440, 7
  %v1442 = vsub.s32 2, %v1441
  %v1443 = vrot.slane %v1430, %v1442
  %v1444 = vlaneseq
  %v1445 = vshrl.u32 %v1444, 7
  %v1446 = vsub.s32 3, %v1445
  %v1447 = vrot.slane %v1430, %v1446
  %v1452 = vmul.f32 %v306, %v1435
  %v1453 = vmul.f32 %v307, %v1439
  %v1454 = vmul.f32 %v308, %v1443
  %v1455 = vmul.f32 %v309, %v1447
  %v1456 = vmul.f32 %v310, %v1435
  %v1457 = vmul.f32 %v311, %v1439
  %v1458 = vmul.f32 %v312, %v1443
  %v1459 = vmul.f32 %v313, %v1447
  %v1460 = vmul.f32 %v314, %v1435
  %v1461 = vmul.f32 %v315, %v1439
  %v1462 = vmul.f32 %v316, %v1443
  %v1463 = vmul.f32 %v317, %v1447
  %v1464 = vmul.f32 %v318, %v1435
  %v1465 = vmul.f32 %v319, %v1439
  %v1466 = vmul.f32 %v320, %v1443
  %v1467 = vmul.f32 %v321, %v1447
  %v1468 = vadd.f32 %v1413, %v1452
  %v1469 = vadd.f32 %v1414, %v1453
  %v1470 = vadd.f32 %v1415, %v1454
  %v1471 = vadd.f32 %v1416, %v1455
  %v1472 = vadd.f32 %v1417, %v1456
  %v1473 = vadd.f32 %v1418, %v1457
  %v1474 = vadd.f32 %v1419, %v1458
  %v1475 = vadd.f32 %v1420, %v1459
  %v1476 = vadd.f32 %v1421, %v1460
  %v1477 = vadd.f32 %v1422, %v1461
  %v1478 = vadd.f32 %v1423, %v1462
  %v1479 = vadd.f32 %v1424, %v1463
  %v1480 = vadd.f32 %v1425, %v1464
  %v1481 = vadd.f32 %v1426, %v1465
  %v1482 = vadd.f32 %v1427, %v1466
  %v1483 = vadd.f32 %v1428, %v1467
  %s1484 = scalar_lea.vmem %s1, 67
  %v1485 = vld [vmem:[%s1484] ss:$8 sm:$0xf]
  %v1487 = vlaneseq
  %v1488 = vshrl.u32 %v1487, 7
  %v1489 = vsub.s32 0, %v1488
  %v1490 = vrot.slane %v1485, %v1489
  %v1491 = vlaneseq
  %v1492 = vshrl.u32 %v1491, 7
  %v1493 = vsub.s32 1, %v1492
  %v1494 = vrot.slane %v1485, %v1493
  %v1495 = vlaneseq
  %v1496 = vshrl.u32 %v1495, 7
  %v1497 = vsub.s32 2, %v1496
  %v1498 = vrot.slane %v1485, %v1497
  %v1499 = vlaneseq
  %v1500 = vshrl.u32 %v1499, 7
  %v1501 = vsub.s32 3, %v1500
  %v1502 = vrot.slane %v1485, %v1501
  %v1507 = vmul.f32 %v334, %v1490
  %v1508 = vmul.f32 %v335, %v1494
  %v1509 = vmul.f32 %v336, %v1498
  %v1510 = vmul.f32 %v337, %v1502
  %v1511 = vmul.f32 %v338, %v1490
  %v1512 = vmul.f32 %v339, %v1494
  %v1513 = vmul.f32 %v340, %v1498
  %v1514 = vmul.f32 %v341, %v1502
  %v1515 = vmul.f32 %v342, %v1490
  %v1516 = vmul.f32 %v343, %v1494
  %v1517 = vmul.f32 %v344, %v1498
  %v1518 = vmul.f32 %v345, %v1502
  %v1519 = vmul.f32 %v346, %v1490
  %v1520 = vmul.f32 %v347, %v1494
  %v1521 = vmul.f32 %v348, %v1498
  %v1522 = vmul.f32 %v349, %v1502
  %v1523 = vadd.f32 %v1468, %v1507
  %v1524 = vadd.f32 %v1469, %v1508
  %v1525 = vadd.f32 %v1470, %v1509
  %v1526 = vadd.f32 %v1471, %v1510
  %v1527 = vadd.f32 %v1472, %v1511
  %v1528 = vadd.f32 %v1473, %v1512
  %v1529 = vadd.f32 %v1474, %v1513
  %v1530 = vadd.f32 %v1475, %v1514
  %v1531 = vadd.f32 %v1476, %v1515
  %v1532 = vadd.f32 %v1477, %v1516
  %v1533 = vadd.f32 %v1478, %v1517
  %v1534 = vadd.f32 %v1479, %v1518
  %v1535 = vadd.f32 %v1480, %v1519
  %v1536 = vadd.f32 %v1481, %v1520
  %v1537 = vadd.f32 %v1482, %v1521
  %v1538 = vadd.f32 %v1483, %v1522
  %v1539 = vrot.slane %v1523, 1
  %v1540 = vrot.slane %v1524, 1
  %v1541 = vrot.slane %v1525, 1
  %v1542 = vrot.slane %v1526, 1
  %v1543 = vrot.slane %v1527, 1
  %v1544 = vrot.slane %v1528, 1
  %v1545 = vrot.slane %v1529, 1
  %v1546 = vrot.slane %v1530, 1
  %v1547 = vrot.slane %v1531, 1
  %v1548 = vrot.slane %v1532, 1
  %v1549 = vrot.slane %v1533, 1
  %v1550 = vrot.slane %v1534, 1
  %v1551 = vrot.slane %v1535, 1
  %v1552 = vrot.slane %v1536, 1
  %v1553 = vrot.slane %v1537, 1
  %v1554 = vrot.slane %v1538, 1
  %vm1555 = vcmp.lt.s32.totalorder %v60, 7
  %v1556 = vsel %vm1555, %v1547, %v1551
  %v1557 = vsel %vm1555, %v1548, %v1552
  %v1558 = vsel %vm1555, %v1549, %v1553
  %v1559 = vsel %vm1555, %v1550, %v1554
  %v1560 = vsel %vm1555, %v1543, %v1547
  %v1561 = vsel %vm1555, %v1544, %v1548
  %v1562 = vsel %vm1555, %v1545, %v1549
  %v1563 = vsel %vm1555, %v1546, %v1550
  %v1564 = vsel %vm1555, %v1539, %v1543
  %v1565 = vsel %vm1555, %v1540, %v1544
  %v1566 = vsel %vm1555, %v1541, %v1545
  %v1567 = vsel %vm1555, %v1542, %v1546
  %v1568 = vsel %vm1555, %v1551, %v1539
  %v1569 = vsel %vm1555, %v1552, %v1540
  %v1570 = vsel %vm1555, %v1553, %v1541
  %v1571 = vsel %vm1555, %v1554, %v1542
  %vm1572 = vcmp.lt.s32.totalorder %v71, 15
  %vm1573 = vcmp.lt.s32.totalorder %v72, 15
  %vm1574 = vcmp.lt.s32.totalorder %v73, 15
  %vm1575 = vcmp.lt.s32.totalorder %v74, 15
  %v1576 = vsel %vm1572, 1, 0
  %v1577 = vsel %vm1573, 1, 0
  %v1578 = vsel %vm1574, 1, 0
  %v1579 = vsel %vm1575, 1, 0
  %v1580 = vcvt.s32.f32 %v1576
  %v1581 = vcvt.s32.f32 %v1577
  %v1582 = vcvt.s32.f32 %v1578
  %v1583 = vcvt.s32.f32 %v1579
  %v1584 = vmul.f32 %v1564, %v1580
  %v1585 = vmul.f32 %v1565, %v1580
  %v1586 = vmul.f32 %v1566, %v1580
  %v1587 = vmul.f32 %v1567, %v1580
  %v1588 = vmul.f32 %v1560, %v1581
  %v1589 = vmul.f32 %v1561, %v1581
  %v1590 = vmul.f32 %v1562, %v1581
  %v1591 = vmul.f32 %v1563, %v1581
  %v1592 = vmul.f32 %v1556, %v1582
  %v1593 = vmul.f32 %v1557, %v1582
  %v1594 = vmul.f32 %v1558, %v1582
  %v1595 = vmul.f32 %v1559, %v1582
  %v1596 = vmul.f32 %v1568, %v1583
  %v1597 = vmul.f32 %v1569, %v1583
  %v1598 = vmul.f32 %v1570, %v1583
  %v1599 = vmul.f32 %v1571, %v1583
  %v1600 = vadd.f32 %v1264, %v1584
  %v1601 = vadd.f32 %v1265, %v1585
  %v1602 = vadd.f32 %v1266, %v1586
  %v1603 = vadd.f32 %v1267, %v1587
  %v1604 = vadd.f32 %v1268, %v1588
  %v1605 = vadd.f32 %v1269, %v1589
  %v1606 = vadd.f32 %v1270, %v1590
  %v1607 = vadd.f32 %v1271, %v1591
  %v1608 = vadd.f32 %v1272, %v1592
  %v1609 = vadd.f32 %v1273, %v1593
  %v1610 = vadd.f32 %v1274, %v1594
  %v1611 = vadd.f32 %v1275, %v1595
  %v1612 = vadd.f32 %v1276, %v1596
  %v1613 = vadd.f32 %v1277, %v1597
  %v1614 = vadd.f32 %v1278, %v1598
  %v1615 = vadd.f32 %v1279, %v1599
  %s1616 = scalar_lea.vmem %s1, 68
  %v1617 = vld [vmem:[%s1616] ss:$8 sm:$0xf]
  %v1619 = vlaneseq
  %v1620 = vshrl.u32 %v1619, 7
  %v1621 = vsub.s32 0, %v1620
  %v1622 = vrot.slane %v1617, %v1621
  %v1623 = vlaneseq
  %v1624 = vshrl.u32 %v1623, 7
  %v1625 = vsub.s32 1, %v1624
  %v1626 = vrot.slane %v1617, %v1625
  %v1627 = vlaneseq
  %v1628 = vshrl.u32 %v1627, 7
  %v1629 = vsub.s32 2, %v1628
  %v1630 = vrot.slane %v1617, %v1629
  %v1631 = vlaneseq
  %v1632 = vshrl.u32 %v1631, 7
  %v1633 = vsub.s32 3, %v1632
  %v1634 = vrot.slane %v1617, %v1633
  %v1639 = vmul.f32 %v152, %v1622
  %v1640 = vmul.f32 %v153, %v1626
  %v1641 = vmul.f32 %v154, %v1630
  %v1642 = vmul.f32 %v155, %v1634
  %v1643 = vmul.f32 %v156, %v1622
  %v1644 = vmul.f32 %v157, %v1626
  %v1645 = vmul.f32 %v158, %v1630
  %v1646 = vmul.f32 %v159, %v1634
  %v1647 = vmul.f32 %v160, %v1622
  %v1648 = vmul.f32 %v161, %v1626
  %v1649 = vmul.f32 %v162, %v1630
  %v1650 = vmul.f32 %v163, %v1634
  %v1651 = vmul.f32 %v164, %v1622
  %v1652 = vmul.f32 %v165, %v1626
  %v1653 = vmul.f32 %v166, %v1630
  %v1654 = vmul.f32 %v167, %v1634
  %s1655 = scalar_lea.vmem %s1, 69
  %v1656 = vld [vmem:[%s1655] ss:$8 sm:$0xf]
  %v1658 = vlaneseq
  %v1659 = vshrl.u32 %v1658, 7
  %v1660 = vsub.s32 0, %v1659
  %v1661 = vrot.slane %v1656, %v1660
  %v1662 = vlaneseq
  %v1663 = vshrl.u32 %v1662, 7
  %v1664 = vsub.s32 1, %v1663
  %v1665 = vrot.slane %v1656, %v1664
  %v1666 = vlaneseq
  %v1667 = vshrl.u32 %v1666, 7
  %v1668 = vsub.s32 2, %v1667
  %v1669 = vrot.slane %v1656, %v1668
  %v1670 = vlaneseq
  %v1671 = vshrl.u32 %v1670, 7
  %v1672 = vsub.s32 3, %v1671
  %v1673 = vrot.slane %v1656, %v1672
  %v1678 = vmul.f32 %v229, %v1661
  %v1679 = vmul.f32 %v230, %v1665
  %v1680 = vmul.f32 %v231, %v1669
  %v1681 = vmul.f32 %v232, %v1673
  %v1682 = vmul.f32 %v233, %v1661
  %v1683 = vmul.f32 %v234, %v1665
  %v1684 = vmul.f32 %v235, %v1669
  %v1685 = vmul.f32 %v236, %v1673
  %v1686 = vmul.f32 %v237, %v1661
  %v1687 = vmul.f32 %v238, %v1665
  %v1688 = vmul.f32 %v239, %v1669
  %v1689 = vmul.f32 %v240, %v1673
  %v1690 = vmul.f32 %v241, %v1661
  %v1691 = vmul.f32 %v242, %v1665
  %v1692 = vmul.f32 %v243, %v1669
  %v1693 = vmul.f32 %v244, %v1673
  %v1694 = vadd.f32 %v1639, %v1678
  %v1695 = vadd.f32 %v1640, %v1679
  %v1696 = vadd.f32 %v1641, %v1680
  %v1697 = vadd.f32 %v1642, %v1681
  %v1698 = vadd.f32 %v1643, %v1682
  %v1699 = vadd.f32 %v1644, %v1683
  %v1700 = vadd.f32 %v1645, %v1684
  %v1701 = vadd.f32 %v1646, %v1685
  %v1702 = vadd.f32 %v1647, %v1686
  %v1703 = vadd.f32 %v1648, %v1687
  %v1704 = vadd.f32 %v1649, %v1688
  %v1705 = vadd.f32 %v1650, %v1689
  %v1706 = vadd.f32 %v1651, %v1690
  %v1707 = vadd.f32 %v1652, %v1691
  %v1708 = vadd.f32 %v1653, %v1692
  %v1709 = vadd.f32 %v1654, %v1693
  %s1710 = scalar_lea.vmem %s1, 70
  %v1711 = vld [vmem:[%s1710] ss:$8 sm:$0xf]
  %v1713 = vlaneseq
  %v1714 = vshrl.u32 %v1713, 7
  %v1715 = vsub.s32 0, %v1714
  %v1716 = vrot.slane %v1711, %v1715
  %v1717 = vlaneseq
  %v1718 = vshrl.u32 %v1717, 7
  %v1719 = vsub.s32 1, %v1718
  %v1720 = vrot.slane %v1711, %v1719
  %v1721 = vlaneseq
  %v1722 = vshrl.u32 %v1721, 7
  %v1723 = vsub.s32 2, %v1722
  %v1724 = vrot.slane %v1711, %v1723
  %v1725 = vlaneseq
  %v1726 = vshrl.u32 %v1725, 7
  %v1727 = vsub.s32 3, %v1726
  %v1728 = vrot.slane %v1711, %v1727
  %v1733 = vmul.f32 %v75, %v1716
  %v1734 = vmul.f32 %v76, %v1720
  %v1735 = vmul.f32 %v77, %v1724
  %v1736 = vmul.f32 %v78, %v1728
  %v1737 = vmul.f32 %v79, %v1716
  %v1738 = vmul.f32 %v80, %v1720
  %v1739 = vmul.f32 %v81, %v1724
  %v1740 = vmul.f32 %v82, %v1728
  %v1741 = vmul.f32 %v83, %v1716
  %v1742 = vmul.f32 %v84, %v1720
  %v1743 = vmul.f32 %v85, %v1724
  %v1744 = vmul.f32 %v86, %v1728
  %v1745 = vmul.f32 %v87, %v1716
  %v1746 = vmul.f32 %v88, %v1720
  %v1747 = vmul.f32 %v89, %v1724
  %v1748 = vmul.f32 %v90, %v1728
  %v1749 = vadd.f32 %v1694, %v1733
  %v1750 = vadd.f32 %v1695, %v1734
  %v1751 = vadd.f32 %v1696, %v1735
  %v1752 = vadd.f32 %v1697, %v1736
  %v1753 = vadd.f32 %v1698, %v1737
  %v1754 = vadd.f32 %v1699, %v1738
  %v1755 = vadd.f32 %v1700, %v1739
  %v1756 = vadd.f32 %v1701, %v1740
  %v1757 = vadd.f32 %v1702, %v1741
  %v1758 = vadd.f32 %v1703, %v1742
  %v1759 = vadd.f32 %v1704, %v1743
  %v1760 = vadd.f32 %v1705, %v1744
  %v1761 = vadd.f32 %v1706, %v1745
  %v1762 = vadd.f32 %v1707, %v1746
  %v1763 = vadd.f32 %v1708, %v1747
  %v1764 = vadd.f32 %v1709, %v1748
  %s1765 = scalar_lea.vmem %s1, 71
  %v1766 = vld [vmem:[%s1765] ss:$8 sm:$0xf]
  %v1768 = vlaneseq
  %v1769 = vshrl.u32 %v1768, 7
  %v1770 = vsub.s32 0, %v1769
  %v1771 = vrot.slane %v1766, %v1770
  %v1772 = vlaneseq
  %v1773 = vshrl.u32 %v1772, 7
  %v1774 = vsub.s32 1, %v1773
  %v1775 = vrot.slane %v1766, %v1774
  %v1776 = vlaneseq
  %v1777 = vshrl.u32 %v1776, 7
  %v1778 = vsub.s32 2, %v1777
  %v1779 = vrot.slane %v1766, %v1778
  %v1780 = vlaneseq
  %v1781 = vshrl.u32 %v1780, 7
  %v1782 = vsub.s32 3, %v1781
  %v1783 = vrot.slane %v1766, %v1782
  %v1788 = vmul.f32 %v306, %v1771
  %v1789 = vmul.f32 %v307, %v1775
  %v1790 = vmul.f32 %v308, %v1779
  %v1791 = vmul.f32 %v309, %v1783
  %v1792 = vmul.f32 %v310, %v1771
  %v1793 = vmul.f32 %v311, %v1775
  %v1794 = vmul.f32 %v312, %v1779
  %v1795 = vmul.f32 %v313, %v1783
  %v1796 = vmul.f32 %v314, %v1771
  %v1797 = vmul.f32 %v315, %v1775
  %v1798 = vmul.f32 %v316, %v1779
  %v1799 = vmul.f32 %v317, %v1783
  %v1800 = vmul.f32 %v318, %v1771
  %v1801 = vmul.f32 %v319, %v1775
  %v1802 = vmul.f32 %v320, %v1779
  %v1803 = vmul.f32 %v321, %v1783
  %v1804 = vadd.f32 %v1749, %v1788
  %v1805 = vadd.f32 %v1750, %v1789
  %v1806 = vadd.f32 %v1751, %v1790
  %v1807 = vadd.f32 %v1752, %v1791
  %v1808 = vadd.f32 %v1753, %v1792
  %v1809 = vadd.f32 %v1754, %v1793
  %v1810 = vadd.f32 %v1755, %v1794
  %v1811 = vadd.f32 %v1756, %v1795
  %v1812 = vadd.f32 %v1757, %v1796
  %v1813 = vadd.f32 %v1758, %v1797
  %v1814 = vadd.f32 %v1759, %v1798
  %v1815 = vadd.f32 %v1760, %v1799
  %v1816 = vadd.f32 %v1761, %v1800
  %v1817 = vadd.f32 %v1762, %v1801
  %v1818 = vadd.f32 %v1763, %v1802
  %v1819 = vadd.f32 %v1764, %v1803
  %s1820 = scalar_lea.vmem %s1, 96
  %v1821 = vld [vmem:[%s1820] ss:$8 sm:$0xf]
  %v1823 = vlaneseq
  %v1824 = vshrl.u32 %v1823, 7
  %v1825 = vsub.s32 0, %v1824
  %v1826 = vrot.slane %v1821, %v1825
  %v1827 = vlaneseq
  %v1828 = vshrl.u32 %v1827, 7
  %v1829 = vsub.s32 1, %v1828
  %v1830 = vrot.slane %v1821, %v1829
  %v1831 = vlaneseq
  %v1832 = vshrl.u32 %v1831, 7
  %v1833 = vsub.s32 2, %v1832
  %v1834 = vrot.slane %v1821, %v1833
  %v1835 = vlaneseq
  %v1836 = vshrl.u32 %v1835, 7
  %v1837 = vsub.s32 3, %v1836
  %v1838 = vrot.slane %v1821, %v1837
  %v1843 = vmul.f32 %v334, %v1826
  %v1844 = vmul.f32 %v335, %v1830
  %v1845 = vmul.f32 %v336, %v1834
  %v1846 = vmul.f32 %v337, %v1838
  %v1847 = vmul.f32 %v338, %v1826
  %v1848 = vmul.f32 %v339, %v1830
  %v1849 = vmul.f32 %v340, %v1834
  %v1850 = vmul.f32 %v341, %v1838
  %v1851 = vmul.f32 %v342, %v1826
  %v1852 = vmul.f32 %v343, %v1830
  %v1853 = vmul.f32 %v344, %v1834
  %v1854 = vmul.f32 %v345, %v1838
  %v1855 = vmul.f32 %v346, %v1826
  %v1856 = vmul.f32 %v347, %v1830
  %v1857 = vmul.f32 %v348, %v1834
  %v1858 = vmul.f32 %v349, %v1838
  %v1859 = vadd.f32 %v1804, %v1843
  %v1860 = vadd.f32 %v1805, %v1844
  %v1861 = vadd.f32 %v1806, %v1845
  %v1862 = vadd.f32 %v1807, %v1846
  %v1863 = vadd.f32 %v1808, %v1847
  %v1864 = vadd.f32 %v1809, %v1848
  %v1865 = vadd.f32 %v1810, %v1849
  %v1866 = vadd.f32 %v1811, %v1850
  %v1867 = vadd.f32 %v1812, %v1851
  %v1868 = vadd.f32 %v1813, %v1852
  %v1869 = vadd.f32 %v1814, %v1853
  %v1870 = vadd.f32 %v1815, %v1854
  %v1871 = vadd.f32 %v1816, %v1855
  %v1872 = vadd.f32 %v1817, %v1856
  %v1873 = vadd.f32 %v1818, %v1857
  %v1874 = vadd.f32 %v1819, %v1858
  %v1875 = vrot.slane %v1859, 2
  %v1876 = vrot.slane %v1860, 2
  %v1877 = vrot.slane %v1861, 2
  %v1878 = vrot.slane %v1862, 2
  %v1879 = vrot.slane %v1863, 2
  %v1880 = vrot.slane %v1864, 2
  %v1881 = vrot.slane %v1865, 2
  %v1882 = vrot.slane %v1866, 2
  %v1883 = vrot.slane %v1867, 2
  %v1884 = vrot.slane %v1868, 2
  %v1885 = vrot.slane %v1869, 2
  %v1886 = vrot.slane %v1870, 2
  %v1887 = vrot.slane %v1871, 2
  %v1888 = vrot.slane %v1872, 2
  %v1889 = vrot.slane %v1873, 2
  %v1890 = vrot.slane %v1874, 2
  %vm1891 = vcmp.lt.s32.totalorder %v60, 6
  %v1892 = vsel %vm1891, %v1883, %v1887
  %v1893 = vsel %vm1891, %v1884, %v1888
  %v1894 = vsel %vm1891, %v1885, %v1889
  %v1895 = vsel %vm1891, %v1886, %v1890
  %v1896 = vsel %vm1891, %v1879, %v1883
  %v1897 = vsel %vm1891, %v1880, %v1884
  %v1898 = vsel %vm1891, %v1881, %v1885
  %v1899 = vsel %vm1891, %v1882, %v1886
  %v1900 = vsel %vm1891, %v1875, %v1879
  %v1901 = vsel %vm1891, %v1876, %v1880
  %v1902 = vsel %vm1891, %v1877, %v1881
  %v1903 = vsel %vm1891, %v1878, %v1882
  %v1904 = vsel %vm1891, %v1887, %v1875
  %v1905 = vsel %vm1891, %v1888, %v1876
  %v1906 = vsel %vm1891, %v1889, %v1877
  %v1907 = vsel %vm1891, %v1890, %v1878
  %vm1908 = vcmp.lt.s32.totalorder %v71, 14
  %vm1909 = vcmp.lt.s32.totalorder %v72, 14
  %vm1910 = vcmp.lt.s32.totalorder %v73, 14
  %vm1911 = vcmp.lt.s32.totalorder %v74, 14
  %v1912 = vsel %vm1908, 1, 0
  %v1913 = vsel %vm1909, 1, 0
  %v1914 = vsel %vm1910, 1, 0
  %v1915 = vsel %vm1911, 1, 0
  %v1916 = vcvt.s32.f32 %v1912
  %v1917 = vcvt.s32.f32 %v1913
  %v1918 = vcvt.s32.f32 %v1914
  %v1919 = vcvt.s32.f32 %v1915
  %v1920 = vmul.f32 %v1900, %v1916
  %v1921 = vmul.f32 %v1901, %v1916
  %v1922 = vmul.f32 %v1902, %v1916
  %v1923 = vmul.f32 %v1903, %v1916
  %v1924 = vmul.f32 %v1896, %v1917
  %v1925 = vmul.f32 %v1897, %v1917
  %v1926 = vmul.f32 %v1898, %v1917
  %v1927 = vmul.f32 %v1899, %v1917
  %v1928 = vmul.f32 %v1892, %v1918
  %v1929 = vmul.f32 %v1893, %v1918
  %v1930 = vmul.f32 %v1894, %v1918
  %v1931 = vmul.f32 %v1895, %v1918
  %v1932 = vmul.f32 %v1904, %v1919
  %v1933 = vmul.f32 %v1905, %v1919
  %v1934 = vmul.f32 %v1906, %v1919
  %v1935 = vmul.f32 %v1907, %v1919
  %v1936 = vadd.f32 %v1600, %v1920
  %v1937 = vadd.f32 %v1601, %v1921
  %v1938 = vadd.f32 %v1602, %v1922
  %v1939 = vadd.f32 %v1603, %v1923
  %v1940 = vadd.f32 %v1604, %v1924
  %v1941 = vadd.f32 %v1605, %v1925
  %v1942 = vadd.f32 %v1606, %v1926
  %v1943 = vadd.f32 %v1607, %v1927
  %v1944 = vadd.f32 %v1608, %v1928
  %v1945 = vadd.f32 %v1609, %v1929
  %v1946 = vadd.f32 %v1610, %v1930
  %v1947 = vadd.f32 %v1611, %v1931
  %v1948 = vadd.f32 %v1612, %v1932
  %v1949 = vadd.f32 %v1613, %v1933
  %v1950 = vadd.f32 %v1614, %v1934
  %v1951 = vadd.f32 %v1615, %v1935
  %v1952 = vld [vmem:[%s2] sm:$0xf]
  %v1954 = vlaneseq
  %v1955 = vshrl.u32 %v1954, 7
  %v1956 = vsub.s32 0, %v1955
  %v1957 = vrot.slane %v1952, %v1956
  %v1958 = vlaneseq
  %v1959 = vshrl.u32 %v1958, 7
  %v1960 = vsub.s32 1, %v1959
  %v1961 = vrot.slane %v1952, %v1960
  %v1962 = vlaneseq
  %v1963 = vshrl.u32 %v1962, 7
  %v1964 = vsub.s32 2, %v1963
  %v1965 = vrot.slane %v1952, %v1964
  %v1966 = vlaneseq
  %v1967 = vshrl.u32 %v1966, 7
  %v1968 = vsub.s32 3, %v1967
  %v1969 = vrot.slane %v1952, %v1968
  %v1974 = vadd.f32 %v1936, %v1957
  %v1975 = vadd.f32 %v1937, %v1961
  %v1976 = vadd.f32 %v1938, %v1965
  %v1977 = vadd.f32 %v1939, %v1969
  %v1978 = vadd.f32 %v1940, %v1957
  %v1979 = vadd.f32 %v1941, %v1961
  %v1980 = vadd.f32 %v1942, %v1965
  %v1981 = vadd.f32 %v1943, %v1969
  %v1982 = vadd.f32 %v1944, %v1957
  %v1983 = vadd.f32 %v1945, %v1961
  %v1984 = vadd.f32 %v1946, %v1965
  %v1985 = vadd.f32 %v1947, %v1969
  %v1986 = vadd.f32 %v1948, %v1957
  %v1987 = vadd.f32 %v1949, %v1961
  %v1988 = vadd.f32 %v1950, %v1965
  %v1989 = vadd.f32 %v1951, %v1969
  %1990 = vrot.lane.b32.xlu0 %v1974, 96
  %v1991 = vpop.permute.xlu0 %1990
  %1992 = vrot.lane.b32.xlu0 %v1978, 96
  %v1993 = vpop.permute.xlu0 %1992
  %1994 = vrot.lane.b32.xlu0 %v1982, 96
  %v1995 = vpop.permute.xlu0 %1994
  %1996 = vrot.lane.b32.xlu0 %v1986, 96
  %v1997 = vpop.permute.xlu0 %1996
  %1998 = vrot.lane.b32.xlu0 %v1975, 96
  %v1999 = vpop.permute.xlu0 %1998
  %2000 = vrot.lane.b32.xlu0 %v1979, 96
  %v2001 = vpop.permute.xlu0 %2000
  %2002 = vrot.lane.b32.xlu0 %v1983, 96
  %v2003 = vpop.permute.xlu0 %2002
  %2004 = vrot.lane.b32.xlu0 %v1987, 96
  %v2005 = vpop.permute.xlu0 %2004
  %2006 = vrot.lane.b32.xlu0 %v1976, 96
  %v2007 = vpop.permute.xlu0 %2006
  %2008 = vrot.lane.b32.xlu0 %v1980, 96
  %v2009 = vpop.permute.xlu0 %2008
  %2010 = vrot.lane.b32.xlu0 %v1984, 96
  %v2011 = vpop.permute.xlu0 %2010
  %2012 = vrot.lane.b32.xlu0 %v1988, 96
  %v2013 = vpop.permute.xlu0 %2012
  %2014 = vrot.lane.b32.xlu0 %v1977, 96
  %v2015 = vpop.permute.xlu0 %2014
  %2016 = vrot.lane.b32.xlu0 %v1981, 96
  %v2017 = vpop.permute.xlu0 %2016
  %2018 = vrot.lane.b32.xlu0 %v1985, 96
  %v2019 = vpop.permute.xlu0 %2018
  %2020 = vrot.lane.b32.xlu0 %v1989, 96
  %v2021 = vpop.permute.xlu0 %2020
  %v2022 = vsel %vm277, %v2007, %v2015
  %v2023 = vsel %vm277, %v2009, %v2017
  %v2024 = vsel %vm277, %v2011, %v2019
  %v2025 = vsel %vm277, %v2013, %v2021
  %v2026 = vsel %vm277, %v1999, %v2007
  %v2027 = vsel %vm277, %v2001, %v2009
  %v2028 = vsel %vm277, %v2003, %v2011
  %v2029 = vsel %vm277, %v2005, %v2013
  %v2030 = vsel %vm277, %v1991, %v1999
  %v2031 = vsel %vm277, %v1993, %v2001
  %v2032 = vsel %vm277, %v1995, %v2003
  %v2033 = vsel %vm277, %v1997, %v2005
  %v2034 = vsel %vm277, %v2015, %v1991
  %v2035 = vsel %vm277, %v2017, %v1993
  %v2036 = vsel %vm277, %v2019, %v1995
  %v2037 = vsel %vm277, %v2021, %v1997
  %vm2038 = vcmp.ge.s32.totalorder %v55, 96
  %vm2039 = vcmp.ge.s32.totalorder %v56, 96
  %vm2040 = vcmp.ge.s32.totalorder %v57, 96
  %vm2041 = vcmp.ge.s32.totalorder %v58, 96
  %v2042 = vsel %vm2038, 1, 0
  %v2043 = vsel %vm2039, 1, 0
  %v2044 = vsel %vm2040, 1, 0
  %v2045 = vsel %vm2041, 1, 0
  %v2046 = vcvt.s32.f32 %v2042
  %v2047 = vcvt.s32.f32 %v2043
  %v2048 = vcvt.s32.f32 %v2044
  %v2049 = vcvt.s32.f32 %v2045
  %v2050 = vmul.f32 %v2034, %v2046
  %v2051 = vmul.f32 %v2030, %v2047
  %v2052 = vmul.f32 %v2026, %v2048
  %v2053 = vmul.f32 %v2022, %v2049
  %v2054 = vmul.f32 %v2035, %v2046
  %v2055 = vmul.f32 %v2031, %v2047
  %v2056 = vmul.f32 %v2027, %v2048
  %v2057 = vmul.f32 %v2023, %v2049
  %v2058 = vmul.f32 %v2036, %v2046
  %v2059 = vmul.f32 %v2032, %v2047
  %v2060 = vmul.f32 %v2028, %v2048
  %v2061 = vmul.f32 %v2024, %v2049
  %v2062 = vmul.f32 %v2037, %v2046
  %v2063 = vmul.f32 %v2033, %v2047
  %v2064 = vmul.f32 %v2029, %v2048
  %v2065 = vmul.f32 %v2025, %v2049
  %2066 = vrot.lane.b32.xlu0 %v1974, 64
  %v2067 = vpop.permute.xlu0 %2066
  %2068 = vrot.lane.b32.xlu0 %v1978, 64
  %v2069 = vpop.permute.xlu0 %2068
  %2070 = vrot.lane.b32.xlu0 %v1982, 64
  %v2071 = vpop.permute.xlu0 %2070
  %2072 = vrot.lane.b32.xlu0 %v1986, 64
  %v2073 = vpop.permute.xlu0 %2072
  %2074 = vrot.lane.b32.xlu0 %v1975, 64
  %v2075 = vpop.permute.xlu0 %2074
  %2076 = vrot.lane.b32.xlu0 %v1979, 64
  %v2077 = vpop.permute.xlu0 %2076
  %2078 = vrot.lane.b32.xlu0 %v1983, 64
  %v2079 = vpop.permute.xlu0 %2078
  %2080 = vrot.lane.b32.xlu0 %v1987, 64
  %v2081 = vpop.permute.xlu0 %2080
  %2082 = vrot.lane.b32.xlu0 %v1976, 64
  %v2083 = vpop.permute.xlu0 %2082
  %2084 = vrot.lane.b32.xlu0 %v1980, 64
  %v2085 = vpop.permute.xlu0 %2084
  %2086 = vrot.lane.b32.xlu0 %v1984, 64
  %v2087 = vpop.permute.xlu0 %2086
  %2088 = vrot.lane.b32.xlu0 %v1988, 64
  %v2089 = vpop.permute.xlu0 %2088
  %2090 = vrot.lane.b32.xlu0 %v1977, 64
  %v2091 = vpop.permute.xlu0 %2090
  %2092 = vrot.lane.b32.xlu0 %v1981, 64
  %v2093 = vpop.permute.xlu0 %2092
  %2094 = vrot.lane.b32.xlu0 %v1985, 64
  %v2095 = vpop.permute.xlu0 %2094
  %2096 = vrot.lane.b32.xlu0 %v1989, 64
  %v2097 = vpop.permute.xlu0 %2096
  %v2098 = vsel %vm123, %v2083, %v2091
  %v2099 = vsel %vm123, %v2085, %v2093
  %v2100 = vsel %vm123, %v2087, %v2095
  %v2101 = vsel %vm123, %v2089, %v2097
  %v2102 = vsel %vm123, %v2075, %v2083
  %v2103 = vsel %vm123, %v2077, %v2085
  %v2104 = vsel %vm123, %v2079, %v2087
  %v2105 = vsel %vm123, %v2081, %v2089
  %v2106 = vsel %vm123, %v2067, %v2075
  %v2107 = vsel %vm123, %v2069, %v2077
  %v2108 = vsel %vm123, %v2071, %v2079
  %v2109 = vsel %vm123, %v2073, %v2081
  %v2110 = vsel %vm123, %v2091, %v2067
  %v2111 = vsel %vm123, %v2093, %v2069
  %v2112 = vsel %vm123, %v2095, %v2071
  %v2113 = vsel %vm123, %v2097, %v2073
  %v2114 = vmul.f32 %v2110, %v148
  %v2115 = vmul.f32 %v2106, %v149
  %v2116 = vmul.f32 %v2102, %v150
  %v2117 = vmul.f32 %v2098, %v151
  %v2118 = vmul.f32 %v2111, %v148
  %v2119 = vmul.f32 %v2107, %v149
  %v2120 = vmul.f32 %v2103, %v150
  %v2121 = vmul.f32 %v2099, %v151
  %v2122 = vmul.f32 %v2112, %v148
  %v2123 = vmul.f32 %v2108, %v149
  %v2124 = vmul.f32 %v2104, %v150
  %v2125 = vmul.f32 %v2100, %v151
  %v2126 = vmul.f32 %v2113, %v148
  %v2127 = vmul.f32 %v2109, %v149
  %v2128 = vmul.f32 %v2105, %v150
  %v2129 = vmul.f32 %v2101, %v151
  %2130 = vrot.lane.b32.xlu0 %v1974, 32
  %v2131 = vpop.permute.xlu0 %2130
  %2132 = vrot.lane.b32.xlu0 %v1978, 32
  %v2133 = vpop.permute.xlu0 %2132
  %2134 = vrot.lane.b32.xlu0 %v1982, 32
  %v2135 = vpop.permute.xlu0 %2134
  %2136 = vrot.lane.b32.xlu0 %v1986, 32
  %v2137 = vpop.permute.xlu0 %2136
  %2138 = vrot.lane.b32.xlu0 %v1975, 32
  %v2139 = vpop.permute.xlu0 %2138
  %2140 = vrot.lane.b32.xlu0 %v1979, 32
  %v2141 = vpop.permute.xlu0 %2140
  %2142 = vrot.lane.b32.xlu0 %v1983, 32
  %v2143 = vpop.permute.xlu0 %2142
  %2144 = vrot.lane.b32.xlu0 %v1987, 32
  %v2145 = vpop.permute.xlu0 %2144
  %2146 = vrot.lane.b32.xlu0 %v1976, 32
  %v2147 = vpop.permute.xlu0 %2146
  %2148 = vrot.lane.b32.xlu0 %v1980, 32
  %v2149 = vpop.permute.xlu0 %2148
  %2150 = vrot.lane.b32.xlu0 %v1984, 32
  %v2151 = vpop.permute.xlu0 %2150
  %2152 = vrot.lane.b32.xlu0 %v1988, 32
  %v2153 = vpop.permute.xlu0 %2152
  %2154 = vrot.lane.b32.xlu0 %v1977, 32
  %v2155 = vpop.permute.xlu0 %2154
  %2156 = vrot.lane.b32.xlu0 %v1981, 32
  %v2157 = vpop.permute.xlu0 %2156
  %2158 = vrot.lane.b32.xlu0 %v1985, 32
  %v2159 = vpop.permute.xlu0 %2158
  %2160 = vrot.lane.b32.xlu0 %v1989, 32
  %v2161 = vpop.permute.xlu0 %2160
  %v2162 = vsel %vm200, %v2147, %v2155
  %v2163 = vsel %vm200, %v2149, %v2157
  %v2164 = vsel %vm200, %v2151, %v2159
  %v2165 = vsel %vm200, %v2153, %v2161
  %v2166 = vsel %vm200, %v2139, %v2147
  %v2167 = vsel %vm200, %v2141, %v2149
  %v2168 = vsel %vm200, %v2143, %v2151
  %v2169 = vsel %vm200, %v2145, %v2153
  %v2170 = vsel %vm200, %v2131, %v2139
  %v2171 = vsel %vm200, %v2133, %v2141
  %v2172 = vsel %vm200, %v2135, %v2143
  %v2173 = vsel %vm200, %v2137, %v2145
  %v2174 = vsel %vm200, %v2155, %v2131
  %v2175 = vsel %vm200, %v2157, %v2133
  %v2176 = vsel %vm200, %v2159, %v2135
  %v2177 = vsel %vm200, %v2161, %v2137
  %v2178 = vmul.f32 %v2174, %v225
  %v2179 = vmul.f32 %v2170, %v226
  %v2180 = vmul.f32 %v2166, %v227
  %v2181 = vmul.f32 %v2162, %v228
  %v2182 = vmul.f32 %v2175, %v225
  %v2183 = vmul.f32 %v2171, %v226
  %v2184 = vmul.f32 %v2167, %v227
  %v2185 = vmul.f32 %v2163, %v228
  %v2186 = vmul.f32 %v2176, %v225
  %v2187 = vmul.f32 %v2172, %v226
  %v2188 = vmul.f32 %v2168, %v227
  %v2189 = vmul.f32 %v2164, %v228
  %v2190 = vmul.f32 %v2177, %v225
  %v2191 = vmul.f32 %v2173, %v226
  %v2192 = vmul.f32 %v2169, %v227
  %v2193 = vmul.f32 %v2165, %v228
  %v2194 = vmul.f32 %v2030, %v302
  %v2195 = vmul.f32 %v2026, %v303
  %v2196 = vmul.f32 %v2022, %v304
  %v2197 = vmul.f32 %v2034, %v305
  %v2198 = vmul.f32 %v2031, %v302
  %v2199 = vmul.f32 %v2027, %v303
  %v2200 = vmul.f32 %v2023, %v304
  %v2201 = vmul.f32 %v2035, %v305
  %v2202 = vmul.f32 %v2032, %v302
  %v2203 = vmul.f32 %v2028, %v303
  %v2204 = vmul.f32 %v2024, %v304
  %v2205 = vmul.f32 %v2036, %v305
  %v2206 = vmul.f32 %v2033, %v302
  %v2207 = vmul.f32 %v2029, %v303
  %v2208 = vmul.f32 %v2025, %v304
  %v2209 = vmul.f32 %v2037, %v305
  %v2210 = vmul.f32 %v2106, %v330
  %v2211 = vmul.f32 %v2102, %v331
  %v2212 = vmul.f32 %v2098, %v332
  %v2213 = vmul.f32 %v2110, %v333
  %v2214 = vmul.f32 %v2107, %v330
  %v2215 = vmul.f32 %v2103, %v331
  %v2216 = vmul.f32 %v2099, %v332
  %v2217 = vmul.f32 %v2111, %v333
  %v2218 = vmul.f32 %v2108, %v330
  %v2219 = vmul.f32 %v2104, %v331
  %v2220 = vmul.f32 %v2100, %v332
  %v2221 = vmul.f32 %v2112, %v333
  %v2222 = vmul.f32 %v2109, %v330
  %v2223 = vmul.f32 %v2105, %v331
  %v2224 = vmul.f32 %v2101, %v332
  %v2225 = vmul.f32 %v2113, %v333
  %vm2226 = vcmp.lt.s32.totalorder %v55, 416
  %vm2227 = vcmp.lt.s32.totalorder %v56, 416
  %vm2228 = vcmp.lt.s32.totalorder %v57, 416
  %vm2229 = vcmp.lt.s32.totalorder %v58, 416
  %v2230 = vsel %vm2226, 1, 0
  %v2231 = vsel %vm2227, 1, 0
  %v2232 = vsel %vm2228, 1, 0
  %v2233 = vsel %vm2229, 1, 0
  %v2234 = vcvt.s32.f32 %v2230
  %v2235 = vcvt.s32.f32 %v2231
  %v2236 = vcvt.s32.f32 %v2232
  %v2237 = vcvt.s32.f32 %v2233
  %v2238 = vmul.f32 %v2170, %v2234
  %v2239 = vmul.f32 %v2166, %v2235
  %v2240 = vmul.f32 %v2162, %v2236
  %v2241 = vmul.f32 %v2174, %v2237
  %v2242 = vmul.f32 %v2171, %v2234
  %v2243 = vmul.f32 %v2167, %v2235
  %v2244 = vmul.f32 %v2163, %v2236
  %v2245 = vmul.f32 %v2175, %v2237
  %v2246 = vmul.f32 %v2172, %v2234
  %v2247 = vmul.f32 %v2168, %v2235
  %v2248 = vmul.f32 %v2164, %v2236
  %v2249 = vmul.f32 %v2176, %v2237
  %v2250 = vmul.f32 %v2173, %v2234
  %v2251 = vmul.f32 %v2169, %v2235
  %v2252 = vmul.f32 %v2165, %v2236
  %v2253 = vmul.f32 %v2177, %v2237
  %v2254 = vld [vmem:[%s3] ss:$4 sm:$0xf]
  %v2256 = vlaneseq
  %v2257 = vshrl.u32 %v2256, 7
  %v2258 = vsub.s32 0, %v2257
  %v2259 = vrot.slane %v2254, %v2258
  %v2260 = vlaneseq
  %v2261 = vshrl.u32 %v2260, 7
  %v2262 = vsub.s32 1, %v2261
  %v2263 = vrot.slane %v2254, %v2262
  %v2264 = vlaneseq
  %v2265 = vshrl.u32 %v2264, 7
  %v2266 = vsub.s32 2, %v2265
  %v2267 = vrot.slane %v2254, %v2266
  %v2268 = vlaneseq
  %v2269 = vshrl.u32 %v2268, 7
  %v2270 = vsub.s32 3, %v2269
  %v2271 = vrot.slane %v2254, %v2270
  %v2276 = vmul.f32 %v2178, %v2259
  %v2277 = vmul.f32 %v2179, %v2263
  %v2278 = vmul.f32 %v2180, %v2267
  %v2279 = vmul.f32 %v2181, %v2271
  %v2280 = vmul.f32 %v2182, %v2259
  %v2281 = vmul.f32 %v2183, %v2263
  %v2282 = vmul.f32 %v2184, %v2267
  %v2283 = vmul.f32 %v2185, %v2271
  %v2284 = vmul.f32 %v2186, %v2259
  %v2285 = vmul.f32 %v2187, %v2263
  %v2286 = vmul.f32 %v2188, %v2267
  %v2287 = vmul.f32 %v2189, %v2271
  %v2288 = vmul.f32 %v2190, %v2259
  %v2289 = vmul.f32 %v2191, %v2263
  %v2290 = vmul.f32 %v2192, %v2267
  %v2291 = vmul.f32 %v2193, %v2271
  %s2292 = scalar_lea.vmem %s3, 1
  %v2293 = vld [vmem:[%s2292] ss:$4 sm:$0xf]
  %v2295 = vlaneseq
  %v2296 = vshrl.u32 %v2295, 7
  %v2297 = vsub.s32 0, %v2296
  %v2298 = vrot.slane %v2293, %v2297
  %v2299 = vlaneseq
  %v2300 = vshrl.u32 %v2299, 7
  %v2301 = vsub.s32 1, %v2300
  %v2302 = vrot.slane %v2293, %v2301
  %v2303 = vlaneseq
  %v2304 = vshrl.u32 %v2303, 7
  %v2305 = vsub.s32 2, %v2304
  %v2306 = vrot.slane %v2293, %v2305
  %v2307 = vlaneseq
  %v2308 = vshrl.u32 %v2307, 7
  %v2309 = vsub.s32 3, %v2308
  %v2310 = vrot.slane %v2293, %v2309
  %v2315 = vmul.f32 %v1974, %v2298
  %v2316 = vmul.f32 %v1975, %v2302
  %v2317 = vmul.f32 %v1976, %v2306
  %v2318 = vmul.f32 %v1977, %v2310
  %v2319 = vmul.f32 %v1978, %v2298
  %v2320 = vmul.f32 %v1979, %v2302
  %v2321 = vmul.f32 %v1980, %v2306
  %v2322 = vmul.f32 %v1981, %v2310
  %v2323 = vmul.f32 %v1982, %v2298
  %v2324 = vmul.f32 %v1983, %v2302
  %v2325 = vmul.f32 %v1984, %v2306
  %v2326 = vmul.f32 %v1985, %v2310
  %v2327 = vmul.f32 %v1986, %v2298
  %v2328 = vmul.f32 %v1987, %v2302
  %v2329 = vmul.f32 %v1988, %v2306
  %v2330 = vmul.f32 %v1989, %v2310
  %v2331 = vadd.f32 %v2276, %v2315
  %v2332 = vadd.f32 %v2277, %v2316
  %v2333 = vadd.f32 %v2278, %v2317
  %v2334 = vadd.f32 %v2279, %v2318
  %v2335 = vadd.f32 %v2280, %v2319
  %v2336 = vadd.f32 %v2281, %v2320
  %v2337 = vadd.f32 %v2282, %v2321
  %v2338 = vadd.f32 %v2283, %v2322
  %v2339 = vadd.f32 %v2284, %v2323
  %v2340 = vadd.f32 %v2285, %v2324
  %v2341 = vadd.f32 %v2286, %v2325
  %v2342 = vadd.f32 %v2287, %v2326
  %v2343 = vadd.f32 %v2288, %v2327
  %v2344 = vadd.f32 %v2289, %v2328
  %v2345 = vadd.f32 %v2290, %v2329
  %v2346 = vadd.f32 %v2291, %v2330
  %s2347 = scalar_lea.vmem %s3, 2
  %v2348 = vld [vmem:[%s2347] ss:$4 sm:$0xf]
  %v2350 = vlaneseq
  %v2351 = vshrl.u32 %v2350, 7
  %v2352 = vsub.s32 0, %v2351
  %v2353 = vrot.slane %v2348, %v2352
  %v2354 = vlaneseq
  %v2355 = vshrl.u32 %v2354, 7
  %v2356 = vsub.s32 1, %v2355
  %v2357 = vrot.slane %v2348, %v2356
  %v2358 = vlaneseq
  %v2359 = vshrl.u32 %v2358, 7
  %v2360 = vsub.s32 2, %v2359
  %v2361 = vrot.slane %v2348, %v2360
  %v2362 = vlaneseq
  %v2363 = vshrl.u32 %v2362, 7
  %v2364 = vsub.s32 3, %v2363
  %v2365 = vrot.slane %v2348, %v2364
  %v2370 = vmul.f32 %v2194, %v2353
  %v2371 = vmul.f32 %v2195, %v2357
  %v2372 = vmul.f32 %v2196, %v2361
  %v2373 = vmul.f32 %v2197, %v2365
  %v2374 = vmul.f32 %v2198, %v2353
  %v2375 = vmul.f32 %v2199, %v2357
  %v2376 = vmul.f32 %v2200, %v2361
  %v2377 = vmul.f32 %v2201, %v2365
  %v2378 = vmul.f32 %v2202, %v2353
  %v2379 = vmul.f32 %v2203, %v2357
  %v2380 = vmul.f32 %v2204, %v2361
  %v2381 = vmul.f32 %v2205, %v2365
  %v2382 = vmul.f32 %v2206, %v2353
  %v2383 = vmul.f32 %v2207, %v2357
  %v2384 = vmul.f32 %v2208, %v2361
  %v2385 = vmul.f32 %v2209, %v2365
  %v2386 = vadd.f32 %v2331, %v2370
  %v2387 = vadd.f32 %v2332, %v2371
  %v2388 = vadd.f32 %v2333, %v2372
  %v2389 = vadd.f32 %v2334, %v2373
  %v2390 = vadd.f32 %v2335, %v2374
  %v2391 = vadd.f32 %v2336, %v2375
  %v2392 = vadd.f32 %v2337, %v2376
  %v2393 = vadd.f32 %v2338, %v2377
  %v2394 = vadd.f32 %v2339, %v2378
  %v2395 = vadd.f32 %v2340, %v2379
  %v2396 = vadd.f32 %v2341, %v2380
  %v2397 = vadd.f32 %v2342, %v2381
  %v2398 = vadd.f32 %v2343, %v2382
  %v2399 = vadd.f32 %v2344, %v2383
  %v2400 = vadd.f32 %v2345, %v2384
  %v2401 = vadd.f32 %v2346, %v2385
  %v2402 = vld [vmem:[%s4] sm:$0xf]
  %v2404 = vlaneseq
  %v2405 = vshrl.u32 %v2404, 7
  %v2406 = vsub.s32 0, %v2405
  %v2407 = vrot.slane %v2402, %v2406
  %v2408 = vlaneseq
  %v2409 = vshrl.u32 %v2408, 7
  %v2410 = vsub.s32 1, %v2409
  %v2411 = vrot.slane %v2402, %v2410
  %v2412 = vlaneseq
  %v2413 = vshrl.u32 %v2412, 7
  %v2414 = vsub.s32 2, %v2413
  %v2415 = vrot.slane %v2402, %v2414
  %v2416 = vlaneseq
  %v2417 = vshrl.u32 %v2416, 7
  %v2418 = vsub.s32 3, %v2417
  %v2419 = vrot.slane %v2402, %v2418
  %v2424 = vadd.f32 %v2386, %v2407
  %v2425 = vadd.f32 %v2387, %v2411
  %v2426 = vadd.f32 %v2388, %v2415
  %v2427 = vadd.f32 %v2389, %v2419
  %v2428 = vadd.f32 %v2390, %v2407
  %v2429 = vadd.f32 %v2391, %v2411
  %v2430 = vadd.f32 %v2392, %v2415
  %v2431 = vadd.f32 %v2393, %v2419
  %v2432 = vadd.f32 %v2394, %v2407
  %v2433 = vadd.f32 %v2395, %v2411
  %v2434 = vadd.f32 %v2396, %v2415
  %v2435 = vadd.f32 %v2397, %v2419
  %v2436 = vadd.f32 %v2398, %v2407
  %v2437 = vadd.f32 %v2399, %v2411
  %v2438 = vadd.f32 %v2400, %v2415
  %v2439 = vadd.f32 %v2401, %v2419
  %v2440 = vrot.slane %v2424, 7
  %v2441 = vrot.slane %v2425, 7
  %v2442 = vrot.slane %v2426, 7
  %v2443 = vrot.slane %v2427, 7
  %v2444 = vrot.slane %v2428, 7
  %v2445 = vrot.slane %v2429, 7
  %v2446 = vrot.slane %v2430, 7
  %v2447 = vrot.slane %v2431, 7
  %v2448 = vrot.slane %v2432, 7
  %v2449 = vrot.slane %v2433, 7
  %v2450 = vrot.slane %v2434, 7
  %v2451 = vrot.slane %v2435, 7
  %v2452 = vrot.slane %v2436, 7
  %v2453 = vrot.slane %v2437, 7
  %v2454 = vrot.slane %v2438, 7
  %v2455 = vrot.slane %v2439, 7
  %v2456 = vsel %vm944, %v2448, %v2452
  %v2457 = vsel %vm944, %v2449, %v2453
  %v2458 = vsel %vm944, %v2450, %v2454
  %v2459 = vsel %vm944, %v2451, %v2455
  %v2460 = vsel %vm944, %v2444, %v2448
  %v2461 = vsel %vm944, %v2445, %v2449
  %v2462 = vsel %vm944, %v2446, %v2450
  %v2463 = vsel %vm944, %v2447, %v2451
  %v2464 = vsel %vm944, %v2440, %v2444
  %v2465 = vsel %vm944, %v2441, %v2445
  %v2466 = vsel %vm944, %v2442, %v2446
  %v2467 = vsel %vm944, %v2443, %v2447
  %v2468 = vsel %vm944, %v2452, %v2440
  %v2469 = vsel %vm944, %v2453, %v2441
  %v2470 = vsel %vm944, %v2454, %v2442
  %v2471 = vsel %vm944, %v2455, %v2443
  %v2472 = vmul.f32 %v2468, %v969
  %v2473 = vmul.f32 %v2469, %v969
  %v2474 = vmul.f32 %v2470, %v969
  %v2475 = vmul.f32 %v2471, %v969
  %v2476 = vmul.f32 %v2464, %v970
  %v2477 = vmul.f32 %v2465, %v970
  %v2478 = vmul.f32 %v2466, %v970
  %v2479 = vmul.f32 %v2467, %v970
  %v2480 = vmul.f32 %v2460, %v971
  %v2481 = vmul.f32 %v2461, %v971
  %v2482 = vmul.f32 %v2462, %v971
  %v2483 = vmul.f32 %v2463, %v971
  %v2484 = vmul.f32 %v2456, %v972
  %v2485 = vmul.f32 %v2457, %v972
  %v2486 = vmul.f32 %v2458, %v972
  %v2487 = vmul.f32 %v2459, %v972
  %v2488 = vld [vmem:[%s5] ss:$4 sm:$0xf]
  %v2490 = vlaneseq
  %v2491 = vshrl.u32 %v2490, 7
  %v2492 = vsub.s32 0, %v2491
  %v2493 = vrot.slane %v2488, %v2492
  %v2494 = vlaneseq
  %v2495 = vshrl.u32 %v2494, 7
  %v2496 = vsub.s32 1, %v2495
  %v2497 = vrot.slane %v2488, %v2496
  %v2498 = vlaneseq
  %v2499 = vshrl.u32 %v2498, 7
  %v2500 = vsub.s32 2, %v2499
  %v2501 = vrot.slane %v2488, %v2500
  %v2502 = vlaneseq
  %v2503 = vshrl.u32 %v2502, 7
  %v2504 = vsub.s32 3, %v2503
  %v2505 = vrot.slane %v2488, %v2504
  %v2510 = vmul.f32 %v2472, %v2493
  %v2511 = vmul.f32 %v2473, %v2497
  %v2512 = vmul.f32 %v2474, %v2501
  %v2513 = vmul.f32 %v2475, %v2505
  %v2514 = vmul.f32 %v2476, %v2493
  %v2515 = vmul.f32 %v2477, %v2497
  %v2516 = vmul.f32 %v2478, %v2501
  %v2517 = vmul.f32 %v2479, %v2505
  %v2518 = vmul.f32 %v2480, %v2493
  %v2519 = vmul.f32 %v2481, %v2497
  %v2520 = vmul.f32 %v2482, %v2501
  %v2521 = vmul.f32 %v2483, %v2505
  %v2522 = vmul.f32 %v2484, %v2493
  %v2523 = vmul.f32 %v2485, %v2497
  %v2524 = vmul.f32 %v2486, %v2501
  %v2525 = vmul.f32 %v2487, %v2505
  %s2526 = scalar_lea.vmem %s5, 1
  %v2527 = vld [vmem:[%s2526] ss:$4 sm:$0xf]
  %v2529 = vlaneseq
  %v2530 = vshrl.u32 %v2529, 7
  %v2531 = vsub.s32 0, %v2530
  %v2532 = vrot.slane %v2527, %v2531
  %v2533 = vlaneseq
  %v2534 = vshrl.u32 %v2533, 7
  %v2535 = vsub.s32 1, %v2534
  %v2536 = vrot.slane %v2527, %v2535
  %v2537 = vlaneseq
  %v2538 = vshrl.u32 %v2537, 7
  %v2539 = vsub.s32 2, %v2538
  %v2540 = vrot.slane %v2527, %v2539
  %v2541 = vlaneseq
  %v2542 = vshrl.u32 %v2541, 7
  %v2543 = vsub.s32 3, %v2542
  %v2544 = vrot.slane %v2527, %v2543
  %v2549 = vmul.f32 %v2424, %v2532
  %v2550 = vmul.f32 %v2425, %v2536
  %v2551 = vmul.f32 %v2426, %v2540
  %v2552 = vmul.f32 %v2427, %v2544
  %v2553 = vmul.f32 %v2428, %v2532
  %v2554 = vmul.f32 %v2429, %v2536
  %v2555 = vmul.f32 %v2430, %v2540
  %v2556 = vmul.f32 %v2431, %v2544
  %v2557 = vmul.f32 %v2432, %v2532
  %v2558 = vmul.f32 %v2433, %v2536
  %v2559 = vmul.f32 %v2434, %v2540
  %v2560 = vmul.f32 %v2435, %v2544
  %v2561 = vmul.f32 %v2436, %v2532
  %v2562 = vmul.f32 %v2437, %v2536
  %v2563 = vmul.f32 %v2438, %v2540
  %v2564 = vmul.f32 %v2439, %v2544
  %v2565 = vadd.f32 %v2510, %v2549
  %v2566 = vadd.f32 %v2511, %v2550
  %v2567 = vadd.f32 %v2512, %v2551
  %v2568 = vadd.f32 %v2513, %v2552
  %v2569 = vadd.f32 %v2514, %v2553
  %v2570 = vadd.f32 %v2515, %v2554
  %v2571 = vadd.f32 %v2516, %v2555
  %v2572 = vadd.f32 %v2517, %v2556
  %v2573 = vadd.f32 %v2518, %v2557
  %v2574 = vadd.f32 %v2519, %v2558
  %v2575 = vadd.f32 %v2520, %v2559
  %v2576 = vadd.f32 %v2521, %v2560
  %v2577 = vadd.f32 %v2522, %v2561
  %v2578 = vadd.f32 %v2523, %v2562
  %v2579 = vadd.f32 %v2524, %v2563
  %v2580 = vadd.f32 %v2525, %v2564
  %v2581 = vrot.slane %v2424, 1
  %v2582 = vrot.slane %v2425, 1
  %v2583 = vrot.slane %v2426, 1
  %v2584 = vrot.slane %v2427, 1
  %v2585 = vrot.slane %v2428, 1
  %v2586 = vrot.slane %v2429, 1
  %v2587 = vrot.slane %v2430, 1
  %v2588 = vrot.slane %v2431, 1
  %v2589 = vrot.slane %v2432, 1
  %v2590 = vrot.slane %v2433, 1
  %v2591 = vrot.slane %v2434, 1
  %v2592 = vrot.slane %v2435, 1
  %v2593 = vrot.slane %v2436, 1
  %v2594 = vrot.slane %v2437, 1
  %v2595 = vrot.slane %v2438, 1
  %v2596 = vrot.slane %v2439, 1
  %v2597 = vsel %vm1555, %v2589, %v2593
  %v2598 = vsel %vm1555, %v2590, %v2594
  %v2599 = vsel %vm1555, %v2591, %v2595
  %v2600 = vsel %vm1555, %v2592, %v2596
  %v2601 = vsel %vm1555, %v2585, %v2589
  %v2602 = vsel %vm1555, %v2586, %v2590
  %v2603 = vsel %vm1555, %v2587, %v2591
  %v2604 = vsel %vm1555, %v2588, %v2592
  %v2605 = vsel %vm1555, %v2581, %v2585
  %v2606 = vsel %vm1555, %v2582, %v2586
  %v2607 = vsel %vm1555, %v2583, %v2587
  %v2608 = vsel %vm1555, %v2584, %v2588
  %v2609 = vsel %vm1555, %v2593, %v2581
  %v2610 = vsel %vm1555, %v2594, %v2582
  %v2611 = vsel %vm1555, %v2595, %v2583
  %v2612 = vsel %vm1555, %v2596, %v2584
  %v2613 = vmul.f32 %v2605, %v1580
  %v2614 = vmul.f32 %v2606, %v1580
  %v2615 = vmul.f32 %v2607, %v1580
  %v2616 = vmul.f32 %v2608, %v1580
  %v2617 = vmul.f32 %v2601, %v1581
  %v2618 = vmul.f32 %v2602, %v1581
  %v2619 = vmul.f32 %v2603, %v1581
  %v2620 = vmul.f32 %v2604, %v1581
  %v2621 = vmul.f32 %v2597, %v1582
  %v2622 = vmul.f32 %v2598, %v1582
  %v2623 = vmul.f32 %v2599, %v1582
  %v2624 = vmul.f32 %v2600, %v1582
  %v2625 = vmul.f32 %v2609, %v1583
  %v2626 = vmul.f32 %v2610, %v1583
  %v2627 = vmul.f32 %v2611, %v1583
  %v2628 = vmul.f32 %v2612, %v1583
  %s2629 = scalar_lea.vmem %s5, 2
  %v2630 = vld [vmem:[%s2629] ss:$4 sm:$0xf]
  %v2632 = vlaneseq
  %v2633 = vshrl.u32 %v2632, 7
  %v2634 = vsub.s32 0, %v2633
  %v2635 = vrot.slane %v2630, %v2634
  %v2636 = vlaneseq
  %v2637 = vshrl.u32 %v2636, 7
  %v2638 = vsub.s32 1, %v2637
  %v2639 = vrot.slane %v2630, %v2638
  %v2640 = vlaneseq
  %v2641 = vshrl.u32 %v2640, 7
  %v2642 = vsub.s32 2, %v2641
  %v2643 = vrot.slane %v2630, %v2642
  %v2644 = vlaneseq
  %v2645 = vshrl.u32 %v2644, 7
  %v2646 = vsub.s32 3, %v2645
  %v2647 = vrot.slane %v2630, %v2646
  %v2652 = vmul.f32 %v2613, %v2635
  %v2653 = vmul.f32 %v2614, %v2639
  %v2654 = vmul.f32 %v2615, %v2643
  %v2655 = vmul.f32 %v2616, %v2647
  %v2656 = vmul.f32 %v2617, %v2635
  %v2657 = vmul.f32 %v2618, %v2639
  %v2658 = vmul.f32 %v2619, %v2643
  %v2659 = vmul.f32 %v2620, %v2647
  %v2660 = vmul.f32 %v2621, %v2635
  %v2661 = vmul.f32 %v2622, %v2639
  %v2662 = vmul.f32 %v2623, %v2643
  %v2663 = vmul.f32 %v2624, %v2647
  %v2664 = vmul.f32 %v2625, %v2635
  %v2665 = vmul.f32 %v2626, %v2639
  %v2666 = vmul.f32 %v2627, %v2643
  %v2667 = vmul.f32 %v2628, %v2647
  %v2668 = vadd.f32 %v2565, %v2652
  %v2669 = vadd.f32 %v2566, %v2653
  %v2670 = vadd.f32 %v2567, %v2654
  %v2671 = vadd.f32 %v2568, %v2655
  %v2672 = vadd.f32 %v2569, %v2656
  %v2673 = vadd.f32 %v2570, %v2657
  %v2674 = vadd.f32 %v2571, %v2658
  %v2675 = vadd.f32 %v2572, %v2659
  %v2676 = vadd.f32 %v2573, %v2660
  %v2677 = vadd.f32 %v2574, %v2661
  %v2678 = vadd.f32 %v2575, %v2662
  %v2679 = vadd.f32 %v2576, %v2663
  %v2680 = vadd.f32 %v2577, %v2664
  %v2681 = vadd.f32 %v2578, %v2665
  %v2682 = vadd.f32 %v2579, %v2666
  %v2683 = vadd.f32 %v2580, %v2667
  %v2684 = vld [vmem:[%s6] sm:$0xf]
  %v2686 = vlaneseq
  %v2687 = vshrl.u32 %v2686, 7
  %v2688 = vsub.s32 0, %v2687
  %v2689 = vrot.slane %v2684, %v2688
  %v2690 = vlaneseq
  %v2691 = vshrl.u32 %v2690, 7
  %v2692 = vsub.s32 1, %v2691
  %v2693 = vrot.slane %v2684, %v2692
  %v2694 = vlaneseq
  %v2695 = vshrl.u32 %v2694, 7
  %v2696 = vsub.s32 2, %v2695
  %v2697 = vrot.slane %v2684, %v2696
  %v2698 = vlaneseq
  %v2699 = vshrl.u32 %v2698, 7
  %v2700 = vsub.s32 3, %v2699
  %v2701 = vrot.slane %v2684, %v2700
  %v2706 = vadd.f32 %v2668, %v2689
  %v2707 = vadd.f32 %v2669, %v2693
  %v2708 = vadd.f32 %v2670, %v2697
  %v2709 = vadd.f32 %v2671, %v2701
  %v2710 = vadd.f32 %v2672, %v2689
  %v2711 = vadd.f32 %v2673, %v2693
  %v2712 = vadd.f32 %v2674, %v2697
  %v2713 = vadd.f32 %v2675, %v2701
  %v2714 = vadd.f32 %v2676, %v2689
  %v2715 = vadd.f32 %v2677, %v2693
  %v2716 = vadd.f32 %v2678, %v2697
  %v2717 = vadd.f32 %v2679, %v2701
  %v2718 = vadd.f32 %v2680, %v2689
  %v2719 = vadd.f32 %v2681, %v2693
  %v2720 = vadd.f32 %v2682, %v2697
  %v2721 = vadd.f32 %v2683, %v2701
  %v2722 = vld [vmem:[%s7] ss:$8 sm:$0xf]
  %v2724 = vlaneseq
  %v2725 = vshrl.u32 %v2724, 7
  %v2726 = vsub.s32 0, %v2725
  %v2727 = vrot.slane %v2722, %v2726
  %v2728 = vlaneseq
  %v2729 = vshrl.u32 %v2728, 7
  %v2730 = vsub.s32 1, %v2729
  %v2731 = vrot.slane %v2722, %v2730
  %v2732 = vlaneseq
  %v2733 = vshrl.u32 %v2732, 7
  %v2734 = vsub.s32 2, %v2733
  %v2735 = vrot.slane %v2722, %v2734
  %v2736 = vlaneseq
  %v2737 = vshrl.u32 %v2736, 7
  %v2738 = vsub.s32 3, %v2737
  %v2739 = vrot.slane %v2722, %v2738
  %v2744 = vmul.f32 %v2050, %v2727
  %v2745 = vmul.f32 %v2051, %v2731
  %v2746 = vmul.f32 %v2052, %v2735
  %v2747 = vmul.f32 %v2053, %v2739
  %v2748 = vmul.f32 %v2054, %v2727
  %v2749 = vmul.f32 %v2055, %v2731
  %v2750 = vmul.f32 %v2056, %v2735
  %v2751 = vmul.f32 %v2057, %v2739
  %v2752 = vmul.f32 %v2058, %v2727
  %v2753 = vmul.f32 %v2059, %v2731
  %v2754 = vmul.f32 %v2060, %v2735
  %v2755 = vmul.f32 %v2061, %v2739
  %v2756 = vmul.f32 %v2062, %v2727
  %v2757 = vmul.f32 %v2063, %v2731
  %v2758 = vmul.f32 %v2064, %v2735
  %v2759 = vmul.f32 %v2065, %v2739
  %s2760 = scalar_lea.vmem %s7, 1
  %v2761 = vld [vmem:[%s2760] ss:$8 sm:$0xf]
  %v2763 = vlaneseq
  %v2764 = vshrl.u32 %v2763, 7
  %v2765 = vsub.s32 0, %v2764
  %v2766 = vrot.slane %v2761, %v2765
  %v2767 = vlaneseq
  %v2768 = vshrl.u32 %v2767, 7
  %v2769 = vsub.s32 1, %v2768
  %v2770 = vrot.slane %v2761, %v2769
  %v2771 = vlaneseq
  %v2772 = vshrl.u32 %v2771, 7
  %v2773 = vsub.s32 2, %v2772
  %v2774 = vrot.slane %v2761, %v2773
  %v2775 = vlaneseq
  %v2776 = vshrl.u32 %v2775, 7
  %v2777 = vsub.s32 3, %v2776
  %v2778 = vrot.slane %v2761, %v2777
  %v2783 = vmul.f32 %v2114, %v2766
  %v2784 = vmul.f32 %v2115, %v2770
  %v2785 = vmul.f32 %v2116, %v2774
  %v2786 = vmul.f32 %v2117, %v2778
  %v2787 = vmul.f32 %v2118, %v2766
  %v2788 = vmul.f32 %v2119, %v2770
  %v2789 = vmul.f32 %v2120, %v2774
  %v2790 = vmul.f32 %v2121, %v2778
  %v2791 = vmul.f32 %v2122, %v2766
  %v2792 = vmul.f32 %v2123, %v2770
  %v2793 = vmul.f32 %v2124, %v2774
  %v2794 = vmul.f32 %v2125, %v2778
  %v2795 = vmul.f32 %v2126, %v2766
  %v2796 = vmul.f32 %v2127, %v2770
  %v2797 = vmul.f32 %v2128, %v2774
  %v2798 = vmul.f32 %v2129, %v2778
  %v2799 = vadd.f32 %v2744, %v2783
  %v2800 = vadd.f32 %v2745, %v2784
  %v2801 = vadd.f32 %v2746, %v2785
  %v2802 = vadd.f32 %v2747, %v2786
  %v2803 = vadd.f32 %v2748, %v2787
  %v2804 = vadd.f32 %v2749, %v2788
  %v2805 = vadd.f32 %v2750, %v2789
  %v2806 = vadd.f32 %v2751, %v2790
  %v2807 = vadd.f32 %v2752, %v2791
  %v2808 = vadd.f32 %v2753, %v2792
  %v2809 = vadd.f32 %v2754, %v2793
  %v2810 = vadd.f32 %v2755, %v2794
  %v2811 = vadd.f32 %v2756, %v2795
  %v2812 = vadd.f32 %v2757, %v2796
  %v2813 = vadd.f32 %v2758, %v2797
  %v2814 = vadd.f32 %v2759, %v2798
  %s2815 = scalar_lea.vmem %s7, 2
  %v2816 = vld [vmem:[%s2815] ss:$8 sm:$0xf]
  %v2818 = vlaneseq
  %v2819 = vshrl.u32 %v2818, 7
  %v2820 = vsub.s32 0, %v2819
  %v2821 = vrot.slane %v2816, %v2820
  %v2822 = vlaneseq
  %v2823 = vshrl.u32 %v2822, 7
  %v2824 = vsub.s32 1, %v2823
  %v2825 = vrot.slane %v2816, %v2824
  %v2826 = vlaneseq
  %v2827 = vshrl.u32 %v2826, 7
  %v2828 = vsub.s32 2, %v2827
  %v2829 = vrot.slane %v2816, %v2828
  %v2830 = vlaneseq
  %v2831 = vshrl.u32 %v2830, 7
  %v2832 = vsub.s32 3, %v2831
  %v2833 = vrot.slane %v2816, %v2832
  %v2838 = vmul.f32 %v2178, %v2821
  %v2839 = vmul.f32 %v2179, %v2825
  %v2840 = vmul.f32 %v2180, %v2829
  %v2841 = vmul.f32 %v2181, %v2833
  %v2842 = vmul.f32 %v2182, %v2821
  %v2843 = vmul.f32 %v2183, %v2825
  %v2844 = vmul.f32 %v2184, %v2829
  %v2845 = vmul.f32 %v2185, %v2833
  %v2846 = vmul.f32 %v2186, %v2821
  %v2847 = vmul.f32 %v2187, %v2825
  %v2848 = vmul.f32 %v2188, %v2829
  %v2849 = vmul.f32 %v2189, %v2833
  %v2850 = vmul.f32 %v2190, %v2821
  %v2851 = vmul.f32 %v2191, %v2825
  %v2852 = vmul.f32 %v2192, %v2829
  %v2853 = vmul.f32 %v2193, %v2833
  %v2854 = vadd.f32 %v2799, %v2838
  %v2855 = vadd.f32 %v2800, %v2839
  %v2856 = vadd.f32 %v2801, %v2840
  %v2857 = vadd.f32 %v2802, %v2841
  %v2858 = vadd.f32 %v2803, %v2842
  %v2859 = vadd.f32 %v2804, %v2843
  %v2860 = vadd.f32 %v2805, %v2844
  %v2861 = vadd.f32 %v2806, %v2845
  %v2862 = vadd.f32 %v2807, %v2846
  %v2863 = vadd.f32 %v2808, %v2847
  %v2864 = vadd.f32 %v2809, %v2848
  %v2865 = vadd.f32 %v2810, %v2849
  %v2866 = vadd.f32 %v2811, %v2850
  %v2867 = vadd.f32 %v2812, %v2851
  %v2868 = vadd.f32 %v2813, %v2852
  %v2869 = vadd.f32 %v2814, %v2853
  %s2870 = scalar_lea.vmem %s7, 3
  %v2871 = vld [vmem:[%s2870] ss:$8 sm:$0xf]
  %v2873 = vlaneseq
  %v2874 = vshrl.u32 %v2873, 7
  %v2875 = vsub.s32 0, %v2874
  %v2876 = vrot.slane %v2871, %v2875
  %v2877 = vlaneseq
  %v2878 = vshrl.u32 %v2877, 7
  %v2879 = vsub.s32 1, %v2878
  %v2880 = vrot.slane %v2871, %v2879
  %v2881 = vlaneseq
  %v2882 = vshrl.u32 %v2881, 7
  %v2883 = vsub.s32 2, %v2882
  %v2884 = vrot.slane %v2871, %v2883
  %v2885 = vlaneseq
  %v2886 = vshrl.u32 %v2885, 7
  %v2887 = vsub.s32 3, %v2886
  %v2888 = vrot.slane %v2871, %v2887
  %v2893 = vmul.f32 %v1974, %v2876
  %v2894 = vmul.f32 %v1975, %v2880
  %v2895 = vmul.f32 %v1976, %v2884
  %v2896 = vmul.f32 %v1977, %v2888
  %v2897 = vmul.f32 %v1978, %v2876
  %v2898 = vmul.f32 %v1979, %v2880
  %v2899 = vmul.f32 %v1980, %v2884
  %v2900 = vmul.f32 %v1981, %v2888
  %v2901 = vmul.f32 %v1982, %v2876
  %v2902 = vmul.f32 %v1983, %v2880
  %v2903 = vmul.f32 %v1984, %v2884
  %v2904 = vmul.f32 %v1985, %v2888
  %v2905 = vmul.f32 %v1986, %v2876
  %v2906 = vmul.f32 %v1987, %v2880
  %v2907 = vmul.f32 %v1988, %v2884
  %v2908 = vmul.f32 %v1989, %v2888
  %v2909 = vadd.f32 %v2854, %v2893
  %v2910 = vadd.f32 %v2855, %v2894
  %v2911 = vadd.f32 %v2856, %v2895
  %v2912 = vadd.f32 %v2857, %v2896
  %v2913 = vadd.f32 %v2858, %v2897
  %v2914 = vadd.f32 %v2859, %v2898
  %v2915 = vadd.f32 %v2860, %v2899
  %v2916 = vadd.f32 %v2861, %v2900
  %v2917 = vadd.f32 %v2862, %v2901
  %v2918 = vadd.f32 %v2863, %v2902
  %v2919 = vadd.f32 %v2864, %v2903
  %v2920 = vadd.f32 %v2865, %v2904
  %v2921 = vadd.f32 %v2866, %v2905
  %v2922 = vadd.f32 %v2867, %v2906
  %v2923 = vadd.f32 %v2868, %v2907
  %v2924 = vadd.f32 %v2869, %v2908
  %s2925 = scalar_lea.vmem %s7, 4
  %v2926 = vld [vmem:[%s2925] ss:$8 sm:$0xf]
  %v2928 = vlaneseq
  %v2929 = vshrl.u32 %v2928, 7
  %v2930 = vsub.s32 0, %v2929
  %v2931 = vrot.slane %v2926, %v2930
  %v2932 = vlaneseq
  %v2933 = vshrl.u32 %v2932, 7
  %v2934 = vsub.s32 1, %v2933
  %v2935 = vrot.slane %v2926, %v2934
  %v2936 = vlaneseq
  %v2937 = vshrl.u32 %v2936, 7
  %v2938 = vsub.s32 2, %v2937
  %v2939 = vrot.slane %v2926, %v2938
  %v2940 = vlaneseq
  %v2941 = vshrl.u32 %v2940, 7
  %v2942 = vsub.s32 3, %v2941
  %v2943 = vrot.slane %v2926, %v2942
  %v2948 = vmul.f32 %v2194, %v2931
  %v2949 = vmul.f32 %v2195, %v2935
  %v2950 = vmul.f32 %v2196, %v2939
  %v2951 = vmul.f32 %v2197, %v2943
  %v2952 = vmul.f32 %v2198, %v2931
  %v2953 = vmul.f32 %v2199, %v2935
  %v2954 = vmul.f32 %v2200, %v2939
  %v2955 = vmul.f32 %v2201, %v2943
  %v2956 = vmul.f32 %v2202, %v2931
  %v2957 = vmul.f32 %v2203, %v2935
  %v2958 = vmul.f32 %v2204, %v2939
  %v2959 = vmul.f32 %v2205, %v2943
  %v2960 = vmul.f32 %v2206, %v2931
  %v2961 = vmul.f32 %v2207, %v2935
  %v2962 = vmul.f32 %v2208, %v2939
  %v2963 = vmul.f32 %v2209, %v2943
  %v2964 = vadd.f32 %v2909, %v2948
  %v2965 = vadd.f32 %v2910, %v2949
  %v2966 = vadd.f32 %v2911, %v2950
  %v2967 = vadd.f32 %v2912, %v2951
  %v2968 = vadd.f32 %v2913, %v2952
  %v2969 = vadd.f32 %v2914, %v2953
  %v2970 = vadd.f32 %v2915, %v2954
  %v2971 = vadd.f32 %v2916, %v2955
  %v2972 = vadd.f32 %v2917, %v2956
  %v2973 = vadd.f32 %v2918, %v2957
  %v2974 = vadd.f32 %v2919, %v2958
  %v2975 = vadd.f32 %v2920, %v2959
  %v2976 = vadd.f32 %v2921, %v2960
  %v2977 = vadd.f32 %v2922, %v2961
  %v2978 = vadd.f32 %v2923, %v2962
  %v2979 = vadd.f32 %v2924, %v2963
  %s2980 = scalar_lea.vmem %s7, 5
  %v2981 = vld [vmem:[%s2980] ss:$8 sm:$0xf]
  %v2983 = vlaneseq
  %v2984 = vshrl.u32 %v2983, 7
  %v2985 = vsub.s32 0, %v2984
  %v2986 = vrot.slane %v2981, %v2985
  %v2987 = vlaneseq
  %v2988 = vshrl.u32 %v2987, 7
  %v2989 = vsub.s32 1, %v2988
  %v2990 = vrot.slane %v2981, %v2989
  %v2991 = vlaneseq
  %v2992 = vshrl.u32 %v2991, 7
  %v2993 = vsub.s32 2, %v2992
  %v2994 = vrot.slane %v2981, %v2993
  %v2995 = vlaneseq
  %v2996 = vshrl.u32 %v2995, 7
  %v2997 = vsub.s32 3, %v2996
  %v2998 = vrot.slane %v2981, %v2997
  %v3003 = vmul.f32 %v2210, %v2986
  %v3004 = vmul.f32 %v2211, %v2990
  %v3005 = vmul.f32 %v2212, %v2994
  %v3006 = vmul.f32 %v2213, %v2998
  %v3007 = vmul.f32 %v2214, %v2986
  %v3008 = vmul.f32 %v2215, %v2990
  %v3009 = vmul.f32 %v2216, %v2994
  %v3010 = vmul.f32 %v2217, %v2998
  %v3011 = vmul.f32 %v2218, %v2986
  %v3012 = vmul.f32 %v2219, %v2990
  %v3013 = vmul.f32 %v2220, %v2994
  %v3014 = vmul.f32 %v2221, %v2998
  %v3015 = vmul.f32 %v2222, %v2986
  %v3016 = vmul.f32 %v2223, %v2990
  %v3017 = vmul.f32 %v2224, %v2994
  %v3018 = vmul.f32 %v2225, %v2998
  %v3019 = vadd.f32 %v2964, %v3003
  %v3020 = vadd.f32 %v2965, %v3004
  %v3021 = vadd.f32 %v2966, %v3005
  %v3022 = vadd.f32 %v2967, %v3006
  %v3023 = vadd.f32 %v2968, %v3007
  %v3024 = vadd.f32 %v2969, %v3008
  %v3025 = vadd.f32 %v2970, %v3009
  %v3026 = vadd.f32 %v2971, %v3010
  %v3027 = vadd.f32 %v2972, %v3011
  %v3028 = vadd.f32 %v2973, %v3012
  %v3029 = vadd.f32 %v2974, %v3013
  %v3030 = vadd.f32 %v2975, %v3014
  %v3031 = vadd.f32 %v2976, %v3015
  %v3032 = vadd.f32 %v2977, %v3016
  %v3033 = vadd.f32 %v2978, %v3017
  %v3034 = vadd.f32 %v2979, %v3018
  %s3035 = scalar_lea.vmem %s7, 6
  %v3036 = vld [vmem:[%s3035] ss:$8 sm:$0xf]
  %v3038 = vlaneseq
  %v3039 = vshrl.u32 %v3038, 7
  %v3040 = vsub.s32 0, %v3039
  %v3041 = vrot.slane %v3036, %v3040
  %v3042 = vlaneseq
  %v3043 = vshrl.u32 %v3042, 7
  %v3044 = vsub.s32 1, %v3043
  %v3045 = vrot.slane %v3036, %v3044
  %v3046 = vlaneseq
  %v3047 = vshrl.u32 %v3046, 7
  %v3048 = vsub.s32 2, %v3047
  %v3049 = vrot.slane %v3036, %v3048
  %v3050 = vlaneseq
  %v3051 = vshrl.u32 %v3050, 7
  %v3052 = vsub.s32 3, %v3051
  %v3053 = vrot.slane %v3036, %v3052
  %v3058 = vmul.f32 %v2238, %v3041
  %v3059 = vmul.f32 %v2239, %v3045
  %v3060 = vmul.f32 %v2240, %v3049
  %v3061 = vmul.f32 %v2241, %v3053
  %v3062 = vmul.f32 %v2242, %v3041
  %v3063 = vmul.f32 %v2243, %v3045
  %v3064 = vmul.f32 %v2244, %v3049
  %v3065 = vmul.f32 %v2245, %v3053
  %v3066 = vmul.f32 %v2246, %v3041
  %v3067 = vmul.f32 %v2247, %v3045
  %v3068 = vmul.f32 %v2248, %v3049
  %v3069 = vmul.f32 %v2249, %v3053
  %v3070 = vmul.f32 %v2250, %v3041
  %v3071 = vmul.f32 %v2251, %v3045
  %v3072 = vmul.f32 %v2252, %v3049
  %v3073 = vmul.f32 %v2253, %v3053
  %v3074 = vadd.f32 %v3019, %v3058
  %v3075 = vadd.f32 %v3020, %v3059
  %v3076 = vadd.f32 %v3021, %v3060
  %v3077 = vadd.f32 %v3022, %v3061
  %v3078 = vadd.f32 %v3023, %v3062
  %v3079 = vadd.f32 %v3024, %v3063
  %v3080 = vadd.f32 %v3025, %v3064
  %v3081 = vadd.f32 %v3026, %v3065
  %v3082 = vadd.f32 %v3027, %v3066
  %v3083 = vadd.f32 %v3028, %v3067
  %v3084 = vadd.f32 %v3029, %v3068
  %v3085 = vadd.f32 %v3030, %v3069
  %v3086 = vadd.f32 %v3031, %v3070
  %v3087 = vadd.f32 %v3032, %v3071
  %v3088 = vadd.f32 %v3033, %v3072
  %v3089 = vadd.f32 %v3034, %v3073
  %v3090 = vld [vmem:[%s8] sm:$0xf]
  %v3092 = vlaneseq
  %v3093 = vshrl.u32 %v3092, 7
  %v3094 = vsub.s32 0, %v3093
  %v3095 = vrot.slane %v3090, %v3094
  %v3096 = vlaneseq
  %v3097 = vshrl.u32 %v3096, 7
  %v3098 = vsub.s32 1, %v3097
  %v3099 = vrot.slane %v3090, %v3098
  %v3100 = vlaneseq
  %v3101 = vshrl.u32 %v3100, 7
  %v3102 = vsub.s32 2, %v3101
  %v3103 = vrot.slane %v3090, %v3102
  %v3104 = vlaneseq
  %v3105 = vshrl.u32 %v3104, 7
  %v3106 = vsub.s32 3, %v3105
  %v3107 = vrot.slane %v3090, %v3106
  %v3112 = vadd.f32 %v3074, %v3095
  %v3113 = vadd.f32 %v3075, %v3099
  %v3114 = vadd.f32 %v3076, %v3103
  %v3115 = vadd.f32 %v3077, %v3107
  %v3116 = vadd.f32 %v3078, %v3095
  %v3117 = vadd.f32 %v3079, %v3099
  %v3118 = vadd.f32 %v3080, %v3103
  %v3119 = vadd.f32 %v3081, %v3107
  %v3120 = vadd.f32 %v3082, %v3095
  %v3121 = vadd.f32 %v3083, %v3099
  %v3122 = vadd.f32 %v3084, %v3103
  %v3123 = vadd.f32 %v3085, %v3107
  %v3124 = vadd.f32 %v3086, %v3095
  %v3125 = vadd.f32 %v3087, %v3099
  %v3126 = vadd.f32 %v3088, %v3103
  %v3127 = vadd.f32 %v3089, %v3107
  %v3128 = vrot.slane %v3112, 5
  %v3129 = vrot.slane %v3113, 5
  %v3130 = vrot.slane %v3114, 5
  %v3131 = vrot.slane %v3115, 5
  %v3132 = vrot.slane %v3116, 5
  %v3133 = vrot.slane %v3117, 5
  %v3134 = vrot.slane %v3118, 5
  %v3135 = vrot.slane %v3119, 5
  %v3136 = vrot.slane %v3120, 5
  %v3137 = vrot.slane %v3121, 5
  %v3138 = vrot.slane %v3122, 5
  %v3139 = vrot.slane %v3123, 5
  %v3140 = vrot.slane %v3124, 5
  %v3141 = vrot.slane %v3125, 5
  %v3142 = vrot.slane %v3126, 5
  %v3143 = vrot.slane %v3127, 5
  %vm3144 = vcmp.lt.s32.totalorder %v60, 3
  %v3145 = vsel %vm3144, %v3136, %v3140
  %v3146 = vsel %vm3144, %v3137, %v3141
  %v3147 = vsel %vm3144, %v3138, %v3142
  %v3148 = vsel %vm3144, %v3139, %v3143
  %v3149 = vsel %vm3144, %v3132, %v3136
  %v3150 = vsel %vm3144, %v3133, %v3137
  %v3151 = vsel %vm3144, %v3134, %v3138
  %v3152 = vsel %vm3144, %v3135, %v3139
  %v3153 = vsel %vm3144, %v3128, %v3132
  %v3154 = vsel %vm3144, %v3129, %v3133
  %v3155 = vsel %vm3144, %v3130, %v3134
  %v3156 = vsel %vm3144, %v3131, %v3135
  %v3157 = vsel %vm3144, %v3140, %v3128
  %v3158 = vsel %vm3144, %v3141, %v3129
  %v3159 = vsel %vm3144, %v3142, %v3130
  %v3160 = vsel %vm3144, %v3143, %v3131
  %vm3161 = vcmp.ge.s32.totalorder %v71, 3
  %vm3162 = vcmp.ge.s32.totalorder %v72, 3
  %vm3163 = vcmp.ge.s32.totalorder %v73, 3
  %vm3164 = vcmp.ge.s32.totalorder %v74, 3
  %v3165 = vsel %vm3161, 1, 0
  %v3166 = vsel %vm3162, 1, 0
  %v3167 = vsel %vm3163, 1, 0
  %v3168 = vsel %vm3164, 1, 0
  %v3169 = vcvt.s32.f32 %v3165
  %v3170 = vcvt.s32.f32 %v3166
  %v3171 = vcvt.s32.f32 %v3167
  %v3172 = vcvt.s32.f32 %v3168
  %v3173 = vmul.f32 %v3157, %v3169
  %v3174 = vmul.f32 %v3158, %v3169
  %v3175 = vmul.f32 %v3159, %v3169
  %v3176 = vmul.f32 %v3160, %v3169
  %v3177 = vmul.f32 %v3153, %v3170
  %v3178 = vmul.f32 %v3154, %v3170
  %v3179 = vmul.f32 %v3155, %v3170
  %v3180 = vmul.f32 %v3156, %v3170
  %v3181 = vmul.f32 %v3149, %v3171
  %v3182 = vmul.f32 %v3150, %v3171
  %v3183 = vmul.f32 %v3151, %v3171
  %v3184 = vmul.f32 %v3152, %v3171
  %v3185 = vmul.f32 %v3145, %v3172
  %v3186 = vmul.f32 %v3146, %v3172
  %v3187 = vmul.f32 %v3147, %v3172
  %v3188 = vmul.f32 %v3148, %v3172
  %v3189 = vld [vmem:[%s9] ss:$8 sm:$0xf]
  %v3191 = vlaneseq
  %v3192 = vshrl.u32 %v3191, 7
  %v3193 = vsub.s32 0, %v3192
  %v3194 = vrot.slane %v3189, %v3193
  %v3195 = vlaneseq
  %v3196 = vshrl.u32 %v3195, 7
  %v3197 = vsub.s32 1, %v3196
  %v3198 = vrot.slane %v3189, %v3197
  %v3199 = vlaneseq
  %v3200 = vshrl.u32 %v3199, 7
  %v3201 = vsub.s32 2, %v3200
  %v3202 = vrot.slane %v3189, %v3201
  %v3203 = vlaneseq
  %v3204 = vshrl.u32 %v3203, 7
  %v3205 = vsub.s32 3, %v3204
  %v3206 = vrot.slane %v3189, %v3205
  %v3211 = vmul.f32 %v3173, %v3194
  %v3212 = vmul.f32 %v3174, %v3198
  %v3213 = vmul.f32 %v3175, %v3202
  %v3214 = vmul.f32 %v3176, %v3206
  %v3215 = vmul.f32 %v3177, %v3194
  %v3216 = vmul.f32 %v3178, %v3198
  %v3217 = vmul.f32 %v3179, %v3202
  %v3218 = vmul.f32 %v3180, %v3206
  %v3219 = vmul.f32 %v3181, %v3194
  %v3220 = vmul.f32 %v3182, %v3198
  %v3221 = vmul.f32 %v3183, %v3202
  %v3222 = vmul.f32 %v3184, %v3206
  %v3223 = vmul.f32 %v3185, %v3194
  %v3224 = vmul.f32 %v3186, %v3198
  %v3225 = vmul.f32 %v3187, %v3202
  %v3226 = vmul.f32 %v3188, %v3206
  %v3227 = vrot.slane %v3112, 6
  %v3228 = vrot.slane %v3113, 6
  %v3229 = vrot.slane %v3114, 6
  %v3230 = vrot.slane %v3115, 6
  %v3231 = vrot.slane %v3116, 6
  %v3232 = vrot.slane %v3117, 6
  %v3233 = vrot.slane %v3118, 6
  %v3234 = vrot.slane %v3119, 6
  %v3235 = vrot.slane %v3120, 6
  %v3236 = vrot.slane %v3121, 6
  %v3237 = vrot.slane %v3122, 6
  %v3238 = vrot.slane %v3123, 6
  %v3239 = vrot.slane %v3124, 6
  %v3240 = vrot.slane %v3125, 6
  %v3241 = vrot.slane %v3126, 6
  %v3242 = vrot.slane %v3127, 6
  %v3243 = vsel %vm624, %v3235, %v3239
  %v3244 = vsel %vm624, %v3236, %v3240
  %v3245 = vsel %vm624, %v3237, %v3241
  %v3246 = vsel %vm624, %v3238, %v3242
  %v3247 = vsel %vm624, %v3231, %v3235
  %v3248 = vsel %vm624, %v3232, %v3236
  %v3249 = vsel %vm624, %v3233, %v3237
  %v3250 = vsel %vm624, %v3234, %v3238
  %v3251 = vsel %vm624, %v3227, %v3231
  %v3252 = vsel %vm624, %v3228, %v3232
  %v3253 = vsel %vm624, %v3229, %v3233
  %v3254 = vsel %vm624, %v3230, %v3234
  %v3255 = vsel %vm624, %v3239, %v3227
  %v3256 = vsel %vm624, %v3240, %v3228
  %v3257 = vsel %vm624, %v3241, %v3229
  %v3258 = vsel %vm624, %v3242, %v3230
  %v3259 = vmul.f32 %v3255, %v649
  %v3260 = vmul.f32 %v3256, %v649
  %v3261 = vmul.f32 %v3257, %v649
  %v3262 = vmul.f32 %v3258, %v649
  %v3263 = vmul.f32 %v3251, %v650
  %v3264 = vmul.f32 %v3252, %v650
  %v3265 = vmul.f32 %v3253, %v650
  %v3266 = vmul.f32 %v3254, %v650
  %v3267 = vmul.f32 %v3247, %v651
  %v3268 = vmul.f32 %v3248, %v651
  %v3269 = vmul.f32 %v3249, %v651
  %v3270 = vmul.f32 %v3250, %v651
  %v3271 = vmul.f32 %v3243, %v652
  %v3272 = vmul.f32 %v3244, %v652
  %v3273 = vmul.f32 %v3245, %v652
  %v3274 = vmul.f32 %v3246, %v652
  %s3275 = scalar_lea.vmem %s9, 1
  %v3276 = vld [vmem:[%s3275] ss:$8 sm:$0xf]
  %v3278 = vlaneseq
  %v3279 = vshrl.u32 %v3278, 7
  %v3280 = vsub.s32 0, %v3279
  %v3281 = vrot.slane %v3276, %v3280
  %v3282 = vlaneseq
  %v3283 = vshrl.u32 %v3282, 7
  %v3284 = vsub.s32 1, %v3283
  %v3285 = vrot.slane %v3276, %v3284
  %v3286 = vlaneseq
  %v3287 = vshrl.u32 %v3286, 7
  %v3288 = vsub.s32 2, %v3287
  %v3289 = vrot.slane %v3276, %v3288
  %v3290 = vlaneseq
  %v3291 = vshrl.u32 %v3290, 7
  %v3292 = vsub.s32 3, %v3291
  %v3293 = vrot.slane %v3276, %v3292
  %v3298 = vmul.f32 %v3259, %v3281
  %v3299 = vmul.f32 %v3260, %v3285
  %v3300 = vmul.f32 %v3261, %v3289
  %v3301 = vmul.f32 %v3262, %v3293
  %v3302 = vmul.f32 %v3263, %v3281
  %v3303 = vmul.f32 %v3264, %v3285
  %v3304 = vmul.f32 %v3265, %v3289
  %v3305 = vmul.f32 %v3266, %v3293
  %v3306 = vmul.f32 %v3267, %v3281
  %v3307 = vmul.f32 %v3268, %v3285
  %v3308 = vmul.f32 %v3269, %v3289
  %v3309 = vmul.f32 %v3270, %v3293
  %v3310 = vmul.f32 %v3271, %v3281
  %v3311 = vmul.f32 %v3272, %v3285
  %v3312 = vmul.f32 %v3273, %v3289
  %v3313 = vmul.f32 %v3274, %v3293
  %v3314 = vadd.f32 %v3211, %v3298
  %v3315 = vadd.f32 %v3212, %v3299
  %v3316 = vadd.f32 %v3213, %v3300
  %v3317 = vadd.f32 %v3214, %v3301
  %v3318 = vadd.f32 %v3215, %v3302
  %v3319 = vadd.f32 %v3216, %v3303
  %v3320 = vadd.f32 %v3217, %v3304
  %v3321 = vadd.f32 %v3218, %v3305
  %v3322 = vadd.f32 %v3219, %v3306
  %v3323 = vadd.f32 %v3220, %v3307
  %v3324 = vadd.f32 %v3221, %v3308
  %v3325 = vadd.f32 %v3222, %v3309
  %v3326 = vadd.f32 %v3223, %v3310
  %v3327 = vadd.f32 %v3224, %v3311
  %v3328 = vadd.f32 %v3225, %v3312
  %v3329 = vadd.f32 %v3226, %v3313
  %v3330 = vrot.slane %v3112, 7
  %v3331 = vrot.slane %v3113, 7
  %v3332 = vrot.slane %v3114, 7
  %v3333 = vrot.slane %v3115, 7
  %v3334 = vrot.slane %v3116, 7
  %v3335 = vrot.slane %v3117, 7
  %v3336 = vrot.slane %v3118, 7
  %v3337 = vrot.slane %v3119, 7
  %v3338 = vrot.slane %v3120, 7
  %v3339 = vrot.slane %v3121, 7
  %v3340 = vrot.slane %v3122, 7
  %v3341 = vrot.slane %v3123, 7
  %v3342 = vrot.slane %v3124, 7
  %v3343 = vrot.slane %v3125, 7
  %v3344 = vrot.slane %v3126, 7
  %v3345 = vrot.slane %v3127, 7
  %v3346 = vsel %vm944, %v3338, %v3342
  %v3347 = vsel %vm944, %v3339, %v3343
  %v3348 = vsel %vm944, %v3340, %v3344
  %v3349 = vsel %vm944, %v3341, %v3345
  %v3350 = vsel %vm944, %v3334, %v3338
  %v3351 = vsel %vm944, %v3335, %v3339
  %v3352 = vsel %vm944, %v3336, %v3340
  %v3353 = vsel %vm944, %v3337, %v3341
  %v3354 = vsel %vm944, %v3330, %v3334
  %v3355 = vsel %vm944, %v3331, %v3335
  %v3356 = vsel %vm944, %v3332, %v3336
  %v3357 = vsel %vm944, %v3333, %v3337
  %v3358 = vsel %vm944, %v3342, %v3330
  %v3359 = vsel %vm944, %v3343, %v3331
  %v3360 = vsel %vm944, %v3344, %v3332
  %v3361 = vsel %vm944, %v3345, %v3333
  %v3362 = vmul.f32 %v3358, %v969
  %v3363 = vmul.f32 %v3359, %v969
  %v3364 = vmul.f32 %v3360, %v969
  %v3365 = vmul.f32 %v3361, %v969
  %v3366 = vmul.f32 %v3354, %v970
  %v3367 = vmul.f32 %v3355, %v970
  %v3368 = vmul.f32 %v3356, %v970
  %v3369 = vmul.f32 %v3357, %v970
  %v3370 = vmul.f32 %v3350, %v971
  %v3371 = vmul.f32 %v3351, %v971
  %v3372 = vmul.f32 %v3352, %v971
  %v3373 = vmul.f32 %v3353, %v971
  %v3374 = vmul.f32 %v3346, %v972
  %v3375 = vmul.f32 %v3347, %v972
  %v3376 = vmul.f32 %v3348, %v972
  %v3377 = vmul.f32 %v3349, %v972
  %s3378 = scalar_lea.vmem %s9, 2
  %v3379 = vld [vmem:[%s3378] ss:$8 sm:$0xf]
  %v3381 = vlaneseq
  %v3382 = vshrl.u32 %v3381, 7
  %v3383 = vsub.s32 0, %v3382
  %v3384 = vrot.slane %v3379, %v3383
  %v3385 = vlaneseq
  %v3386 = vshrl.u32 %v3385, 7
  %v3387 = vsub.s32 1, %v3386
  %v3388 = vrot.slane %v3379, %v3387
  %v3389 = vlaneseq
  %v3390 = vshrl.u32 %v3389, 7
  %v3391 = vsub.s32 2, %v3390
  %v3392 = vrot.slane %v3379, %v3391
  %v3393 = vlaneseq
  %v3394 = vshrl.u32 %v3393, 7
  %v3395 = vsub.s32 3, %v3394
  %v3396 = vrot.slane %v3379, %v3395
  %v3401 = vmul.f32 %v3362, %v3384
  %v3402 = vmul.f32 %v3363, %v3388
  %v3403 = vmul.f32 %v3364, %v3392
  %v3404 = vmul.f32 %v3365, %v3396
  %v3405 = vmul.f32 %v3366, %v3384
  %v3406 = vmul.f32 %v3367, %v3388
  %v3407 = vmul.f32 %v3368, %v3392
  %v3408 = vmul.f32 %v3369, %v3396
  %v3409 = vmul.f32 %v3370, %v3384
  %v3410 = vmul.f32 %v3371, %v3388
  %v3411 = vmul.f32 %v3372, %v3392
  %v3412 = vmul.f32 %v3373, %v3396
  %v3413 = vmul.f32 %v3374, %v3384
  %v3414 = vmul.f32 %v3375, %v3388
  %v3415 = vmul.f32 %v3376, %v3392
  %v3416 = vmul.f32 %v3377, %v3396
  %v3417 = vadd.f32 %v3314, %v3401
  %v3418 = vadd.f32 %v3315, %v3402
  %v3419 = vadd.f32 %v3316, %v3403
  %v3420 = vadd.f32 %v3317, %v3404
  %v3421 = vadd.f32 %v3318, %v3405
  %v3422 = vadd.f32 %v3319, %v3406
  %v3423 = vadd.f32 %v3320, %v3407
  %v3424 = vadd.f32 %v3321, %v3408
  %v3425 = vadd.f32 %v3322, %v3409
  %v3426 = vadd.f32 %v3323, %v3410
  %v3427 = vadd.f32 %v3324, %v3411
  %v3428 = vadd.f32 %v3325, %v3412
  %v3429 = vadd.f32 %v3326, %v3413
  %v3430 = vadd.f32 %v3327, %v3414
  %v3431 = vadd.f32 %v3328, %v3415
  %v3432 = vadd.f32 %v3329, %v3416
  %s3433 = scalar_lea.vmem %s9, 3
  %v3434 = vld [vmem:[%s3433] ss:$8 sm:$0xf]
  %v3436 = vlaneseq
  %v3437 = vshrl.u32 %v3436, 7
  %v3438 = vsub.s32 0, %v3437
  %v3439 = vrot.slane %v3434, %v3438
  %v3440 = vlaneseq
  %v3441 = vshrl.u32 %v3440, 7
  %v3442 = vsub.s32 1, %v3441
  %v3443 = vrot.slane %v3434, %v3442
  %v3444 = vlaneseq
  %v3445 = vshrl.u32 %v3444, 7
  %v3446 = vsub.s32 2, %v3445
  %v3447 = vrot.slane %v3434, %v3446
  %v3448 = vlaneseq
  %v3449 = vshrl.u32 %v3448, 7
  %v3450 = vsub.s32 3, %v3449
  %v3451 = vrot.slane %v3434, %v3450
  %v3456 = vmul.f32 %v3112, %v3439
  %v3457 = vmul.f32 %v3113, %v3443
  %v3458 = vmul.f32 %v3114, %v3447
  %v3459 = vmul.f32 %v3115, %v3451
  %v3460 = vmul.f32 %v3116, %v3439
  %v3461 = vmul.f32 %v3117, %v3443
  %v3462 = vmul.f32 %v3118, %v3447
  %v3463 = vmul.f32 %v3119, %v3451
  %v3464 = vmul.f32 %v3120, %v3439
  %v3465 = vmul.f32 %v3121, %v3443
  %v3466 = vmul.f32 %v3122, %v3447
  %v3467 = vmul.f32 %v3123, %v3451
  %v3468 = vmul.f32 %v3124, %v3439
  %v3469 = vmul.f32 %v3125, %v3443
  %v3470 = vmul.f32 %v3126, %v3447
  %v3471 = vmul.f32 %v3127, %v3451
  %v3472 = vadd.f32 %v3417, %v3456
  %v3473 = vadd.f32 %v3418, %v3457
  %v3474 = vadd.f32 %v3419, %v3458
  %v3475 = vadd.f32 %v3420, %v3459
  %v3476 = vadd.f32 %v3421, %v3460
  %v3477 = vadd.f32 %v3422, %v3461
  %v3478 = vadd.f32 %v3423, %v3462
  %v3479 = vadd.f32 %v3424, %v3463
  %v3480 = vadd.f32 %v3425, %v3464
  %v3481 = vadd.f32 %v3426, %v3465
  %v3482 = vadd.f32 %v3427, %v3466
  %v3483 = vadd.f32 %v3428, %v3467
  %v3484 = vadd.f32 %v3429, %v3468
  %v3485 = vadd.f32 %v3430, %v3469
  %v3486 = vadd.f32 %v3431, %v3470
  %v3487 = vadd.f32 %v3432, %v3471
  %v3488 = vrot.slane %v3112, 1
  %v3489 = vrot.slane %v3113, 1
  %v3490 = vrot.slane %v3114, 1
  %v3491 = vrot.slane %v3115, 1
  %v3492 = vrot.slane %v3116, 1
  %v3493 = vrot.slane %v3117, 1
  %v3494 = vrot.slane %v3118, 1
  %v3495 = vrot.slane %v3119, 1
  %v3496 = vrot.slane %v3120, 1
  %v3497 = vrot.slane %v3121, 1
  %v3498 = vrot.slane %v3122, 1
  %v3499 = vrot.slane %v3123, 1
  %v3500 = vrot.slane %v3124, 1
  %v3501 = vrot.slane %v3125, 1
  %v3502 = vrot.slane %v3126, 1
  %v3503 = vrot.slane %v3127, 1
  %v3504 = vsel %vm1555, %v3496, %v3500
  %v3505 = vsel %vm1555, %v3497, %v3501
  %v3506 = vsel %vm1555, %v3498, %v3502
  %v3507 = vsel %vm1555, %v3499, %v3503
  %v3508 = vsel %vm1555, %v3492, %v3496
  %v3509 = vsel %vm1555, %v3493, %v3497
  %v3510 = vsel %vm1555, %v3494, %v3498
  %v3511 = vsel %vm1555, %v3495, %v3499
  %v3512 = vsel %vm1555, %v3488, %v3492
  %v3513 = vsel %vm1555, %v3489, %v3493
  %v3514 = vsel %vm1555, %v3490, %v3494
  %v3515 = vsel %vm1555, %v3491, %v3495
  %v3516 = vsel %vm1555, %v3500, %v3488
  %v3517 = vsel %vm1555, %v3501, %v3489
  %v3518 = vsel %vm1555, %v3502, %v3490
  %v3519 = vsel %vm1555, %v3503, %v3491
  %v3520 = vmul.f32 %v3512, %v1580
  %v3521 = vmul.f32 %v3513, %v1580
  %v3522 = vmul.f32 %v3514, %v1580
  %v3523 = vmul.f32 %v3515, %v1580
  %v3524 = vmul.f32 %v3508, %v1581
  %v3525 = vmul.f32 %v3509, %v1581
  %v3526 = vmul.f32 %v3510, %v1581
  %v3527 = vmul.f32 %v3511, %v1581
  %v3528 = vmul.f32 %v3504, %v1582
  %v3529 = vmul.f32 %v3505, %v1582
  %v3530 = vmul.f32 %v3506, %v1582
  %v3531 = vmul.f32 %v3507, %v1582
  %v3532 = vmul.f32 %v3516, %v1583
  %v3533 = vmul.f32 %v3517, %v1583
  %v3534 = vmul.f32 %v3518, %v1583
  %v3535 = vmul.f32 %v3519, %v1583
  %s3536 = scalar_lea.vmem %s9, 4
  %v3537 = vld [vmem:[%s3536] ss:$8 sm:$0xf]
  %v3539 = vlaneseq
  %v3540 = vshrl.u32 %v3539, 7
  %v3541 = vsub.s32 0, %v3540
  %v3542 = vrot.slane %v3537, %v3541
  %v3543 = vlaneseq
  %v3544 = vshrl.u32 %v3543, 7
  %v3545 = vsub.s32 1, %v3544
  %v3546 = vrot.slane %v3537, %v3545
  %v3547 = vlaneseq
  %v3548 = vshrl.u32 %v3547, 7
  %v3549 = vsub.s32 2, %v3548
  %v3550 = vrot.slane %v3537, %v3549
  %v3551 = vlaneseq
  %v3552 = vshrl.u32 %v3551, 7
  %v3553 = vsub.s32 3, %v3552
  %v3554 = vrot.slane %v3537, %v3553
  %v3559 = vmul.f32 %v3520, %v3542
  %v3560 = vmul.f32 %v3521, %v3546
  %v3561 = vmul.f32 %v3522, %v3550
  %v3562 = vmul.f32 %v3523, %v3554
  %v3563 = vmul.f32 %v3524, %v3542
  %v3564 = vmul.f32 %v3525, %v3546
  %v3565 = vmul.f32 %v3526, %v3550
  %v3566 = vmul.f32 %v3527, %v3554
  %v3567 = vmul.f32 %v3528, %v3542
  %v3568 = vmul.f32 %v3529, %v3546
  %v3569 = vmul.f32 %v3530, %v3550
  %v3570 = vmul.f32 %v3531, %v3554
  %v3571 = vmul.f32 %v3532, %v3542
  %v3572 = vmul.f32 %v3533, %v3546
  %v3573 = vmul.f32 %v3534, %v3550
  %v3574 = vmul.f32 %v3535, %v3554
  %v3575 = vadd.f32 %v3472, %v3559
  %v3576 = vadd.f32 %v3473, %v3560
  %v3577 = vadd.f32 %v3474, %v3561
  %v3578 = vadd.f32 %v3475, %v3562
  %v3579 = vadd.f32 %v3476, %v3563
  %v3580 = vadd.f32 %v3477, %v3564
  %v3581 = vadd.f32 %v3478, %v3565
  %v3582 = vadd.f32 %v3479, %v3566
  %v3583 = vadd.f32 %v3480, %v3567
  %v3584 = vadd.f32 %v3481, %v3568
  %v3585 = vadd.f32 %v3482, %v3569
  %v3586 = vadd.f32 %v3483, %v3570
  %v3587 = vadd.f32 %v3484, %v3571
  %v3588 = vadd.f32 %v3485, %v3572
  %v3589 = vadd.f32 %v3486, %v3573
  %v3590 = vadd.f32 %v3487, %v3574
  %v3591 = vrot.slane %v3112, 2
  %v3592 = vrot.slane %v3113, 2
  %v3593 = vrot.slane %v3114, 2
  %v3594 = vrot.slane %v3115, 2
  %v3595 = vrot.slane %v3116, 2
  %v3596 = vrot.slane %v3117, 2
  %v3597 = vrot.slane %v3118, 2
  %v3598 = vrot.slane %v3119, 2
  %v3599 = vrot.slane %v3120, 2
  %v3600 = vrot.slane %v3121, 2
  %v3601 = vrot.slane %v3122, 2
  %v3602 = vrot.slane %v3123, 2
  %v3603 = vrot.slane %v3124, 2
  %v3604 = vrot.slane %v3125, 2
  %v3605 = vrot.slane %v3126, 2
  %v3606 = vrot.slane %v3127, 2
  %v3607 = vsel %vm1891, %v3599, %v3603
  %v3608 = vsel %vm1891, %v3600, %v3604
  %v3609 = vsel %vm1891, %v3601, %v3605
  %v3610 = vsel %vm1891, %v3602, %v3606
  %v3611 = vsel %vm1891, %v3595, %v3599
  %v3612 = vsel %vm1891, %v3596, %v3600
  %v3613 = vsel %vm1891, %v3597, %v3601
  %v3614 = vsel %vm1891, %v3598, %v3602
  %v3615 = vsel %vm1891, %v3591, %v3595
  %v3616 = vsel %vm1891, %v3592, %v3596
  %v3617 = vsel %vm1891, %v3593, %v3597
  %v3618 = vsel %vm1891, %v3594, %v3598
  %v3619 = vsel %vm1891, %v3603, %v3591
  %v3620 = vsel %vm1891, %v3604, %v3592
  %v3621 = vsel %vm1891, %v3605, %v3593
  %v3622 = vsel %vm1891, %v3606, %v3594
  %v3623 = vmul.f32 %v3615, %v1916
  %v3624 = vmul.f32 %v3616, %v1916
  %v3625 = vmul.f32 %v3617, %v1916
  %v3626 = vmul.f32 %v3618, %v1916
  %v3627 = vmul.f32 %v3611, %v1917
  %v3628 = vmul.f32 %v3612, %v1917
  %v3629 = vmul.f32 %v3613, %v1917
  %v3630 = vmul.f32 %v3614, %v1917
  %v3631 = vmul.f32 %v3607, %v1918
  %v3632 = vmul.f32 %v3608, %v1918
  %v3633 = vmul.f32 %v3609, %v1918
  %v3634 = vmul.f32 %v3610, %v1918
  %v3635 = vmul.f32 %v3619, %v1919
  %v3636 = vmul.f32 %v3620, %v1919
  %v3637 = vmul.f32 %v3621, %v1919
  %v3638 = vmul.f32 %v3622, %v1919
  %s3639 = scalar_lea.vmem %s9, 5
  %v3640 = vld [vmem:[%s3639] ss:$8 sm:$0xf]
  %v3642 = vlaneseq
  %v3643 = vshrl.u32 %v3642, 7
  %v3644 = vsub.s32 0, %v3643
  %v3645 = vrot.slane %v3640, %v3644
  %v3646 = vlaneseq
  %v3647 = vshrl.u32 %v3646, 7
  %v3648 = vsub.s32 1, %v3647
  %v3649 = vrot.slane %v3640, %v3648
  %v3650 = vlaneseq
  %v3651 = vshrl.u32 %v3650, 7
  %v3652 = vsub.s32 2, %v3651
  %v3653 = vrot.slane %v3640, %v3652
  %v3654 = vlaneseq
  %v3655 = vshrl.u32 %v3654, 7
  %v3656 = vsub.s32 3, %v3655
  %v3657 = vrot.slane %v3640, %v3656
  %v3662 = vmul.f32 %v3623, %v3645
  %v3663 = vmul.f32 %v3624, %v3649
  %v3664 = vmul.f32 %v3625, %v3653
  %v3665 = vmul.f32 %v3626, %v3657
  %v3666 = vmul.f32 %v3627, %v3645
  %v3667 = vmul.f32 %v3628, %v3649
  %v3668 = vmul.f32 %v3629, %v3653
  %v3669 = vmul.f32 %v3630, %v3657
  %v3670 = vmul.f32 %v3631, %v3645
  %v3671 = vmul.f32 %v3632, %v3649
  %v3672 = vmul.f32 %v3633, %v3653
  %v3673 = vmul.f32 %v3634, %v3657
  %v3674 = vmul.f32 %v3635, %v3645
  %v3675 = vmul.f32 %v3636, %v3649
  %v3676 = vmul.f32 %v3637, %v3653
  %v3677 = vmul.f32 %v3638, %v3657
  %v3678 = vadd.f32 %v3575, %v3662
  %v3679 = vadd.f32 %v3576, %v3663
  %v3680 = vadd.f32 %v3577, %v3664
  %v3681 = vadd.f32 %v3578, %v3665
  %v3682 = vadd.f32 %v3579, %v3666
  %v3683 = vadd.f32 %v3580, %v3667
  %v3684 = vadd.f32 %v3581, %v3668
  %v3685 = vadd.f32 %v3582, %v3669
  %v3686 = vadd.f32 %v3583, %v3670
  %v3687 = vadd.f32 %v3584, %v3671
  %v3688 = vadd.f32 %v3585, %v3672
  %v3689 = vadd.f32 %v3586, %v3673
  %v3690 = vadd.f32 %v3587, %v3674
  %v3691 = vadd.f32 %v3588, %v3675
  %v3692 = vadd.f32 %v3589, %v3676
  %v3693 = vadd.f32 %v3590, %v3677
  %v3694 = vrot.slane %v3112, 3
  %v3695 = vrot.slane %v3113, 3
  %v3696 = vrot.slane %v3114, 3
  %v3697 = vrot.slane %v3115, 3
  %v3698 = vrot.slane %v3116, 3
  %v3699 = vrot.slane %v3117, 3
  %v3700 = vrot.slane %v3118, 3
  %v3701 = vrot.slane %v3119, 3
  %v3702 = vrot.slane %v3120, 3
  %v3703 = vrot.slane %v3121, 3
  %v3704 = vrot.slane %v3122, 3
  %v3705 = vrot.slane %v3123, 3
  %v3706 = vrot.slane %v3124, 3
  %v3707 = vrot.slane %v3125, 3
  %v3708 = vrot.slane %v3126, 3
  %v3709 = vrot.slane %v3127, 3
  %vm3710 = vcmp.lt.s32.totalorder %v60, 5
  %v3711 = vsel %vm3710, %v3702, %v3706
  %v3712 = vsel %vm3710, %v3703, %v3707
  %v3713 = vsel %vm3710, %v3704, %v3708
  %v3714 = vsel %vm3710, %v3705, %v3709
  %v3715 = vsel %vm3710, %v3698, %v3702
  %v3716 = vsel %vm3710, %v3699, %v3703
  %v3717 = vsel %vm3710, %v3700, %v3704
  %v3718 = vsel %vm3710, %v3701, %v3705
  %v3719 = vsel %vm3710, %v3694, %v3698
  %v3720 = vsel %vm3710, %v3695, %v3699
  %v3721 = vsel %vm3710, %v3696, %v3700
  %v3722 = vsel %vm3710, %v3697, %v3701
  %v3723 = vsel %vm3710, %v3706, %v3694
  %v3724 = vsel %vm3710, %v3707, %v3695
  %v3725 = vsel %vm3710, %v3708, %v3696
  %v3726 = vsel %vm3710, %v3709, %v3697
  %vm3727 = vcmp.lt.s32.totalorder %v71, 13
  %vm3728 = vcmp.lt.s32.totalorder %v72, 13
  %vm3729 = vcmp.lt.s32.totalorder %v73, 13
  %vm3730 = vcmp.lt.s32.totalorder %v74, 13
  %v3731 = vsel %vm3727, 1, 0
  %v3732 = vsel %vm3728, 1, 0
  %v3733 = vsel %vm3729, 1, 0
  %v3734 = vsel %vm3730, 1, 0
  %v3735 = vcvt.s32.f32 %v3731
  %v3736 = vcvt.s32.f32 %v3732
  %v3737 = vcvt.s32.f32 %v3733
  %v3738 = vcvt.s32.f32 %v3734
  %v3739 = vmul.f32 %v3719, %v3735
  %v3740 = vmul.f32 %v3720, %v3735
  %v3741 = vmul.f32 %v3721, %v3735
  %v3742 = vmul.f32 %v3722, %v3735
  %v3743 = vmul.f32 %v3715, %v3736
  %v3744 = vmul.f32 %v3716, %v3736
  %v3745 = vmul.f32 %v3717, %v3736
  %v3746 = vmul.f32 %v3718, %v3736
  %v3747 = vmul.f32 %v3711, %v3737
  %v3748 = vmul.f32 %v3712, %v3737
  %v3749 = vmul.f32 %v3713, %v3737
  %v3750 = vmul.f32 %v3714, %v3737
  %v3751 = vmul.f32 %v3723, %v3738
  %v3752 = vmul.f32 %v3724, %v3738
  %v3753 = vmul.f32 %v3725, %v3738
  %v3754 = vmul.f32 %v3726, %v3738
  %s3755 = scalar_lea.vmem %s9, 6
  %v3756 = vld [vmem:[%s3755] ss:$8 sm:$0xf]
  %v3758 = vlaneseq
  %v3759 = vshrl.u32 %v3758, 7
  %v3760 = vsub.s32 0, %v3759
  %v3761 = vrot.slane %v3756, %v3760
  %v3762 = vlaneseq
  %v3763 = vshrl.u32 %v3762, 7
  %v3764 = vsub.s32 1, %v3763
  %v3765 = vrot.slane %v3756, %v3764
  %v3766 = vlaneseq
  %v3767 = vshrl.u32 %v3766, 7
  %v3768 = vsub.s32 2, %v3767
  %v3769 = vrot.slane %v3756, %v3768
  %v3770 = vlaneseq
  %v3771 = vshrl.u32 %v3770, 7
  %v3772 = vsub.s32 3, %v3771
  %v3773 = vrot.slane %v3756, %v3772
  %v3778 = vmul.f32 %v3739, %v3761
  %v3779 = vmul.f32 %v3740, %v3765
  %v3780 = vmul.f32 %v3741, %v3769
  %v3781 = vmul.f32 %v3742, %v3773
  %v3782 = vmul.f32 %v3743, %v3761
  %v3783 = vmul.f32 %v3744, %v3765
  %v3784 = vmul.f32 %v3745, %v3769
  %v3785 = vmul.f32 %v3746, %v3773
  %v3786 = vmul.f32 %v3747, %v3761
  %v3787 = vmul.f32 %v3748, %v3765
  %v3788 = vmul.f32 %v3749, %v3769
  %v3789 = vmul.f32 %v3750, %v3773
  %v3790 = vmul.f32 %v3751, %v3761
  %v3791 = vmul.f32 %v3752, %v3765
  %v3792 = vmul.f32 %v3753, %v3769
  %v3793 = vmul.f32 %v3754, %v3773
  %v3794 = vadd.f32 %v3678, %v3778
  %v3795 = vadd.f32 %v3679, %v3779
  %v3796 = vadd.f32 %v3680, %v3780
  %v3797 = vadd.f32 %v3681, %v3781
  %v3798 = vadd.f32 %v3682, %v3782
  %v3799 = vadd.f32 %v3683, %v3783
  %v3800 = vadd.f32 %v3684, %v3784
  %v3801 = vadd.f32 %v3685, %v3785
  %v3802 = vadd.f32 %v3686, %v3786
  %v3803 = vadd.f32 %v3687, %v3787
  %v3804 = vadd.f32 %v3688, %v3788
  %v3805 = vadd.f32 %v3689, %v3789
  %v3806 = vadd.f32 %v3690, %v3790
  %v3807 = vadd.f32 %v3691, %v3791
  %v3808 = vadd.f32 %v3692, %v3792
  %v3809 = vadd.f32 %v3693, %v3793
  %v3810 = vld [vmem:[%s10] sm:$0xf]
  %v3812 = vlaneseq
  %v3813 = vshrl.u32 %v3812, 7
  %v3814 = vsub.s32 0, %v3813
  %v3815 = vrot.slane %v3810, %v3814
  %v3816 = vlaneseq
  %v3817 = vshrl.u32 %v3816, 7
  %v3818 = vsub.s32 1, %v3817
  %v3819 = vrot.slane %v3810, %v3818
  %v3820 = vlaneseq
  %v3821 = vshrl.u32 %v3820, 7
  %v3822 = vsub.s32 2, %v3821
  %v3823 = vrot.slane %v3810, %v3822
  %v3824 = vlaneseq
  %v3825 = vshrl.u32 %v3824, 7
  %v3826 = vsub.s32 3, %v3825
  %v3827 = vrot.slane %v3810, %v3826
  %v3832 = vadd.f32 %v3794, %v3815
  %v3833 = vadd.f32 %v3795, %v3819
  %v3834 = vadd.f32 %v3796, %v3823
  %v3835 = vadd.f32 %v3797, %v3827
  %v3836 = vadd.f32 %v3798, %v3815
  %v3837 = vadd.f32 %v3799, %v3819
  %v3838 = vadd.f32 %v3800, %v3823
  %v3839 = vadd.f32 %v3801, %v3827
  %v3840 = vadd.f32 %v3802, %v3815
  %v3841 = vadd.f32 %v3803, %v3819
  %v3842 = vadd.f32 %v3804, %v3823
  %v3843 = vadd.f32 %v3805, %v3827
  %v3844 = vadd.f32 %v3806, %v3815
  %v3845 = vadd.f32 %v3807, %v3819
  %v3846 = vadd.f32 %v3808, %v3823
  %v3847 = vadd.f32 %v3809, %v3827
  %v3848 = vadd.f32 %v2706, %v3832
  %v3849 = vadd.f32 %v2707, %v3833
  %v3850 = vadd.f32 %v2708, %v3834
  %v3851 = vadd.f32 %v2709, %v3835
  %v3852 = vadd.f32 %v2710, %v3836
  %v3853 = vadd.f32 %v2711, %v3837
  %v3854 = vadd.f32 %v2712, %v3838
  %v3855 = vadd.f32 %v2713, %v3839
  %v3856 = vadd.f32 %v2714, %v3840
  %v3857 = vadd.f32 %v2715, %v3841
  %v3858 = vadd.f32 %v2716, %v3842
  %v3859 = vadd.f32 %v2717, %v3843
  %v3860 = vadd.f32 %v2718, %v3844
  %v3861 = vadd.f32 %v2719, %v3845
  %v3862 = vadd.f32 %v2720, %v3846
  %v3863 = vadd.f32 %v2721, %v3847
  %v3864 = vmul.f32 %v1974, %v3848
  %v3865 = vmul.f32 %v1975, %v3849
  %v3866 = vmul.f32 %v1976, %v3850
  %v3867 = vmul.f32 %v1977, %v3851
  %v3868 = vmul.f32 %v1978, %v3852
  %v3869 = vmul.f32 %v1979, %v3853
  %v3870 = vmul.f32 %v1980, %v3854
  %v3871 = vmul.f32 %v1981, %v3855
  %v3872 = vmul.f32 %v1982, %v3856
  %v3873 = vmul.f32 %v1983, %v3857
  %v3874 = vmul.f32 %v1984, %v3858
  %v3875 = vmul.f32 %v1985, %v3859
  %v3876 = vmul.f32 %v1986, %v3860
  %v3877 = vmul.f32 %v1987, %v3861
  %v3878 = vmul.f32 %v1988, %v3862
  %v3879 = vmul.f32 %v1989, %v3863
  %v3880 = vpack.c.bf16 %v3868, %v3864
  %v3881 = vpack.c.bf16 %v3869, %v3865
  %v3882 = vpack.c.bf16 %v3870, %v3866
  %v3883 = vpack.c.bf16 %v3871, %v3867
  %v3884 = vpack.c.bf16 %v3876, %v3872
  %v3885 = vpack.c.bf16 %v3877, %v3873
  %v3886 = vpack.c.bf16 %v3878, %v3874
  %v3887 = vpack.c.bf16 %v3879, %v3875
  %v3888 = vunpack.c.l.bf16 %v3880
  %v3889 = vunpack.c.l.bf16 %v3881
  %v3890 = vunpack.c.l.bf16 %v3882
  %v3891 = vunpack.c.l.bf16 %v3883
  %v3892 = vunpack.c.h.bf16 %v3880
  %v3893 = vunpack.c.h.bf16 %v3881
  %v3894 = vunpack.c.h.bf16 %v3882
  %v3895 = vunpack.c.h.bf16 %v3883
  %v3896 = vunpack.c.l.bf16 %v3884
  %v3897 = vunpack.c.l.bf16 %v3885
  %v3898 = vunpack.c.l.bf16 %v3886
  %v3899 = vunpack.c.l.bf16 %v3887
  %v3900 = vunpack.c.h.bf16 %v3884
  %v3901 = vunpack.c.h.bf16 %v3885
  %v3902 = vunpack.c.h.bf16 %v3886
  %v3903 = vunpack.c.h.bf16 %v3887
  %v3904 = vsub.f32 %v3864, %v3888
  %v3905 = vsub.f32 %v3865, %v3889
  %v3906 = vsub.f32 %v3866, %v3890
  %v3907 = vsub.f32 %v3867, %v3891
  %v3908 = vsub.f32 %v3868, %v3892
  %v3909 = vsub.f32 %v3869, %v3893
  %v3910 = vsub.f32 %v3870, %v3894
  %v3911 = vsub.f32 %v3871, %v3895
  %v3912 = vsub.f32 %v3872, %v3896
  %v3913 = vsub.f32 %v3873, %v3897
  %v3914 = vsub.f32 %v3874, %v3898
  %v3915 = vsub.f32 %v3875, %v3899
  %v3916 = vsub.f32 %v3876, %v3900
  %v3917 = vsub.f32 %v3877, %v3901
  %v3918 = vsub.f32 %v3878, %v3902
  %v3919 = vsub.f32 %v3879, %v3903
  %v3920 = vpack.c.bf16 %v3908, %v3904
  %v3921 = vpack.c.bf16 %v3909, %v3905
  %v3922 = vpack.c.bf16 %v3910, %v3906
  %v3923 = vpack.c.bf16 %v3911, %v3907
  %v3924 = vpack.c.bf16 %v3916, %v3912
  %v3925 = vpack.c.bf16 %v3917, %v3913
  %v3926 = vpack.c.bf16 %v3918, %v3914
  %v3927 = vpack.c.bf16 %v3919, %v3915
  %v3928 = vld [vmem:[%s11] sm:$0xf]
  %v3929 = vld [vmem:[%s11 + $0x4] sm:$0xf]
  %v3930 = vld [vmem:[%s11 + $0x8] sm:$0xf]
  %v3931 = vld [vmem:[%s11 + $0xc] sm:$0xf]
  %v3932 = vld [vmem:[%s11 + $0x10] sm:$0xf]
  %v3933 = vld [vmem:[%s11 + $0x14] sm:$0xf]
  %v3934 = vld [vmem:[%s11 + $0x18] sm:$0xf]
  %v3935 = vld [vmem:[%s11 + $0x1c] sm:$0xf]
  %v3936 = vld [vmem:[%s11 + $0x20] sm:$0xf]
  %v3937 = vld [vmem:[%s11 + $0x24] sm:$0xf]
  %v3938 = vld [vmem:[%s11 + $0x28] sm:$0xf]
  %v3939 = vld [vmem:[%s11 + $0x2c] sm:$0xf]
  %v3940 = vld [vmem:[%s11 + $0x30] sm:$0xf]
  %v3941 = vld [vmem:[%s11 + $0x34] sm:$0xf]
  %v3942 = vld [vmem:[%s11 + $0x38] sm:$0xf]
  %v3943 = vld [vmem:[%s11 + $0x3c] sm:$0xf]
  %v3944 = vld [vmem:[%s12] sm:$0xf]
  %v3945 = vld [vmem:[%s12 + $0x4] sm:$0xf]
  %v3946 = vld [vmem:[%s12 + $0x8] sm:$0xf]
  %v3947 = vld [vmem:[%s12 + $0xc] sm:$0xf]
  %v3948 = vld [vmem:[%s12 + $0x10] sm:$0xf]
  %v3949 = vld [vmem:[%s12 + $0x14] sm:$0xf]
  %v3950 = vld [vmem:[%s12 + $0x18] sm:$0xf]
  %v3951 = vld [vmem:[%s12 + $0x1c] sm:$0xf]
  %v3952 = vld [vmem:[%s12 + $0x20] sm:$0xf]
  %v3953 = vld [vmem:[%s12 + $0x24] sm:$0xf]
  %v3954 = vld [vmem:[%s12 + $0x28] sm:$0xf]
  %v3955 = vld [vmem:[%s12 + $0x2c] sm:$0xf]
  %v3956 = vld [vmem:[%s12 + $0x30] sm:$0xf]
  %v3957 = vld [vmem:[%s12 + $0x34] sm:$0xf]
  %v3958 = vld [vmem:[%s12 + $0x38] sm:$0xf]
  %v3959 = vld [vmem:[%s12 + $0x3c] sm:$0xf]
  %v3976 = vunpack.c.l.b16 %v3928
  %v3977 = vunpack.c.l.b16 %v3929
  %v3978 = vunpack.c.l.b16 %v3930
  %v3979 = vunpack.c.l.b16 %v3931
  %v3980 = vunpack.c.l.b16 %v3932
  %v3981 = vunpack.c.l.b16 %v3933
  %v3982 = vunpack.c.l.b16 %v3934
  %v3983 = vunpack.c.l.b16 %v3935
  %v3984 = vunpack.c.l.b16 %v3936
  %v3985 = vunpack.c.l.b16 %v3937
  %v3986 = vunpack.c.l.b16 %v3938
  %v3987 = vunpack.c.l.b16 %v3939
  %v3988 = vunpack.c.l.b16 %v3940
  %v3989 = vunpack.c.l.b16 %v3941
  %v3990 = vunpack.c.l.b16 %v3942
  %v3991 = vunpack.c.l.b16 %v3943
  %v3992 = vpack.c.b16 %v3977, %v3976
  %v3993 = vpack.c.b16 %v3979, %v3978
  %v3994 = vpack.c.b16 %v3981, %v3980
  %v3995 = vpack.c.b16 %v3983, %v3982
  %v3996 = vpack.c.b16 %v3985, %v3984
  %v3997 = vpack.c.b16 %v3987, %v3986
  %v3998 = vpack.c.b16 %v3989, %v3988
  %v3999 = vpack.c.b16 %v3991, %v3990
  %4008 = vmatprep.subr.bf16.mxu0 0
  %4009 = vmatpush1.bf16.msra.mxu0 %v3992
  %4010 = vmatprep.subr.bf16.mxu0 0
  %4011 = vmatpush1.bf16.msra.mxu0 %v3993
  %4012 = vmatprep.subr.bf16.mxu0 0
  %4013 = vmatpush1.bf16.msra.mxu0 %v3994
  %4014 = vmatprep.subr.bf16.mxu0 0
  %4015 = vmatpush1.bf16.msra.mxu0 %v3995
  %4016 = vmatprep.subr.bf16.mxu0 0
  %4017 = vmatpush1.bf16.msra.mxu0 %v3996
  %4018 = vmatprep.subr.bf16.mxu0 0
  %4019 = vmatpush1.bf16.msra.mxu0 %v3997
  %4020 = vmatprep.subr.bf16.mxu0 0
  %4021 = vmatpush1.bf16.msra.mxu0 %v3998
  %4022 = vmatprep.subr.bf16.mxu0 0
  %4023 = vmatpush1.bf16.msra.mxu0 %v3999
  %4024 = vmatprep.subr.bf16.mxu0 0
  %4025 = vmatpush1.bf16.msra.mxu0 0
  %4026 = vmatprep.subr.bf16.mxu0 0
  %4027 = vmatpush1.bf16.msra.mxu0 0
  %4028 = vmatprep.subr.bf16.mxu0 0
  %4029 = vmatpush1.bf16.msra.mxu0 0
  %4030 = vmatprep.subr.bf16.mxu0 0
  %4031 = vmatpush1.bf16.msra.mxu0 0
  %4032 = vmatprep.subr.bf16.mxu0 0
  %4033 = vmatpush1.bf16.msra.mxu0 0
  %4034 = vmatprep.subr.bf16.mxu0 0
  %4035 = vmatpush1.bf16.msra.mxu0 0
  %4036 = vmatprep.subr.bf16.mxu0 0
  %4037 = vmatpush1.bf16.msra.mxu0 0
  %4038 = vmatprep.subr.bf16.mxu0 0
  %4039 = vmatpush1.bf16.msra.mxu0 0
  %4040 = vmatprep.mubr.bf16.mxu0 0
  %4041 = vmatmul.mubr.bf16.gmra.mrb[0].mxu0 %v3920
  %v4042 = vpop.f32.mrb[0].mxu0
  %v4043 = vadd.f32 0.0, %v4042
  %v4044 = vpop.f32.mrb[0].mxu0
  %v4045 = vpop.f32.mrb[0].mxu0
  %v4046 = vadd.f32 0.0, %v4045
  %v4047 = vpop.f32.mrb[0].mxu0
  %4048 = vmatprep.mubr.bf16.mxu0 0
  %4049 = vmatmul.mubr.bf16.gmra.mrb[0].mxu0 %v3924
  %v4050 = vpop.f32.mrb[0].mxu0
  %v4051 = vadd.f32 0.0, %v4050
  %v4052 = vpop.f32.mrb[0].mxu0
  %v4053 = vpop.f32.mrb[0].mxu0
  %v4054 = vadd.f32 0.0, %v4053
  %v4055 = vpop.f32.mrb[0].mxu0
  %4056 = vdwg.mxu0
  %4057 = vmatprep.subr.bf16.mxu0 0
  %4058 = vmatpush1.bf16.msra.mxu0 %v3992
  %4059 = vmatprep.subr.bf16.mxu0 0
  %4060 = vmatpush1.bf16.msra.mxu0 %v3993
  %4061 = vmatprep.subr.bf16.mxu0 0
  %4062 = vmatpush1.bf16.msra.mxu0 %v3994
  %4063 = vmatprep.subr.bf16.mxu0 0
  %4064 = vmatpush1.bf16.msra.mxu0 %v3995
  %4065 = vmatprep.subr.bf16.mxu0 0
  %4066 = vmatpush1.bf16.msra.mxu0 %v3996
  %4067 = vmatprep.subr.bf16.mxu0 0
  %4068 = vmatpush1.bf16.msra.mxu0 %v3997
  %4069 = vmatprep.subr.bf16.mxu0 0
  %4070 = vmatpush1.bf16.msra.mxu0 %v3998
  %4071 = vmatprep.subr.bf16.mxu0 0
  %4072 = vmatpush1.bf16.msra.mxu0 %v3999
  %4073 = vmatprep.subr.bf16.mxu0 0
  %4074 = vmatpush1.bf16.msra.mxu0 0
  %4075 = vmatprep.subr.bf16.mxu0 0
  %4076 = vmatpush1.bf16.msra.mxu0 0
  %4077 = vmatprep.subr.bf16.mxu0 0
  %4078 = vmatpush1.bf16.msra.mxu0 0
  %4079 = vmatprep.subr.bf16.mxu0 0
  %4080 = vmatpush1.bf16.msra.mxu0 0
  %4081 = vmatprep.subr.bf16.mxu0 0
  %4082 = vmatpush1.bf16.msra.mxu0 0
  %4083 = vmatprep.subr.bf16.mxu0 0
  %4084 = vmatpush1.bf16.msra.mxu0 0
  %4085 = vmatprep.subr.bf16.mxu0 0
  %4086 = vmatpush1.bf16.msra.mxu0 0
  %4087 = vmatprep.subr.bf16.mxu0 0
  %4088 = vmatpush1.bf16.msra.mxu0 0
  %4089 = vmatprep.mubr.bf16.mxu0 0
  %4090 = vmatmul.mubr.bf16.gmra.mrb[0].mxu0 %v3880
  %v4091 = vpop.f32.mrb[0].mxu0
  %v4092 = vadd.f32 %v4043, %v4091
  %v4093 = vpop.f32.mrb[0].mxu0
  %v4094 = vpop.f32.mrb[0].mxu0
  %v4095 = vadd.f32 %v4046, %v4094
  %v4096 = vpop.f32.mrb[0].mxu0
  %4097 = vmatprep.mubr.bf16.mxu0 0
  %4098 = vmatmul.mubr.bf16.gmra.mrb[0].mxu0 %v3884
  %v4099 = vpop.f32.mrb[0].mxu0
  %v4100 = vadd.f32 %v4051, %v4099
  %v4101 = vpop.f32.mrb[0].mxu0
  %v4102 = vpop.f32.mrb[0].mxu0
  %v4103 = vadd.f32 %v4054, %v4102
  %v4104 = vpop.f32.mrb[0].mxu0
  %4105 = vdwg.mxu0
  %v4122 = vunpack.c.l.b16 %v3944
  %v4123 = vunpack.c.l.b16 %v3945
  %v4124 = vunpack.c.l.b16 %v3946
  %v4125 = vunpack.c.l.b16 %v3947
  %v4126 = vunpack.c.l.b16 %v3948
  %v4127 = vunpack.c.l.b16 %v3949
  %v4128 = vunpack.c.l.b16 %v3950
  %v4129 = vunpack.c.l.b16 %v3951
  %v4130 = vunpack.c.l.b16 %v3952
  %v4131 = vunpack.c.l.b16 %v3953
  %v4132 = vunpack.c.l.b16 %v3954
  %v4133 = vunpack.c.l.b16 %v3955
  %v4134 = vunpack.c.l.b16 %v3956
  %v4135 = vunpack.c.l.b16 %v3957
  %v4136 = vunpack.c.l.b16 %v3958
  %v4137 = vunpack.c.l.b16 %v3959
  %v4138 = vpack.c.b16 %v4123, %v4122
  %v4139 = vpack.c.b16 %v4125, %v4124
  %v4140 = vpack.c.b16 %v4127, %v4126
  %v4141 = vpack.c.b16 %v4129, %v4128
  %v4142 = vpack.c.b16 %v4131, %v4130
  %v4143 = vpack.c.b16 %v4133, %v4132
  %v4144 = vpack.c.b16 %v4135, %v4134
  %v4145 = vpack.c.b16 %v4137, %v4136
  %4154 = vmatprep.subr.bf16.mxu0 0
  %4155 = vmatpush1.bf16.msra.mxu0 %v4138
  %4156 = vmatprep.subr.bf16.mxu0 0
  %4157 = vmatpush1.bf16.msra.mxu0 %v4139
  %4158 = vmatprep.subr.bf16.mxu0 0
  %4159 = vmatpush1.bf16.msra.mxu0 %v4140
  %4160 = vmatprep.subr.bf16.mxu0 0
  %4161 = vmatpush1.bf16.msra.mxu0 %v4141
  %4162 = vmatprep.subr.bf16.mxu0 0
  %4163 = vmatpush1.bf16.msra.mxu0 %v4142
  %4164 = vmatprep.subr.bf16.mxu0 0
  %4165 = vmatpush1.bf16.msra.mxu0 %v4143
  %4166 = vmatprep.subr.bf16.mxu0 0
  %4167 = vmatpush1.bf16.msra.mxu0 %v4144
  %4168 = vmatprep.subr.bf16.mxu0 0
  %4169 = vmatpush1.bf16.msra.mxu0 %v4145
  %4170 = vmatprep.subr.bf16.mxu0 0
  %4171 = vmatpush1.bf16.msra.mxu0 0
  %4172 = vmatprep.subr.bf16.mxu0 0
  %4173 = vmatpush1.bf16.msra.mxu0 0
  %4174 = vmatprep.subr.bf16.mxu0 0
  %4175 = vmatpush1.bf16.msra.mxu0 0
  %4176 = vmatprep.subr.bf16.mxu0 0
  %4177 = vmatpush1.bf16.msra.mxu0 0
  %4178 = vmatprep.subr.bf16.mxu0 0
  %4179 = vmatpush1.bf16.msra.mxu0 0
  %4180 = vmatprep.subr.bf16.mxu0 0
  %4181 = vmatpush1.bf16.msra.mxu0 0
  %4182 = vmatprep.subr.bf16.mxu0 0
  %4183 = vmatpush1.bf16.msra.mxu0 0
  %4184 = vmatprep.subr.bf16.mxu0 0
  %4185 = vmatpush1.bf16.msra.mxu0 0
  %4186 = vmatprep.mubr.bf16.mxu0 0
  %4187 = vmatmul.mubr.bf16.gmra.mrb[0].mxu0 %v3880
  %v4188 = vpop.f32.mrb[0].mxu0
  %v4189 = vadd.f32 0.0, %v4188
  %v4190 = vpop.f32.mrb[0].mxu0
  %v4191 = vpop.f32.mrb[0].mxu0
  %v4192 = vadd.f32 0.0, %v4191
  %v4193 = vpop.f32.mrb[0].mxu0
  %4194 = vmatprep.mubr.bf16.mxu0 0
  %4195 = vmatmul.mubr.bf16.gmra.mrb[0].mxu0 %v3884
  %v4196 = vpop.f32.mrb[0].mxu0
  %v4197 = vadd.f32 0.0, %v4196
  %v4198 = vpop.f32.mrb[0].mxu0
  %v4199 = vpop.f32.mrb[0].mxu0
  %v4200 = vadd.f32 0.0, %v4199
  %v4201 = vpop.f32.mrb[0].mxu0
  %4202 = vdwg.mxu0
  %v4203 = vadd.f32 %v4092, %v4189
  %v4204 = vadd.f32 %v4095, %v4192
  %v4205 = vadd.f32 %v4100, %v4197
  %v4206 = vadd.f32 %v4103, %v4200
  %4207 = vmatprep.subr.bf16.mxu0 0
  %4208 = vmatpush1.bf16.msra.mxu0 %v3992
  %4209 = vmatprep.subr.bf16.mxu0 0
  %4210 = vmatpush1.bf16.msra.mxu0 %v3993
  %4211 = vmatprep.subr.bf16.mxu0 0
  %4212 = vmatpush1.bf16.msra.mxu0 %v3994
  %4213 = vmatprep.subr.bf16.mxu0 0
  %4214 = vmatpush1.bf16.msra.mxu0 %v3995
  %4215 = vmatprep.subr.bf16.mxu0 0
  %4216 = vmatpush1.bf16.msra.mxu0 %v3996
  %4217 = vmatprep.subr.bf16.mxu0 0
  %4218 = vmatpush1.bf16.msra.mxu0 %v3997
  %4219 = vmatprep.subr.bf16.mxu0 0
  %4220 = vmatpush1.bf16.msra.mxu0 %v3998
  %4221 = vmatprep.subr.bf16.mxu0 0
  %4222 = vmatpush1.bf16.msra.mxu0 %v3999
  %4223 = vmatprep.subr.bf16.mxu0 0
  %4224 = vmatpush1.bf16.msra.mxu0 0
  %4225 = vmatprep.subr.bf16.mxu0 0
  %4226 = vmatpush1.bf16.msra.mxu0 0
  %4227 = vmatprep.subr.bf16.mxu0 0
  %4228 = vmatpush1.bf16.msra.mxu0 0
  %4229 = vmatprep.subr.bf16.mxu0 0
  %4230 = vmatpush1.bf16.msra.mxu0 0
  %4231 = vmatprep.subr.bf16.mxu0 0
  %4232 = vmatpush1.bf16.msra.mxu0 0
  %4233 = vmatprep.subr.bf16.mxu0 0
  %4234 = vmatpush1.bf16.msra.mxu0 0
  %4235 = vmatprep.subr.bf16.mxu0 0
  %4236 = vmatpush1.bf16.msra.mxu0 0
  %4237 = vmatprep.subr.bf16.mxu0 0
  %4238 = vmatpush1.bf16.msra.mxu0 0
  %4239 = vmatprep.mubr.bf16.mxu0 0
  %4240 = vmatmul.mubr.bf16.gmra.mrb[0].mxu0 %v3921
  %v4241 = vpop.f32.mrb[0].mxu0
  %v4242 = vadd.f32 0.0, %v4241
  %v4243 = vpop.f32.mrb[0].mxu0
  %v4244 = vpop.f32.mrb[0].mxu0
  %v4245 = vadd.f32 0.0, %v4244
  %v4246 = vpop.f32.mrb[0].mxu0
  %4247 = vmatprep.mubr.bf16.mxu0 0
  %4248 = vmatmul.mubr.bf16.gmra.mrb[0].mxu0 %v3925
  %v4249 = vpop.f32.mrb[0].mxu0
  %v4250 = vadd.f32 0.0, %v4249
  %v4251 = vpop.f32.mrb[0].mxu0
  %v4252 = vpop.f32.mrb[0].mxu0
  %v4253 = vadd.f32 0.0, %v4252
  %v4254 = vpop.f32.mrb[0].mxu0
  %4255 = vdwg.mxu0
  %4256 = vmatprep.subr.bf16.mxu0 0
  %4257 = vmatpush1.bf16.msra.mxu0 %v3992
  %4258 = vmatprep.subr.bf16.mxu0 0
  %4259 = vmatpush1.bf16.msra.mxu0 %v3993
  %4260 = vmatprep.subr.bf16.mxu0 0
  %4261 = vmatpush1.bf16.msra.mxu0 %v3994
  %4262 = vmatprep.subr.bf16.mxu0 0
  %4263 = vmatpush1.bf16.msra.mxu0 %v3995
  %4264 = vmatprep.subr.bf16.mxu0 0
  %4265 = vmatpush1.bf16.msra.mxu0 %v3996
  %4266 = vmatprep.subr.bf16.mxu0 0
  %4267 = vmatpush1.bf16.msra.mxu0 %v3997
  %4268 = vmatprep.subr.bf16.mxu0 0
  %4269 = vmatpush1.bf16.msra.mxu0 %v3998
  %4270 = vmatprep.subr.bf16.mxu0 0
  %4271 = vmatpush1.bf16.msra.mxu0 %v3999
  %4272 = vmatprep.subr.bf16.mxu0 0
  %4273 = vmatpush1.bf16.msra.mxu0 0
  %4274 = vmatprep.subr.bf16.mxu0 0
  %4275 = vmatpush1.bf16.msra.mxu0 0
  %4276 = vmatprep.subr.bf16.mxu0 0
  %4277 = vmatpush1.bf16.msra.mxu0 0
  %4278 = vmatprep.subr.bf16.mxu0 0
  %4279 = vmatpush1.bf16.msra.mxu0 0
  %4280 = vmatprep.subr.bf16.mxu0 0
  %4281 = vmatpush1.bf16.msra.mxu0 0
  %4282 = vmatprep.subr.bf16.mxu0 0
  %4283 = vmatpush1.bf16.msra.mxu0 0
  %4284 = vmatprep.subr.bf16.mxu0 0
  %4285 = vmatpush1.bf16.msra.mxu0 0
  %4286 = vmatprep.subr.bf16.mxu0 0
  %4287 = vmatpush1.bf16.msra.mxu0 0
  %4288 = vmatprep.mubr.bf16.mxu0 0
  %4289 = vmatmul.mubr.bf16.gmra.mrb[0].mxu0 %v3881
  %v4290 = vpop.f32.mrb[0].mxu0
  %v4291 = vadd.f32 %v4242, %v4290
  %v4292 = vpop.f32.mrb[0].mxu0
  %v4293 = vpop.f32.mrb[0].mxu0
  %v4294 = vadd.f32 %v4245, %v4293
  %v4295 = vpop.f32.mrb[0].mxu0
  %4296 = vmatprep.mubr.bf16.mxu0 0
  %4297 = vmatmul.mubr.bf16.gmra.mrb[0].mxu0 %v3885
  %v4298 = vpop.f32.mrb[0].mxu0
  %v4299 = vadd.f32 %v4250, %v4298
  %v4300 = vpop.f32.mrb[0].mxu0
  %v4301 = vpop.f32.mrb[0].mxu0
  %v4302 = vadd.f32 %v4253, %v4301
  %v4303 = vpop.f32.mrb[0].mxu0
  %4304 = vdwg.mxu0
  %4305 = vmatprep.subr.bf16.mxu0 0
  %4306 = vmatpush1.bf16.msra.mxu0 %v4138
  %4307 = vmatprep.subr.bf16.mxu0 0
  %4308 = vmatpush1.bf16.msra.mxu0 %v4139
  %4309 = vmatprep.subr.bf16.mxu0 0
  %4310 = vmatpush1.bf16.msra.mxu0 %v4140
  %4311 = vmatprep.subr.bf16.mxu0 0
  %4312 = vmatpush1.bf16.msra.mxu0 %v4141
  %4313 = vmatprep.subr.bf16.mxu0 0
  %4314 = vmatpush1.bf16.msra.mxu0 %v4142
  %4315 = vmatprep.subr.bf16.mxu0 0
  %4316 = vmatpush1.bf16.msra.mxu0 %v4143
  %4317 = vmatprep.subr.bf16.mxu0 0
  %4318 = vmatpush1.bf16.msra.mxu0 %v4144
  %4319 = vmatprep.subr.bf16.mxu0 0
  %4320 = vmatpush1.bf16.msra.mxu0 %v4145
  %4321 = vmatprep.subr.bf16.mxu0 0
  %4322 = vmatpush1.bf16.msra.mxu0 0
  %4323 = vmatprep.subr.bf16.mxu0 0
  %4324 = vmatpush1.bf16.msra.mxu0 0
  %4325 = vmatprep.subr.bf16.mxu0 0
  %4326 = vmatpush1.bf16.msra.mxu0 0
  %4327 = vmatprep.subr.bf16.mxu0 0
  %4328 = vmatpush1.bf16.msra.mxu0 0
  %4329 = vmatprep.subr.bf16.mxu0 0
  %4330 = vmatpush1.bf16.msra.mxu0 0
  %4331 = vmatprep.subr.bf16.mxu0 0
  %4332 = vmatpush1.bf16.msra.mxu0 0
  %4333 = vmatprep.subr.bf16.mxu0 0
  %4334 = vmatpush1.bf16.msra.mxu0 0
  %4335 = vmatprep.subr.bf16.mxu0 0
  %4336 = vmatpush1.bf16.msra.mxu0 0
  %4337 = vmatprep.mubr.bf16.mxu0 0
  %4338 = vmatmul.mubr.bf16.gmra.mrb[0].mxu0 %v3881
  %v4339 = vpop.f32.mrb[0].mxu0
  %v4340 = vadd.f32 0.0, %v4339
  %v4341 = vpop.f32.mrb[0].mxu0
  %v4342 = vpop.f32.mrb[0].mxu0
  %v4343 = vadd.f32 0.0, %v4342
  %v4344 = vpop.f32.mrb[0].mxu0
  %4345 = vmatprep.mubr.bf16.mxu0 0
  %4346 = vmatmul.mubr.bf16.gmra.mrb[0].mxu0 %v3885
  %v4347 = vpop.f32.mrb[0].mxu0
  %v4348 = vadd.f32 0.0, %v4347
  %v4349 = vpop.f32.mrb[0].mxu0
  %v4350 = vpop.f32.mrb[0].mxu0
  %v4351 = vadd.f32 0.0, %v4350
  %v4352 = vpop.f32.mrb[0].mxu0
  %4353 = vdwg.mxu0
  %v4354 = vadd.f32 %v4291, %v4340
  %v4355 = vadd.f32 %v4294, %v4343
  %v4356 = vadd.f32 %v4299, %v4348
  %v4357 = vadd.f32 %v4302, %v4351
  %4358 = vmatprep.subr.bf16.mxu0 0
  %4359 = vmatpush1.bf16.msra.mxu0 %v3992
  %4360 = vmatprep.subr.bf16.mxu0 0
  %4361 = vmatpush1.bf16.msra.mxu0 %v3993
  %4362 = vmatprep.subr.bf16.mxu0 0
  %4363 = vmatpush1.bf16.msra.mxu0 %v3994
  %4364 = vmatprep.subr.bf16.mxu0 0
  %4365 = vmatpush1.bf16.msra.mxu0 %v3995
  %4366 = vmatprep.subr.bf16.mxu0 0
  %4367 = vmatpush1.bf16.msra.mxu0 %v3996
  %4368 = vmatprep.subr.bf16.mxu0 0
  %4369 = vmatpush1.bf16.msra.mxu0 %v3997
  %4370 = vmatprep.subr.bf16.mxu0 0
  %4371 = vmatpush1.bf16.msra.mxu0 %v3998
  %4372 = vmatprep.subr.bf16.mxu0 0
  %4373 = vmatpush1.bf16.msra.mxu0 %v3999
  %4374 = vmatprep.subr.bf16.mxu0 0
  %4375 = vmatpush1.bf16.msra.mxu0 0
  %4376 = vmatprep.subr.bf16.mxu0 0
  %4377 = vmatpush1.bf16.msra.mxu0 0
  %4378 = vmatprep.subr.bf16.mxu0 0
  %4379 = vmatpush1.bf16.msra.mxu0 0
  %4380 = vmatprep.subr.bf16.mxu0 0
  %4381 = vmatpush1.bf16.msra.mxu0 0
  %4382 = vmatprep.subr.bf16.mxu0 0
  %4383 = vmatpush1.bf16.msra.mxu0 0
  %4384 = vmatprep.subr.bf16.mxu0 0
  %4385 = vmatpush1.bf16.msra.mxu0 0
  %4386 = vmatprep.subr.bf16.mxu0 0
  %4387 = vmatpush1.bf16.msra.mxu0 0
  %4388 = vmatprep.subr.bf16.mxu0 0
  %4389 = vmatpush1.bf16.msra.mxu0 0
  %4390 = vmatprep.mubr.bf16.mxu0 0
  %4391 = vmatmul.mubr.bf16.gmra.mrb[0].mxu0 %v3922
  %v4392 = vpop.f32.mrb[0].mxu0
  %v4393 = vadd.f32 0.0, %v4392
  %v4394 = vpop.f32.mrb[0].mxu0
  %v4395 = vpop.f32.mrb[0].mxu0
  %v4396 = vadd.f32 0.0, %v4395
  %v4397 = vpop.f32.mrb[0].mxu0
  %4398 = vmatprep.mubr.bf16.mxu0 0
  %4399 = vmatmul.mubr.bf16.gmra.mrb[0].mxu0 %v3926
  %v4400 = vpop.f32.mrb[0].mxu0
  %v4401 = vadd.f32 0.0, %v4400
  %v4402 = vpop.f32.mrb[0].mxu0
  %v4403 = vpop.f32.mrb[0].mxu0
  %v4404 = vadd.f32 0.0, %v4403
  %v4405 = vpop.f32.mrb[0].mxu0
  %4406 = vdwg.mxu0
  %4407 = vmatprep.subr.bf16.mxu0 0
  %4408 = vmatpush1.bf16.msra.mxu0 %v3992
  %4409 = vmatprep.subr.bf16.mxu0 0
  %4410 = vmatpush1.bf16.msra.mxu0 %v3993
  %4411 = vmatprep.subr.bf16.mxu0 0
  %4412 = vmatpush1.bf16.msra.mxu0 %v3994
  %4413 = vmatprep.subr.bf16.mxu0 0
  %4414 = vmatpush1.bf16.msra.mxu0 %v3995
  %4415 = vmatprep.subr.bf16.mxu0 0
  %4416 = vmatpush1.bf16.msra.mxu0 %v3996
  %4417 = vmatprep.subr.bf16.mxu0 0
  %4418 = vmatpush1.bf16.msra.mxu0 %v3997
  %4419 = vmatprep.subr.bf16.mxu0 0
  %4420 = vmatpush1.bf16.msra.mxu0 %v3998
  %4421 = vmatprep.subr.bf16.mxu0 0
  %4422 = vmatpush1.bf16.msra.mxu0 %v3999
  %4423 = vmatprep.subr.bf16.mxu0 0
  %4424 = vmatpush1.bf16.msra.mxu0 0
  %4425 = vmatprep.subr.bf16.mxu0 0
  %4426 = vmatpush1.bf16.msra.mxu0 0
  %4427 = vmatprep.subr.bf16.mxu0 0
  %4428 = vmatpush1.bf16.msra.mxu0 0
  %4429 = vmatprep.subr.bf16.mxu0 0
  %4430 = vmatpush1.bf16.msra.mxu0 0
  %4431 = vmatprep.subr.bf16.mxu0 0
  %4432 = vmatpush1.bf16.msra.mxu0 0
  %4433 = vmatprep.subr.bf16.mxu0 0
  %4434 = vmatpush1.bf16.msra.mxu0 0
  %4435 = vmatprep.subr.bf16.mxu0 0
  %4436 = vmatpush1.bf16.msra.mxu0 0
  %4437 = vmatprep.subr.bf16.mxu0 0
  %4438 = vmatpush1.bf16.msra.mxu0 0
  %4439 = vmatprep.mubr.bf16.mxu0 0
  %4440 = vmatmul.mubr.bf16.gmra.mrb[0].mxu0 %v3882
  %v4441 = vpop.f32.mrb[0].mxu0
  %v4442 = vadd.f32 %v4393, %v4441
  %v4443 = vpop.f32.mrb[0].mxu0
  %v4444 = vpop.f32.mrb[0].mxu0
  %v4445 = vadd.f32 %v4396, %v4444
  %v4446 = vpop.f32.mrb[0].mxu0
  %4447 = vmatprep.mubr.bf16.mxu0 0
  %4448 = vmatmul.mubr.bf16.gmra.mrb[0].mxu0 %v3886
  %v4449 = vpop.f32.mrb[0].mxu0
  %v4450 = vadd.f32 %v4401, %v4449
  %v4451 = vpop.f32.mrb[0].mxu0
  %v4452 = vpop.f32.mrb[0].mxu0
  %v4453 = vadd.f32 %v4404, %v4452
  %v4454 = vpop.f32.mrb[0].mxu0
  %4455 = vdwg.mxu0
  %4456 = vmatprep.subr.bf16.mxu0 0
  %4457 = vmatpush1.bf16.msra.mxu0 %v4138
  %4458 = vmatprep.subr.bf16.mxu0 0
  %4459 = vmatpush1.bf16.msra.mxu0 %v4139
  %4460 = vmatprep.subr.bf16.mxu0 0
  %4461 = vmatpush1.bf16.msra.mxu0 %v4140
  %4462 = vmatprep.subr.bf16.mxu0 0
  %4463 = vmatpush1.bf16.msra.mxu0 %v4141
  %4464 = vmatprep.subr.bf16.mxu0 0
  %4465 = vmatpush1.bf16.msra.mxu0 %v4142
  %4466 = vmatprep.subr.bf16.mxu0 0
  %4467 = vmatpush1.bf16.msra.mxu0 %v4143
  %4468 = vmatprep.subr.bf16.mxu0 0
  %4469 = vmatpush1.bf16.msra.mxu0 %v4144
  %4470 = vmatprep.subr.bf16.mxu0 0
  %4471 = vmatpush1.bf16.msra.mxu0 %v4145
  %4472 = vmatprep.subr.bf16.mxu0 0
  %4473 = vmatpush1.bf16.msra.mxu0 0
  %4474 = vmatprep.subr.bf16.mxu0 0
  %4475 = vmatpush1.bf16.msra.mxu0 0
  %4476 = vmatprep.subr.bf16.mxu0 0
  %4477 = vmatpush1.bf16.msra.mxu0 0
  %4478 = vmatprep.subr.bf16.mxu0 0
  %4479 = vmatpush1.bf16.msra.mxu0 0
  %4480 = vmatprep.subr.bf16.mxu0 0
  %4481 = vmatpush1.bf16.msra.mxu0 0
  %4482 = vmatprep.subr.bf16.mxu0 0
  %4483 = vmatpush1.bf16.msra.mxu0 0
  %4484 = vmatprep.subr.bf16.mxu0 0
  %4485 = vmatpush1.bf16.msra.mxu0 0
  %4486 = vmatprep.subr.bf16.mxu0 0
  %4487 = vmatpush1.bf16.msra.mxu0 0
  %4488 = vmatprep.mubr.bf16.mxu0 0
  %4489 = vmatmul.mubr.bf16.gmra.mrb[0].mxu0 %v3882
  %v4490 = vpop.f32.mrb[0].mxu0
  %v4491 = vadd.f32 0.0, %v4490
  %v4492 = vpop.f32.mrb[0].mxu0
  %v4493 = vpop.f32.mrb[0].mxu0
  %v4494 = vadd.f32 0.0, %v4493
  %v4495 = vpop.f32.mrb[0].mxu0
  %4496 = vmatprep.mubr.bf16.mxu0 0
  %4497 = vmatmul.mubr.bf16.gmra.mrb[0].mxu0 %v3886
  %v4498 = vpop.f32.mrb[0].mxu0
  %v4499 = vadd.f32 0.0, %v4498
  %v4500 = vpop.f32.mrb[0].mxu0
  %v4501 = vpop.f32.mrb[0].mxu0
  %v4502 = vadd.f32 0.0, %v4501
  %v4503 = vpop.f32.mrb[0].mxu0
  %4504 = vdwg.mxu0
  %v4505 = vadd.f32 %v4442, %v4491
  %v4506 = vadd.f32 %v4445, %v4494
  %v4507 = vadd.f32 %v4450, %v4499
  %v4508 = vadd.f32 %v4453, %v4502
  %4509 = vmatprep.subr.bf16.mxu0 0
  %4510 = vmatpush1.bf16.msra.mxu0 %v3992
  %4511 = vmatprep.subr.bf16.mxu0 0
  %4512 = vmatpush1.bf16.msra.mxu0 %v3993
  %4513 = vmatprep.subr.bf16.mxu0 0
  %4514 = vmatpush1.bf16.msra.mxu0 %v3994
  %4515 = vmatprep.subr.bf16.mxu0 0
  %4516 = vmatpush1.bf16.msra.mxu0 %v3995
  %4517 = vmatprep.subr.bf16.mxu0 0
  %4518 = vmatpush1.bf16.msra.mxu0 %v3996
  %4519 = vmatprep.subr.bf16.mxu0 0
  %4520 = vmatpush1.bf16.msra.mxu0 %v3997
  %4521 = vmatprep.subr.bf16.mxu0 0
  %4522 = vmatpush1.bf16.msra.mxu0 %v3998
  %4523 = vmatprep.subr.bf16.mxu0 0
  %4524 = vmatpush1.bf16.msra.mxu0 %v3999
  %4525 = vmatprep.subr.bf16.mxu0 0
  %4526 = vmatpush1.bf16.msra.mxu0 0
  %4527 = vmatprep.subr.bf16.mxu0 0
  %4528 = vmatpush1.bf16.msra.mxu0 0
  %4529 = vmatprep.subr.bf16.mxu0 0
  %4530 = vmatpush1.bf16.msra.mxu0 0
  %4531 = vmatprep.subr.bf16.mxu0 0
  %4532 = vmatpush1.bf16.msra.mxu0 0
  %4533 = vmatprep.subr.bf16.mxu0 0
  %4534 = vmatpush1.bf16.msra.mxu0 0
  %4535 = vmatprep.subr.bf16.mxu0 0
  %4536 = vmatpush1.bf16.msra.mxu0 0
  %4537 = vmatprep.subr.bf16.mxu0 0
  %4538 = vmatpush1.bf16.msra.mxu0 0
  %4539 = vmatprep.subr.bf16.mxu0 0
  %4540 = vmatpush1.bf16.msra.mxu0 0
  %4541 = vmatprep.mubr.bf16.mxu0 0
  %4542 = vmatmul.mubr.bf16.gmra.mrb[0].mxu0 %v3923
  %v4543 = vpop.f32.mrb[0].mxu0
  %v4544 = vadd.f32 0.0, %v4543
  %v4545 = vpop.f32.mrb[0].mxu0
  %v4546 = vpop.f32.mrb[0].mxu0
  %v4547 = vadd.f32 0.0, %v4546
  %v4548 = vpop.f32.mrb[0].mxu0
  %4549 = vmatprep.mubr.bf16.mxu0 0
  %4550 = vmatmul.mubr.bf16.gmra.mrb[0].mxu0 %v3927
  %v4551 = vpop.f32.mrb[0].mxu0
  %v4552 = vadd.f32 0.0, %v4551
  %v4553 = vpop.f32.mrb[0].mxu0
  %v4554 = vpop.f32.mrb[0].mxu0
  %v4555 = vadd.f32 0.0, %v4554
  %v4556 = vpop.f32.mrb[0].mxu0
  %4557 = vdwg.mxu0
  %4558 = vmatprep.subr.bf16.mxu0 0
  %4559 = vmatpush1.bf16.msra.mxu0 %v3992
  %4560 = vmatprep.subr.bf16.mxu0 0
  %4561 = vmatpush1.bf16.msra.mxu0 %v3993
  %4562 = vmatprep.subr.bf16.mxu0 0
  %4563 = vmatpush1.bf16.msra.mxu0 %v3994
  %4564 = vmatprep.subr.bf16.mxu0 0
  %4565 = vmatpush1.bf16.msra.mxu0 %v3995
  %4566 = vmatprep.subr.bf16.mxu0 0
  %4567 = vmatpush1.bf16.msra.mxu0 %v3996
  %4568 = vmatprep.subr.bf16.mxu0 0
  %4569 = vmatpush1.bf16.msra.mxu0 %v3997
  %4570 = vmatprep.subr.bf16.mxu0 0
  %4571 = vmatpush1.bf16.msra.mxu0 %v3998
  %4572 = vmatprep.subr.bf16.mxu0 0
  %4573 = vmatpush1.bf16.msra.mxu0 %v3999
  %4574 = vmatprep.subr.bf16.mxu0 0
  %4575 = vmatpush1.bf16.msra.mxu0 0
  %4576 = vmatprep.subr.bf16.mxu0 0
  %4577 = vmatpush1.bf16.msra.mxu0 0
  %4578 = vmatprep.subr.bf16.mxu0 0
  %4579 = vmatpush1.bf16.msra.mxu0 0
  %4580 = vmatprep.subr.bf16.mxu0 0
  %4581 = vmatpush1.bf16.msra.mxu0 0
  %4582 = vmatprep.subr.bf16.mxu0 0
  %4583 = vmatpush1.bf16.msra.mxu0 0
  %4584 = vmatprep.subr.bf16.mxu0 0
  %4585 = vmatpush1.bf16.msra.mxu0 0
  %4586 = vmatprep.subr.bf16.mxu0 0
  %4587 = vmatpush1.bf16.msra.mxu0 0
  %4588 = vmatprep.subr.bf16.mxu0 0
  %4589 = vmatpush1.bf16.msra.mxu0 0
  %4590 = vmatprep.mubr.bf16.mxu0 0
  %4591 = vmatmul.mubr.bf16.gmra.mrb[0].mxu0 %v3883
  %v4592 = vpop.f32.mrb[0].mxu0
  %v4593 = vadd.f32 %v4544, %v4592
  %v4594 = vpop.f32.mrb[0].mxu0
  %v4595 = vpop.f32.mrb[0].mxu0
  %v4596 = vadd.f32 %v4547, %v4595
  %v4597 = vpop.f32.mrb[0].mxu0
  %4598 = vmatprep.mubr.bf16.mxu0 0
  %4599 = vmatmul.mubr.bf16.gmra.mrb[0].mxu0 %v3887
  %v4600 = vpop.f32.mrb[0].mxu0
  %v4601 = vadd.f32 %v4552, %v4600
  %v4602 = vpop.f32.mrb[0].mxu0
  %v4603 = vpop.f32.mrb[0].mxu0
  %v4604 = vadd.f32 %v4555, %v4603
  %v4605 = vpop.f32.mrb[0].mxu0
  %4606 = vdwg.mxu0
  %4607 = vmatprep.subr.bf16.mxu0 0
  %4608 = vmatpush1.bf16.msra.mxu0 %v4138
  %4609 = vmatprep.subr.bf16.mxu0 0
  %4610 = vmatpush1.bf16.msra.mxu0 %v4139
  %4611 = vmatprep.subr.bf16.mxu0 0
  %4612 = vmatpush1.bf16.msra.mxu0 %v4140
  %4613 = vmatprep.subr.bf16.mxu0 0
  %4614 = vmatpush1.bf16.msra.mxu0 %v4141
  %4615 = vmatprep.subr.bf16.mxu0 0
  %4616 = vmatpush1.bf16.msra.mxu0 %v4142
  %4617 = vmatprep.subr.bf16.mxu0 0
  %4618 = vmatpush1.bf16.msra.mxu0 %v4143
  %4619 = vmatprep.subr.bf16.mxu0 0
  %4620 = vmatpush1.bf16.msra.mxu0 %v4144
  %4621 = vmatprep.subr.bf16.mxu0 0
  %4622 = vmatpush1.bf16.msra.mxu0 %v4145
  %4623 = vmatprep.subr.bf16.mxu0 0
  %4624 = vmatpush1.bf16.msra.mxu0 0
  %4625 = vmatprep.subr.bf16.mxu0 0
  %4626 = vmatpush1.bf16.msra.mxu0 0
  %4627 = vmatprep.subr.bf16.mxu0 0
  %4628 = vmatpush1.bf16.msra.mxu0 0
  %4629 = vmatprep.subr.bf16.mxu0 0
  %4630 = vmatpush1.bf16.msra.mxu0 0
  %4631 = vmatprep.subr.bf16.mxu0 0
  %4632 = vmatpush1.bf16.msra.mxu0 0
  %4633 = vmatprep.subr.bf16.mxu0 0
  %4634 = vmatpush1.bf16.msra.mxu0 0
  %4635 = vmatprep.subr.bf16.mxu0 0
  %4636 = vmatpush1.bf16.msra.mxu0 0
  %4637 = vmatprep.subr.bf16.mxu0 0
  %4638 = vmatpush1.bf16.msra.mxu0 0
  %4639 = vmatprep.mubr.bf16.mxu0 0
  %4640 = vmatmul.mubr.bf16.gmra.mrb[0].mxu0 %v3883
  %v4641 = vpop.f32.mrb[0].mxu0
  %v4642 = vadd.f32 0.0, %v4641
  %v4643 = vpop.f32.mrb[0].mxu0
  %v4644 = vpop.f32.mrb[0].mxu0
  %v4645 = vadd.f32 0.0, %v4644
  %v4646 = vpop.f32.mrb[0].mxu0
  %4647 = vmatprep.mubr.bf16.mxu0 0
  %4648 = vmatmul.mubr.bf16.gmra.mrb[0].mxu0 %v3887
  %v4649 = vpop.f32.mrb[0].mxu0
  %v4650 = vadd.f32 0.0, %v4649
  %v4651 = vpop.f32.mrb[0].mxu0
  %v4652 = vpop.f32.mrb[0].mxu0
  %v4653 = vadd.f32 0.0, %v4652
  %v4654 = vpop.f32.mrb[0].mxu0
  %4655 = vdwg.mxu0
  %v4656 = vadd.f32 %v4593, %v4642
  %v4657 = vadd.f32 %v4596, %v4645
  %v4658 = vadd.f32 %v4601, %v4650
  %v4659 = vadd.f32 %v4604, %v4653
  %v4660 = vld [vmem:[%s13] sm:$0xf]
  %v4662 = vlaneseq
  %v4663 = vshrl.u32 %v4662, 7
  %v4664 = vsub.s32 0, %v4663
  %v4665 = vrot.slane %v4660, %v4664
  %v4666 = vlaneseq
  %v4667 = vshrl.u32 %v4666, 7
  %v4668 = vsub.s32 1, %v4667
  %v4669 = vrot.slane %v4660, %v4668
  %v4670 = vlaneseq
  %v4671 = vshrl.u32 %v4670, 7
  %v4672 = vsub.s32 2, %v4671
  %v4673 = vrot.slane %v4660, %v4672
  %v4674 = vlaneseq
  %v4675 = vshrl.u32 %v4674, 7
  %v4676 = vsub.s32 3, %v4675
  %v4677 = vrot.slane %v4660, %v4676
  %v4682 = vadd.f32 %v4203, %v4665
  %v4683 = vadd.f32 %v4354, %v4669
  %v4684 = vadd.f32 %v4505, %v4673
  %v4685 = vadd.f32 %v4656, %v4677
  %v4686 = vadd.f32 %v4204, %v4665
  %v4687 = vadd.f32 %v4355, %v4669
  %v4688 = vadd.f32 %v4506, %v4673
  %v4689 = vadd.f32 %v4657, %v4677
  %v4690 = vadd.f32 %v4205, %v4665
  %v4691 = vadd.f32 %v4356, %v4669
  %v4692 = vadd.f32 %v4507, %v4673
  %v4693 = vadd.f32 %v4658, %v4677
  %v4694 = vadd.f32 %v4206, %v4665
  %v4695 = vadd.f32 %v4357, %v4669
  %v4696 = vadd.f32 %v4508, %v4673
  %v4697 = vadd.f32 %v4659, %v4677
  %v4698 = vadd.f32 %v4682, %v75
  %v4699 = vadd.f32 %v4683, %v76
  %v4700 = vadd.f32 %v4684, %v77
  %v4701 = vadd.f32 %v4685, %v78
  %v4702 = vadd.f32 %v4686, %v79
  %v4703 = vadd.f32 %v4687, %v80
  %v4704 = vadd.f32 %v4688, %v81
  %v4705 = vadd.f32 %v4689, %v82
  %v4706 = vadd.f32 %v4690, %v83
  %v4707 = vadd.f32 %v4691, %v84
  %v4708 = vadd.f32 %v4692, %v85
  %v4709 = vadd.f32 %v4693, %v86
  %v4710 = vadd.f32 %v4694, %v87
  %v4711 = vadd.f32 %v4695, %v88
  %v4712 = vadd.f32 %v4696, %v89
  %v4713 = vadd.f32 %v4697, %v90
  %v4714 = vadd.f32 %v4698, %v4702
  %v4715 = vadd.f32 %v4714, %v4706
  %v4716 = vadd.f32 %v4715, %v4710
  %v4717 = vrot.slane %v4716, 4
  %v4718 = vadd.f32 %v4716, %v4717
  %v4719 = vrot.slane %v4718, 2
  %v4720 = vadd.f32 %v4718, %v4719
  %v4721 = vrot.slane %v4720, 1
  %v4722 = vadd.f32 %v4720, %v4721
  %v4723 = vadd.f32 %v4699, %v4703
  %v4724 = vadd.f32 %v4723, %v4707
  %v4725 = vadd.f32 %v4724, %v4711
  %v4726 = vrot.slane %v4725, 4
  %v4727 = vadd.f32 %v4725, %v4726
  %v4728 = vrot.slane %v4727, 2
  %v4729 = vadd.f32 %v4727, %v4728
  %v4730 = vrot.slane %v4729, 1
  %v4731 = vadd.f32 %v4729, %v4730
  %v4732 = vadd.f32 %v4700, %v4704
  %v4733 = vadd.f32 %v4732, %v4708
  %v4734 = vadd.f32 %v4733, %v4712
  %v4735 = vrot.slane %v4734, 4
  %v4736 = vadd.f32 %v4734, %v4735
  %v4737 = vrot.slane %v4736, 2
  %v4738 = vadd.f32 %v4736, %v4737
  %v4739 = vrot.slane %v4738, 1
  %v4740 = vadd.f32 %v4738, %v4739
  %v4741 = vadd.f32 %v4701, %v4705
  %v4742 = vadd.f32 %v4741, %v4709
  %v4743 = vadd.f32 %v4742, %v4713
  %v4744 = vrot.slane %v4743, 4
  %v4745 = vadd.f32 %v4743, %v4744
  %v4746 = vrot.slane %v4745, 2
  %v4747 = vadd.f32 %v4745, %v4746
  %v4748 = vrot.slane %v4747, 1
  %v4749 = vadd.f32 %v4747, %v4748
  %v4750 = vmul.f32 %v4698, %v4698
  %v4751 = vmul.f32 %v4699, %v4699
  %v4752 = vmul.f32 %v4700, %v4700
  %v4753 = vmul.f32 %v4701, %v4701
  %v4754 = vmul.f32 %v4702, %v4702
  %v4755 = vmul.f32 %v4703, %v4703
  %v4756 = vmul.f32 %v4704, %v4704
  %v4757 = vmul.f32 %v4705, %v4705
  %v4758 = vmul.f32 %v4706, %v4706
  %v4759 = vmul.f32 %v4707, %v4707
  %v4760 = vmul.f32 %v4708, %v4708
  %v4761 = vmul.f32 %v4709, %v4709
  %v4762 = vmul.f32 %v4710, %v4710
  %v4763 = vmul.f32 %v4711, %v4711
  %v4764 = vmul.f32 %v4712, %v4712
  %v4765 = vmul.f32 %v4713, %v4713
  %v4766 = vadd.f32 %v4750, %v4754
  %v4767 = vadd.f32 %v4766, %v4758
  %v4768 = vadd.f32 %v4767, %v4762
  %v4769 = vrot.slane %v4768, 4
  %v4770 = vadd.f32 %v4768, %v4769
  %v4771 = vrot.slane %v4770, 2
  %v4772 = vadd.f32 %v4770, %v4771
  %v4773 = vrot.slane %v4772, 1
  %v4774 = vadd.f32 %v4772, %v4773
  %v4775 = vadd.f32 %v4751, %v4755
  %v4776 = vadd.f32 %v4775, %v4759
  %v4777 = vadd.f32 %v4776, %v4763
  %v4778 = vrot.slane %v4777, 4
  %v4779 = vadd.f32 %v4777, %v4778
  %v4780 = vrot.slane %v4779, 2
  %v4781 = vadd.f32 %v4779, %v4780
  %v4782 = vrot.slane %v4781, 1
  %v4783 = vadd.f32 %v4781, %v4782
  %v4784 = vadd.f32 %v4752, %v4756
  %v4785 = vadd.f32 %v4784, %v4760
  %v4786 = vadd.f32 %v4785, %v4764
  %v4787 = vrot.slane %v4786, 4
  %v4788 = vadd.f32 %v4786, %v4787
  %v4789 = vrot.slane %v4788, 2
  %v4790 = vadd.f32 %v4788, %v4789
  %v4791 = vrot.slane %v4790, 1
  %v4792 = vadd.f32 %v4790, %v4791
  %v4793 = vadd.f32 %v4753, %v4757
  %v4794 = vadd.f32 %v4793, %v4761
  %v4795 = vadd.f32 %v4794, %v4765
  %v4796 = vrot.slane %v4795, 4
  %v4797 = vadd.f32 %v4795, %v4796
  %v4798 = vrot.slane %v4797, 2
  %v4799 = vadd.f32 %v4797, %v4798
  %v4800 = vrot.slane %v4799, 1
  %v4801 = vadd.f32 %v4799, %v4800
  %vm4802 = vcmask 1040384
  %v4803 = vsel %vm4802, %v4722, %v4774
  %v4804 = vsel %vm4802, %v4731, %v4783
  %v4805 = vsel %vm4802, %v4740, %v4792
  %v4806 = vsel %vm4802, %v4749, %v4801
  %4807 = vrot.lane.b32.xlu0 %v4803, 32
  %v4808 = vpop.permute.xlu0 %4807
  %4809 = vrot.lane.b32.xlu0 %v4804, 32
  %v4810 = vpop.permute.xlu0 %4809
  %4811 = vrot.lane.b32.xlu0 %v4805, 32
  %v4812 = vpop.permute.xlu0 %4811
  %4813 = vrot.lane.b32.xlu0 %v4806, 32
  %v4814 = vpop.permute.xlu0 %4813
  %v4815 = vsel %vm200, %v4812, %v4814
  %v4816 = vsel %vm200, %v4810, %v4812
  %v4817 = vsel %vm200, %v4808, %v4810
  %v4818 = vsel %vm200, %v4814, %v4808
  %v4819 = vadd.f32 %v4803, %v4818
  %v4820 = vadd.f32 %v4804, %v4817
  %v4821 = vadd.f32 %v4805, %v4816
  %v4822 = vadd.f32 %v4806, %v4815
  %4823 = vrot.lane.b32.xlu0 %v4819, 64
  %v4824 = vpop.permute.xlu0 %4823
  %4825 = vrot.lane.b32.xlu0 %v4820, 64
  %v4826 = vpop.permute.xlu0 %4825
  %4827 = vrot.lane.b32.xlu0 %v4821, 64
  %v4828 = vpop.permute.xlu0 %4827
  %4829 = vrot.lane.b32.xlu0 %v4822, 64
  %v4830 = vpop.permute.xlu0 %4829
  %v4831 = vsel %vm123, %v4828, %v4830
  %v4832 = vsel %vm123, %v4826, %v4828
  %v4833 = vsel %vm123, %v4824, %v4826
  %v4834 = vsel %vm123, %v4830, %v4824
  %v4835 = vadd.f32 %v4819, %v4834
  %v4836 = vadd.f32 %v4820, %v4833
  %v4837 = vadd.f32 %v4821, %v4832
  %v4838 = vadd.f32 %v4822, %v4831
  %v4839 = vadd.f32 %v4835, %v4838
  %v4840 = vadd.f32 %v4836, %v4835
  %v4841 = vadd.f32 %v4837, %v4836
  %v4842 = vadd.f32 %v4838, %v4837
  %v4843 = vadd.f32 %v4839, %v4841
  %v4844 = vadd.f32 %v4840, %v4842
  %v4845 = vmul.f32 %v4843, 0.001953125
  %v4846 = vmul.f32 %v4844, 0.001953125
  %v4847 = vmul.f32 %v4845, %v4845
  %v4848 = vmul.f32 %v4846, %v4846
  %v4851 = vrot.slane %v4847, 7
  %v4852 = vrot.slane %v4848, 7
  %v4855 = vsub.f32 %v4845, %v4851
  %v4856 = vsub.f32 %v4846, %v4852
  %v4857 = vadd.f32 %v4855, 1e-05
  %v4858 = vadd.f32 %v4856, 1e-05
  %v4859 = vrsqrt.pop %v4857
  %v4860 = vrsqrt.pop %v4858
  %v4861 = vld [vmem:[%s14] sm:$0xf]
  %v4863 = vlaneseq
  %v4864 = vshrl.u32 %v4863, 7
  %v4865 = vsub.s32 0, %v4864
  %v4866 = vrot.slane %v4861, %v4865
  %v4867 = vlaneseq
  %v4868 = vshrl.u32 %v4867, 7
  %v4869 = vsub.s32 1, %v4868
  %v4870 = vrot.slane %v4861, %v4869
  %v4871 = vlaneseq
  %v4872 = vshrl.u32 %v4871, 7
  %v4873 = vsub.s32 2, %v4872
  %v4874 = vrot.slane %v4861, %v4873
  %v4875 = vlaneseq
  %v4876 = vshrl.u32 %v4875, 7
  %v4877 = vsub.s32 3, %v4876
  %v4878 = vrot.slane %v4861, %v4877
  %v4883 = vmul.f32 %v4859, %v4866
  %v4884 = vmul.f32 %v4860, %v4870
  %v4885 = vmul.f32 %v4859, %v4874
  %v4886 = vmul.f32 %v4860, %v4878
  %v4887 = vlaneseq
  %v4888 = vshrl.u32 %v4887, 7
  %v4889 = vsub.s32 0, %v4888
  %v4890 = vrot.slane %v4845, %v4889
  %v4891 = vlaneseq
  %v4892 = vshrl.u32 %v4891, 7
  %v4893 = vsub.s32 0, %v4892
  %v4894 = vrot.slane %v4846, %v4893
  %v4895 = vsub.f32 %v4698, %v4890
  %v4896 = vsub.f32 %v4699, %v4894
  %v4897 = vsub.f32 %v4700, %v4890
  %v4898 = vsub.f32 %v4701, %v4894
  %v4899 = vsub.f32 %v4702, %v4890
  %v4900 = vsub.f32 %v4703, %v4894
  %v4901 = vsub.f32 %v4704, %v4890
  %v4902 = vsub.f32 %v4705, %v4894
  %v4903 = vsub.f32 %v4706, %v4890
  %v4904 = vsub.f32 %v4707, %v4894
  %v4905 = vsub.f32 %v4708, %v4890
  %v4906 = vsub.f32 %v4709, %v4894
  %v4907 = vsub.f32 %v4710, %v4890
  %v4908 = vsub.f32 %v4711, %v4894
  %v4909 = vsub.f32 %v4712, %v4890
  %v4910 = vsub.f32 %v4713, %v4894
  %v4911 = vlaneseq
  %v4912 = vshrl.u32 %v4911, 7
  %v4913 = vsub.s32 1, %v4912
  %v4914 = vrot.slane %v4883, %v4913
  %v4915 = vlaneseq
  %v4916 = vshrl.u32 %v4915, 7
  %v4917 = vsub.s32 1, %v4916
  %v4918 = vrot.slane %v4884, %v4917
  %v4919 = vlaneseq
  %v4920 = vshrl.u32 %v4919, 7
  %v4921 = vsub.s32 1, %v4920
  %v4922 = vrot.slane %v4885, %v4921
  %v4923 = vlaneseq
  %v4924 = vshrl.u32 %v4923, 7
  %v4925 = vsub.s32 1, %v4924
  %v4926 = vrot.slane %v4886, %v4925
  %v4927 = vmul.f32 %v4895, %v4914
  %v4928 = vmul.f32 %v4896, %v4918
  %v4929 = vmul.f32 %v4897, %v4922
  %v4930 = vmul.f32 %v4898, %v4926
  %v4931 = vmul.f32 %v4899, %v4914
  %v4932 = vmul.f32 %v4900, %v4918
  %v4933 = vmul.f32 %v4901, %v4922
  %v4934 = vmul.f32 %v4902, %v4926
  %v4935 = vmul.f32 %v4903, %v4914
  %v4936 = vmul.f32 %v4904, %v4918
  %v4937 = vmul.f32 %v4905, %v4922
  %v4938 = vmul.f32 %v4906, %v4926
  %v4939 = vmul.f32 %v4907, %v4914
  %v4940 = vmul.f32 %v4908, %v4918
  %v4941 = vmul.f32 %v4909, %v4922
  %v4942 = vmul.f32 %v4910, %v4926
  %v4943 = vld [vmem:[%s15] sm:$0xf]
  %v4945 = vlaneseq
  %v4946 = vshrl.u32 %v4945, 7
  %v4947 = vsub.s32 0, %v4946
  %v4948 = vrot.slane %v4943, %v4947
  %v4949 = vlaneseq
  %v4950 = vshrl.u32 %v4949, 7
  %v4951 = vsub.s32 1, %v4950
  %v4952 = vrot.slane %v4943, %v4951
  %v4953 = vlaneseq
  %v4954 = vshrl.u32 %v4953, 7
  %v4955 = vsub.s32 2, %v4954
  %v4956 = vrot.slane %v4943, %v4955
  %v4957 = vlaneseq
  %v4958 = vshrl.u32 %v4957, 7
  %v4959 = vsub.s32 3, %v4958
  %v4960 = vrot.slane %v4943, %v4959
  %v4965 = vadd.f32 %v4927, %v4948
  %v4966 = vadd.f32 %v4928, %v4952
  %v4967 = vadd.f32 %v4929, %v4956
  %v4968 = vadd.f32 %v4930, %v4960
  %v4969 = vadd.f32 %v4931, %v4948
  %v4970 = vadd.f32 %v4932, %v4952
  %v4971 = vadd.f32 %v4933, %v4956
  %v4972 = vadd.f32 %v4934, %v4960
  %v4973 = vadd.f32 %v4935, %v4948
  %v4974 = vadd.f32 %v4936, %v4952
  %v4975 = vadd.f32 %v4937, %v4956
  %v4976 = vadd.f32 %v4938, %v4960
  %v4977 = vadd.f32 %v4939, %v4948
  %v4978 = vadd.f32 %v4940, %v4952
  %v4979 = vadd.f32 %v4941, %v4956
  %v4980 = vadd.f32 %v4942, %v4960
  %v4981 = vmul.f32 %v4965, 0.70710677
  %v4982 = vmul.f32 %v4966, 0.70710677
  %v4983 = vmul.f32 %v4967, 0.70710677
  %v4984 = vmul.f32 %v4968, 0.70710677
  %v4985 = vmul.f32 %v4969, 0.70710677
  %v4986 = vmul.f32 %v4970, 0.70710677
  %v4987 = vmul.f32 %v4971, 0.70710677
  %v4988 = vmul.f32 %v4972, 0.70710677
  %v4989 = vmul.f32 %v4973, 0.70710677
  %v4990 = vmul.f32 %v4974, 0.70710677
  %v4991 = vmul.f32 %v4975, 0.70710677
  %v4992 = vmul.f32 %v4976, 0.70710677
  %v4993 = vmul.f32 %v4977, 0.70710677
  %v4994 = vmul.f32 %v4978, 0.70710677
  %v4995 = vmul.f32 %v4979, 0.70710677
  %v4996 = vmul.f32 %v4980, 0.70710677
  %vm4997 = vcmp.ge.f32.partialorder %v4981, 0.0
  %vm4998 = vcmp.ge.f32.partialorder %v4982, 0.0
  %vm4999 = vcmp.ge.f32.partialorder %v4983, 0.0
  %vm5000 = vcmp.ge.f32.partialorder %v4984, 0.0
  %vm5001 = vcmp.ge.f32.partialorder %v4985, 0.0
  %vm5002 = vcmp.ge.f32.partialorder %v4986, 0.0
  %vm5003 = vcmp.ge.f32.partialorder %v4987, 0.0
  %vm5004 = vcmp.ge.f32.partialorder %v4988, 0.0
  %vm5005 = vcmp.ge.f32.partialorder %v4989, 0.0
  %vm5006 = vcmp.ge.f32.partialorder %v4990, 0.0
  %vm5007 = vcmp.ge.f32.partialorder %v4991, 0.0
  %vm5008 = vcmp.ge.f32.partialorder %v4992, 0.0
  %vm5009 = vcmp.ge.f32.partialorder %v4993, 0.0
  %vm5010 = vcmp.ge.f32.partialorder %v4994, 0.0
  %vm5011 = vcmp.ge.f32.partialorder %v4995, 0.0
  %vm5012 = vcmp.ge.f32.partialorder %v4996, 0.0
  %v5013 = vsel %vm4997, 1.0, -1.0
  %v5014 = vsel %vm4998, 1.0, -1.0
  %v5015 = vsel %vm4999, 1.0, -1.0
  %v5016 = vsel %vm5000, 1.0, -1.0
  %v5017 = vsel %vm5001, 1.0, -1.0
  %v5018 = vsel %vm5002, 1.0, -1.0
  %v5019 = vsel %vm5003, 1.0, -1.0
  %v5020 = vsel %vm5004, 1.0, -1.0
  %v5021 = vsel %vm5005, 1.0, -1.0
  %v5022 = vsel %vm5006, 1.0, -1.0
  %v5023 = vsel %vm5007, 1.0, -1.0
  %v5024 = vsel %vm5008, 1.0, -1.0
  %v5025 = vsel %vm5009, 1.0, -1.0
  %v5026 = vsel %vm5010, 1.0, -1.0
  %v5027 = vsel %vm5011, 1.0, -1.0
  %v5028 = vsel %vm5012, 1.0, -1.0
  %v5029 = vand.u32 2147483647, %v4981
  %v5030 = vand.u32 2147483647, %v4982
  %v5031 = vand.u32 2147483647, %v4983
  %v5032 = vand.u32 2147483647, %v4984
  %v5033 = vand.u32 2147483647, %v4985
  %v5034 = vand.u32 2147483647, %v4986
  %v5035 = vand.u32 2147483647, %v4987
  %v5036 = vand.u32 2147483647, %v4988
  %v5037 = vand.u32 2147483647, %v4989
  %v5038 = vand.u32 2147483647, %v4990
  %v5039 = vand.u32 2147483647, %v4991
  %v5040 = vand.u32 2147483647, %v4992
  %v5041 = vand.u32 2147483647, %v4993
  %v5042 = vand.u32 2147483647, %v4994
  %v5043 = vand.u32 2147483647, %v4995
  %v5044 = vand.u32 2147483647, %v4996
  %v5045 = vmul.f32 %v5029, 0.3275911
  %v5046 = vmul.f32 %v5030, 0.3275911
  %v5047 = vmul.f32 %v5031, 0.3275911
  %v5048 = vmul.f32 %v5032, 0.3275911
  %v5049 = vmul.f32 %v5033, 0.3275911
  %v5050 = vmul.f32 %v5034, 0.3275911
  %v5051 = vmul.f32 %v5035, 0.3275911
  %v5052 = vmul.f32 %v5036, 0.3275911
  %v5053 = vmul.f32 %v5037, 0.3275911
  %v5054 = vmul.f32 %v5038, 0.3275911
  %v5055 = vmul.f32 %v5039, 0.3275911
  %v5056 = vmul.f32 %v5040, 0.3275911
  %v5057 = vmul.f32 %v5041, 0.3275911
  %v5058 = vmul.f32 %v5042, 0.3275911
  %v5059 = vmul.f32 %v5043, 0.3275911
  %v5060 = vmul.f32 %v5044, 0.3275911
  %v5061 = vadd.f32 %v5045, 1.0
  %v5062 = vadd.f32 %v5046, 1.0
  %v5063 = vadd.f32 %v5047, 1.0
  %v5064 = vadd.f32 %v5048, 1.0
  %v5065 = vadd.f32 %v5049, 1.0
  %v5066 = vadd.f32 %v5050, 1.0
  %v5067 = vadd.f32 %v5051, 1.0
  %v5068 = vadd.f32 %v5052, 1.0
  %v5069 = vadd.f32 %v5053, 1.0
  %v5070 = vadd.f32 %v5054, 1.0
  %v5071 = vadd.f32 %v5055, 1.0
  %v5072 = vadd.f32 %v5056, 1.0
  %v5073 = vadd.f32 %v5057, 1.0
  %v5074 = vadd.f32 %v5058, 1.0
  %v5075 = vadd.f32 %v5059, 1.0
  %v5076 = vadd.f32 %v5060, 1.0
  %v5077 = vrcp.pop %v5061
  %v5078 = vrcp.pop %v5062
  %v5079 = vrcp.pop %v5063
  %v5080 = vrcp.pop %v5064
  %v5081 = vrcp.pop %v5065
  %v5082 = vrcp.pop %v5066
  %v5083 = vrcp.pop %v5067
  %v5084 = vrcp.pop %v5068
  %v5085 = vrcp.pop %v5069
  %v5086 = vrcp.pop %v5070
  %v5087 = vrcp.pop %v5071
  %v5088 = vrcp.pop %v5072
  %v5089 = vrcp.pop %v5073
  %v5090 = vrcp.pop %v5074
  %v5091 = vrcp.pop %v5075
  %v5092 = vrcp.pop %v5076
  %v5093 = vmul.f32 %v5061, %v5077
  %v5094 = vmul.f32 %v5062, %v5078
  %v5095 = vmul.f32 %v5063, %v5079
  %v5096 = vmul.f32 %v5064, %v5080
  %v5097 = vmul.f32 %v5065, %v5081
  %v5098 = vmul.f32 %v5066, %v5082
  %v5099 = vmul.f32 %v5067, %v5083
  %v5100 = vmul.f32 %v5068, %v5084
  %v5101 = vmul.f32 %v5069, %v5085
  %v5102 = vmul.f32 %v5070, %v5086
  %v5103 = vmul.f32 %v5071, %v5087
  %v5104 = vmul.f32 %v5072, %v5088
  %v5105 = vmul.f32 %v5073, %v5089
  %v5106 = vmul.f32 %v5074, %v5090
  %v5107 = vmul.f32 %v5075, %v5091
  %v5108 = vmul.f32 %v5076, %v5092
  %v5109 = vsub.f32 2.0, %v5093
  %v5110 = vsub.f32 2.0, %v5094
  %v5111 = vsub.f32 2.0, %v5095
  %v5112 = vsub.f32 2.0, %v5096
  %v5113 = vsub.f32 2.0, %v5097
  %v5114 = vsub.f32 2.0, %v5098
  %v5115 = vsub.f32 2.0, %v5099
  %v5116 = vsub.f32 2.0, %v5100
  %v5117 = vsub.f32 2.0, %v5101
  %v5118 = vsub.f32 2.0, %v5102
  %v5119 = vsub.f32 2.0, %v5103
  %v5120 = vsub.f32 2.0, %v5104
  %v5121 = vsub.f32 2.0, %v5105
  %v5122 = vsub.f32 2.0, %v5106
  %v5123 = vsub.f32 2.0, %v5107
  %v5124 = vsub.f32 2.0, %v5108
  %v5125 = vmul.f32 %v5077, %v5109
  %v5126 = vmul.f32 %v5078, %v5110
  %v5127 = vmul.f32 %v5079, %v5111
  %v5128 = vmul.f32 %v5080, %v5112
  %v5129 = vmul.f32 %v5081, %v5113
  %v5130 = vmul.f32 %v5082, %v5114
  %v5131 = vmul.f32 %v5083, %v5115
  %v5132 = vmul.f32 %v5084, %v5116
  %v5133 = vmul.f32 %v5085, %v5117
  %v5134 = vmul.f32 %v5086, %v5118
  %v5135 = vmul.f32 %v5087, %v5119
  %v5136 = vmul.f32 %v5088, %v5120
  %v5137 = vmul.f32 %v5089, %v5121
  %v5138 = vmul.f32 %v5090, %v5122
  %v5139 = vmul.f32 %v5091, %v5123
  %v5140 = vmul.f32 %v5092, %v5124
  %v5141 = vmul.f32 %v5125, 1.0614054
  %v5142 = vmul.f32 %v5126, 1.0614054
  %v5143 = vmul.f32 %v5127, 1.0614054
  %v5144 = vmul.f32 %v5128, 1.0614054
  %v5145 = vmul.f32 %v5129, 1.0614054
  %v5146 = vmul.f32 %v5130, 1.0614054
  %v5147 = vmul.f32 %v5131, 1.0614054
  %v5148 = vmul.f32 %v5132, 1.0614054
  %v5149 = vmul.f32 %v5133, 1.0614054
  %v5150 = vmul.f32 %v5134, 1.0614054
  %v5151 = vmul.f32 %v5135, 1.0614054
  %v5152 = vmul.f32 %v5136, 1.0614054
  %v5153 = vmul.f32 %v5137, 1.0614054
  %v5154 = vmul.f32 %v5138, 1.0614054
  %v5155 = vmul.f32 %v5139, 1.0614054
  %v5156 = vmul.f32 %v5140, 1.0614054
  %v5157 = vadd.f32 %v5141, -1.4531521
  %v5158 = vadd.f32 %v5142, -1.4531521
  %v5159 = vadd.f32 %v5143, -1.4531521
  %v5160 = vadd.f32 %v5144, -1.4531521
  %v5161 = vadd.f32 %v5145, -1.4531521
  %v5162 = vadd.f32 %v5146, -1.4531521
  %v5163 = vadd.f32 %v5147, -1.4531521
  %v5164 = vadd.f32 %v5148, -1.4531521
  %v5165 = vadd.f32 %v5149, -1.4531521
  %v5166 = vadd.f32 %v5150, -1.4531521
  %v5167 = vadd.f32 %v5151, -1.4531521
  %v5168 = vadd.f32 %v5152, -1.4531521
  %v5169 = vadd.f32 %v5153, -1.4531521
  %v5170 = vadd.f32 %v5154, -1.4531521
  %v5171 = vadd.f32 %v5155, -1.4531521
  %v5172 = vadd.f32 %v5156, -1.4531521
  %v5173 = vmul.f32 %v5125, %v5157
  %v5174 = vmul.f32 %v5126, %v5158
  %v5175 = vmul.f32 %v5127, %v5159
  %v5176 = vmul.f32 %v5128, %v5160
  %v5177 = vmul.f32 %v5129, %v5161
  %v5178 = vmul.f32 %v5130, %v5162
  %v5179 = vmul.f32 %v5131, %v5163
  %v5180 = vmul.f32 %v5132, %v5164
  %v5181 = vmul.f32 %v5133, %v5165
  %v5182 = vmul.f32 %v5134, %v5166
  %v5183 = vmul.f32 %v5135, %v5167
  %v5184 = vmul.f32 %v5136, %v5168
  %v5185 = vmul.f32 %v5137, %v5169
  %v5186 = vmul.f32 %v5138, %v5170
  %v5187 = vmul.f32 %v5139, %v5171
  %v5188 = vmul.f32 %v5140, %v5172
  %v5189 = vadd.f32 %v5173, 1.4214138
  %v5190 = vadd.f32 %v5174, 1.4214138
  %v5191 = vadd.f32 %v5175, 1.4214138
  %v5192 = vadd.f32 %v5176, 1.4214138
  %v5193 = vadd.f32 %v5177, 1.4214138
  %v5194 = vadd.f32 %v5178, 1.4214138
  %v5195 = vadd.f32 %v5179, 1.4214138
  %v5196 = vadd.f32 %v5180, 1.4214138
  %v5197 = vadd.f32 %v5181, 1.4214138
  %v5198 = vadd.f32 %v5182, 1.4214138
  %v5199 = vadd.f32 %v5183, 1.4214138
  %v5200 = vadd.f32 %v5184, 1.4214138
  %v5201 = vadd.f32 %v5185, 1.4214138
  %v5202 = vadd.f32 %v5186, 1.4214138
  %v5203 = vadd.f32 %v5187, 1.4214138
  %v5204 = vadd.f32 %v5188, 1.4214138
  %v5205 = vmul.f32 %v5125, %v5189
  %v5206 = vmul.f32 %v5126, %v5190
  %v5207 = vmul.f32 %v5127, %v5191
  %v5208 = vmul.f32 %v5128, %v5192
  %v5209 = vmul.f32 %v5129, %v5193
  %v5210 = vmul.f32 %v5130, %v5194
  %v5211 = vmul.f32 %v5131, %v5195
  %v5212 = vmul.f32 %v5132, %v5196
  %v5213 = vmul.f32 %v5133, %v5197
  %v5214 = vmul.f32 %v5134, %v5198
  %v5215 = vmul.f32 %v5135, %v5199
  %v5216 = vmul.f32 %v5136, %v5200
  %v5217 = vmul.f32 %v5137, %v5201
  %v5218 = vmul.f32 %v5138, %v5202
  %v5219 = vmul.f32 %v5139, %v5203
  %v5220 = vmul.f32 %v5140, %v5204
  %v5221 = vadd.f32 %v5205, -0.28449672
  %v5222 = vadd.f32 %v5206, -0.28449672
  %v5223 = vadd.f32 %v5207, -0.28449672
  %v5224 = vadd.f32 %v5208, -0.28449672
  %v5225 = vadd.f32 %v5209, -0.28449672
  %v5226 = vadd.f32 %v5210, -0.28449672
  %v5227 = vadd.f32 %v5211, -0.28449672
  %v5228 = vadd.f32 %v5212, -0.28449672
  %v5229 = vadd.f32 %v5213, -0.28449672
  %v5230 = vadd.f32 %v5214, -0.28449672
  %v5231 = vadd.f32 %v5215, -0.28449672
  %v5232 = vadd.f32 %v5216, -0.28449672
  %v5233 = vadd.f32 %v5217, -0.28449672
  %v5234 = vadd.f32 %v5218, -0.28449672
  %v5235 = vadd.f32 %v5219, -0.28449672
  %v5236 = vadd.f32 %v5220, -0.28449672
  %v5237 = vmul.f32 %v5125, %v5221
  %v5238 = vmul.f32 %v5126, %v5222
  %v5239 = vmul.f32 %v5127, %v5223
  %v5240 = vmul.f32 %v5128, %v5224
  %v5241 = vmul.f32 %v5129, %v5225
  %v5242 = vmul.f32 %v5130, %v5226
  %v5243 = vmul.f32 %v5131, %v5227
  %v5244 = vmul.f32 %v5132, %v5228
  %v5245 = vmul.f32 %v5133, %v5229
  %v5246 = vmul.f32 %v5134, %v5230
  %v5247 = vmul.f32 %v5135, %v5231
  %v5248 = vmul.f32 %v5136, %v5232
  %v5249 = vmul.f32 %v5137, %v5233
  %v5250 = vmul.f32 %v5138, %v5234
  %v5251 = vmul.f32 %v5139, %v5235
  %v5252 = vmul.f32 %v5140, %v5236
  %v5253 = vadd.f32 %v5237, 0.2548296
  %v5254 = vadd.f32 %v5238, 0.2548296
  %v5255 = vadd.f32 %v5239, 0.2548296
  %v5256 = vadd.f32 %v5240, 0.2548296
  %v5257 = vadd.f32 %v5241, 0.2548296
  %v5258 = vadd.f32 %v5242, 0.2548296
  %v5259 = vadd.f32 %v5243, 0.2548296
  %v5260 = vadd.f32 %v5244, 0.2548296
  %v5261 = vadd.f32 %v5245, 0.2548296
  %v5262 = vadd.f32 %v5246, 0.2548296
  %v5263 = vadd.f32 %v5247, 0.2548296
  %v5264 = vadd.f32 %v5248, 0.2548296
  %v5265 = vadd.f32 %v5249, 0.2548296
  %v5266 = vadd.f32 %v5250, 0.2548296
  %v5267 = vadd.f32 %v5251, 0.2548296
  %v5268 = vadd.f32 %v5252, 0.2548296
  %v5269 = vmul.f32 %v5125, %v5253
  %v5270 = vmul.f32 %v5126, %v5254
  %v5271 = vmul.f32 %v5127, %v5255
  %v5272 = vmul.f32 %v5128, %v5256
  %v5273 = vmul.f32 %v5129, %v5257
  %v5274 = vmul.f32 %v5130, %v5258
  %v5275 = vmul.f32 %v5131, %v5259
  %v5276 = vmul.f32 %v5132, %v5260
  %v5277 = vmul.f32 %v5133, %v5261
  %v5278 = vmul.f32 %v5134, %v5262
  %v5279 = vmul.f32 %v5135, %v5263
  %v5280 = vmul.f32 %v5136, %v5264
  %v5281 = vmul.f32 %v5137, %v5265
  %v5282 = vmul.f32 %v5138, %v5266
  %v5283 = vmul.f32 %v5139, %v5267
  %v5284 = vmul.f32 %v5140, %v5268
  %v5285 = vsub.f32 0.0, %v5029
  %v5286 = vsub.f32 0.0, %v5030
  %v5287 = vsub.f32 0.0, %v5031
  %v5288 = vsub.f32 0.0, %v5032
  %v5289 = vsub.f32 0.0, %v5033
  %v5290 = vsub.f32 0.0, %v5034
  %v5291 = vsub.f32 0.0, %v5035
  %v5292 = vsub.f32 0.0, %v5036
  %v5293 = vsub.f32 0.0, %v5037
  %v5294 = vsub.f32 0.0, %v5038
  %v5295 = vsub.f32 0.0, %v5039
  %v5296 = vsub.f32 0.0, %v5040
  %v5297 = vsub.f32 0.0, %v5041
  %v5298 = vsub.f32 0.0, %v5042
  %v5299 = vsub.f32 0.0, %v5043
  %v5300 = vsub.f32 0.0, %v5044
  %v5301 = vmul.f32 %v5285, %v5029
  %v5302 = vmul.f32 %v5286, %v5030
  %v5303 = vmul.f32 %v5287, %v5031
  %v5304 = vmul.f32 %v5288, %v5032
  %v5305 = vmul.f32 %v5289, %v5033
  %v5306 = vmul.f32 %v5290, %v5034
  %v5307 = vmul.f32 %v5291, %v5035
  %v5308 = vmul.f32 %v5292, %v5036
  %v5309 = vmul.f32 %v5293, %v5037
  %v5310 = vmul.f32 %v5294, %v5038
  %v5311 = vmul.f32 %v5295, %v5039
  %v5312 = vmul.f32 %v5296, %v5040
  %v5313 = vmul.f32 %v5297, %v5041
  %v5314 = vmul.f32 %v5298, %v5042
  %v5315 = vmul.f32 %v5299, %v5043
  %v5316 = vmul.f32 %v5300, %v5044
  %v5317 = vmul.f32 %v5301, 1.442695
  %v5318 = vpow.pop %v5317
  %v5319 = vmul.f32 %v5302, 1.442695
  %v5320 = vpow.pop %v5319
  %v5321 = vmul.f32 %v5303, 1.442695
  %v5322 = vpow.pop %v5321
  %v5323 = vmul.f32 %v5304, 1.442695
  %v5324 = vpow.pop %v5323
  %v5325 = vmul.f32 %v5305, 1.442695
  %v5326 = vpow.pop %v5325
  %v5327 = vmul.f32 %v5306, 1.442695
  %v5328 = vpow.pop %v5327
  %v5329 = vmul.f32 %v5307, 1.442695
  %v5330 = vpow.pop %v5329
  %v5331 = vmul.f32 %v5308, 1.442695
  %v5332 = vpow.pop %v5331
  %v5333 = vmul.f32 %v5309, 1.442695
  %v5334 = vpow.pop %v5333
  %v5335 = vmul.f32 %v5310, 1.442695
  %v5336 = vpow.pop %v5335
  %v5337 = vmul.f32 %v5311, 1.442695
  %v5338 = vpow.pop %v5337
  %v5339 = vmul.f32 %v5312, 1.442695
  %v5340 = vpow.pop %v5339
  %v5341 = vmul.f32 %v5313, 1.442695
  %v5342 = vpow.pop %v5341
  %v5343 = vmul.f32 %v5314, 1.442695
  %v5344 = vpow.pop %v5343
  %v5345 = vmul.f32 %v5315, 1.442695
  %v5346 = vpow.pop %v5345
  %v5347 = vmul.f32 %v5316, 1.442695
  %v5348 = vpow.pop %v5347
  %v5349 = vmul.f32 %v5269, %v5318
  %v5350 = vmul.f32 %v5270, %v5320
  %v5351 = vmul.f32 %v5271, %v5322
  %v5352 = vmul.f32 %v5272, %v5324
  %v5353 = vmul.f32 %v5273, %v5326
  %v5354 = vmul.f32 %v5274, %v5328
  %v5355 = vmul.f32 %v5275, %v5330
  %v5356 = vmul.f32 %v5276, %v5332
  %v5357 = vmul.f32 %v5277, %v5334
  %v5358 = vmul.f32 %v5278, %v5336
  %v5359 = vmul.f32 %v5279, %v5338
  %v5360 = vmul.f32 %v5280, %v5340
  %v5361 = vmul.f32 %v5281, %v5342
  %v5362 = vmul.f32 %v5282, %v5344
  %v5363 = vmul.f32 %v5283, %v5346
  %v5364 = vmul.f32 %v5284, %v5348
  %v5365 = vsub.f32 1.0, %v5349
  %v5366 = vsub.f32 1.0, %v5350
  %v5367 = vsub.f32 1.0, %v5351
  %v5368 = vsub.f32 1.0, %v5352
  %v5369 = vsub.f32 1.0, %v5353
  %v5370 = vsub.f32 1.0, %v5354
  %v5371 = vsub.f32 1.0, %v5355
  %v5372 = vsub.f32 1.0, %v5356
  %v5373 = vsub.f32 1.0, %v5357
  %v5374 = vsub.f32 1.0, %v5358
  %v5375 = vsub.f32 1.0, %v5359
  %v5376 = vsub.f32 1.0, %v5360
  %v5377 = vsub.f32 1.0, %v5361
  %v5378 = vsub.f32 1.0, %v5362
  %v5379 = vsub.f32 1.0, %v5363
  %v5380 = vsub.f32 1.0, %v5364
  %v5381 = vmul.f32 %v5013, %v5365
  %v5382 = vmul.f32 %v5014, %v5366
  %v5383 = vmul.f32 %v5015, %v5367
  %v5384 = vmul.f32 %v5016, %v5368
  %v5385 = vmul.f32 %v5017, %v5369
  %v5386 = vmul.f32 %v5018, %v5370
  %v5387 = vmul.f32 %v5019, %v5371
  %v5388 = vmul.f32 %v5020, %v5372
  %v5389 = vmul.f32 %v5021, %v5373
  %v5390 = vmul.f32 %v5022, %v5374
  %v5391 = vmul.f32 %v5023, %v5375
  %v5392 = vmul.f32 %v5024, %v5376
  %v5393 = vmul.f32 %v5025, %v5377
  %v5394 = vmul.f32 %v5026, %v5378
  %v5395 = vmul.f32 %v5027, %v5379
  %v5396 = vmul.f32 %v5028, %v5380
  %v5397 = vmul.f32 %v4965, 0.5
  %v5398 = vmul.f32 %v4966, 0.5
  %v5399 = vmul.f32 %v4967, 0.5
  %v5400 = vmul.f32 %v4968, 0.5
  %v5401 = vmul.f32 %v4969, 0.5
  %v5402 = vmul.f32 %v4970, 0.5
  %v5403 = vmul.f32 %v4971, 0.5
  %v5404 = vmul.f32 %v4972, 0.5
  %v5405 = vmul.f32 %v4973, 0.5
  %v5406 = vmul.f32 %v4974, 0.5
  %v5407 = vmul.f32 %v4975, 0.5
  %v5408 = vmul.f32 %v4976, 0.5
  %v5409 = vmul.f32 %v4977, 0.5
  %v5410 = vmul.f32 %v4978, 0.5
  %v5411 = vmul.f32 %v4979, 0.5
  %v5412 = vmul.f32 %v4980, 0.5
  %v5413 = vadd.f32 %v5381, 1.0
  %v5414 = vadd.f32 %v5382, 1.0
  %v5415 = vadd.f32 %v5383, 1.0
  %v5416 = vadd.f32 %v5384, 1.0
  %v5417 = vadd.f32 %v5385, 1.0
  %v5418 = vadd.f32 %v5386, 1.0
  %v5419 = vadd.f32 %v5387, 1.0
  %v5420 = vadd.f32 %v5388, 1.0
  %v5421 = vadd.f32 %v5389, 1.0
  %v5422 = vadd.f32 %v5390, 1.0
  %v5423 = vadd.f32 %v5391, 1.0
  %v5424 = vadd.f32 %v5392, 1.0
  %v5425 = vadd.f32 %v5393, 1.0
  %v5426 = vadd.f32 %v5394, 1.0
  %v5427 = vadd.f32 %v5395, 1.0
  %v5428 = vadd.f32 %v5396, 1.0
  %v5429 = vmul.f32 %v5397, %v5413
  %v5430 = vmul.f32 %v5398, %v5414
  %v5431 = vmul.f32 %v5399, %v5415
  %v5432 = vmul.f32 %v5400, %v5416
  %v5433 = vmul.f32 %v5401, %v5417
  %v5434 = vmul.f32 %v5402, %v5418
  %v5435 = vmul.f32 %v5403, %v5419
  %v5436 = vmul.f32 %v5404, %v5420
  %v5437 = vmul.f32 %v5405, %v5421
  %v5438 = vmul.f32 %v5406, %v5422
  %v5439 = vmul.f32 %v5407, %v5423
  %v5440 = vmul.f32 %v5408, %v5424
  %v5441 = vmul.f32 %v5409, %v5425
  %v5442 = vmul.f32 %v5410, %v5426
  %v5443 = vmul.f32 %v5411, %v5427
  %v5444 = vmul.f32 %v5412, %v5428
  %5445 = vst [vmem:[%s16] sm:$0xff] %v5429
  %5446 = vst [vmem:[%s16 + $0x8] sm:$0xff] %v5430
  %5447 = vst [vmem:[%s16 + $0x10] sm:$0xff] %v5431
  %5448 = vst [vmem:[%s16 + $0x18] sm:$0xff] %v5432
  %5449 = vst [vmem:[%s16 + $0x20] sm:$0xff] %v5433
  %5450 = vst [vmem:[%s16 + $0x28] sm:$0xff] %v5434
  %5451 = vst [vmem:[%s16 + $0x30] sm:$0xff] %v5435
  %5452 = vst [vmem:[%s16 + $0x38] sm:$0xff] %v5436
  %5453 = vst [vmem:[%s16 + $0x40] sm:$0xff] %v5437
  %5454 = vst [vmem:[%s16 + $0x48] sm:$0xff] %v5438
  %5455 = vst [vmem:[%s16 + $0x50] sm:$0xff] %v5439
  %5456 = vst [vmem:[%s16 + $0x58] sm:$0xff] %v5440
  %5457 = vst [vmem:[%s16 + $0x60] sm:$0xff] %v5441
  %5458 = vst [vmem:[%s16 + $0x68] sm:$0xff] %v5442
  %5459 = vst [vmem:[%s16 + $0x70] sm:$0xff] %v5443
  %5460 = vst [vmem:[%s16 + $0x78] sm:$0xff] %v5444
  // Predicated region
  $region66: #{boundary_module_forward.1} parent=0 // pred_check
    _
  $region67: #{boundary_module_forward.1} parent=0 // pred_check_branch
    %5462 = sbr.rel (0) target = $region69
  $region68: #{boundary_module_forward.1} parent=0 // pred_region
    _
  $region69: #{boundary_module_forward.1} parent=0 // pred_fallthru
    _
  // Predicated region
  $region70: #{boundary_module_forward.1} parent=0 // pred_check
    _
  $region71: #{boundary_module_forward.1} parent=0 // pred_check_branch
    %5464 = sbr.rel (0) target = $region73
  $region72: #{boundary_module_forward.1} parent=0 // pred_region
    _
  $region73: #{boundary_module_forward.1} parent=0 // pred_fallthru
    _

</llo_original>
